<compile_context>
chip_gen: v7x
topology: tpu7x:2x2x1
jax: 0.10.0
libtpu: 0.0.40
codegen_flags: <defaults>
</compile_context>

<pallas_src>
import functools

import jax
import jax.numpy as jnp
from jax.experimental import pallas as pl
from jax.experimental.pallas import tpu as pltpu

EXPANSION = 4
BN_EPS = 1e-5
LANE = 128


# ----------------------------------------------------------------------------
# Small helpers
# ----------------------------------------------------------------------------
def _round_up(x, m=LANE):
    return ((x + m - 1) // m) * m


def _pad_to(a, shape):
    pads = [(0, t - s) for s, t in zip(a.shape, shape)]
    if not any(p for _, p in pads):
        return a
    return jnp.pad(a, pads)


def _default_vmem_limit():
    """Generation-aware VMEM request: ~100 MiB on v5e/v6e (128 MiB per TC),
    <= 52 MiB on v7x-class parts (64 MiB per TC)."""
    cap = None
    if hasattr(pltpu, "get_tpu_info"):
        try:
            cap = getattr(pltpu.get_tpu_info(), "vmem_capacity_bytes", None)
        except Exception:
            cap = None
    if not cap:
        cap = 64 * 1024 * 1024  # conservative: assume v7x-class
    if cap >= 120 * 1024 * 1024:
        return 100 * 1024 * 1024
    return max(32 * 1024 * 1024, min(cap - 12 * 1024 * 1024, 52 * 1024 * 1024))


VMEM_LIMIT = _default_vmem_limit()


def _tile_and_pad(m, target):
    """Row tile for a length-m axis.  Returns (tile, m_padded) with
    tile | m_padded and tile a multiple of 8 (or the full extent).  Pads m up
    to a regular tile when no multiple-of-8 divisor exists, so the grid stays
    deep (pipelining / megacore) instead of collapsing to one step."""
    if m <= target:
        return m, m                      # full-extent block: always legal
    t0 = target - (target % 8)
    for t in range(t0, 7, -8):
        if m % t == 0:
            return t, m
    return t0, _round_up(m, t0)


def _pick_divisor_tile(m, target):
    """Largest multiple-of-8 divisor of m <= target, else m (full extent).
    Used where padding rows would corrupt the SE mean accumulation."""
    if m <= target:
        return m
    t0 = target - (target % 8)
    for t in range(t0, 7, -8):
        if m % t == 0:
            return t
    return m


# ----------------------------------------------------------------------------
# Kernel 1: 1x1 conv (pixel-tiled matmul) + folded BN + optional ReLU
# ----------------------------------------------------------------------------
def _conv1x1_bn_act_kernel(x_ref, w_ref, scale_ref, bias_ref, o_ref, *, relu):
    y = jnp.dot(x_ref[...].astype(jnp.bfloat16), w_ref[...],
                preferred_element_type=jnp.float32)
    y = y * scale_ref[...] + bias_ref[...]
    if relu:
        y = jnp.maximum(y, 0.0)
    o_ref[...] = y.astype(o_ref.dtype)


def conv1x1_bn_act(x2d, w_bf16, scale, bias, *, relu, target_tm, out_dtype):
    M, Cin = x2d.shape
    Cout = w_bf16.shape[1]
    tm, M_pad = _tile_and_pad(M, target_tm)
    x_in = _pad_to(x2d, (M_pad, Cin))
    flops = 2 * M_pad * Cin * Cout
    bytes_acc = (M_pad * Cin * x2d.dtype.itemsize + Cin * Cout * 2
                 + M_pad * Cout * jnp.dtype(out_dtype).itemsize)
    out = pl.pallas_call(
        functools.partial(_conv1x1_bn_act_kernel, relu=relu),
        out_shape=jax.ShapeDtypeStruct((M_pad, Cout), out_dtype),
        grid=(M_pad // tm,),
        in_specs=[
            pl.BlockSpec((tm, Cin), lambda i: (i, 0)),
            pl.BlockSpec((Cin, Cout), lambda i: (0, 0)),
            pl.BlockSpec((1, Cout), lambda i: (0, 0)),
            pl.BlockSpec((1, Cout), lambda i: (0, 0)),
        ],
        out_specs=pl.BlockSpec((tm, Cout), lambda i: (i, 0)),
        compiler_params=pltpu.CompilerParams(
            dimension_semantics=("parallel",),
            vmem_limit_bytes=VMEM_LIMIT),
        cost_estimate=pl.CostEstimate(flops=flops, transcendentals=0,
                                      bytes_accessed=bytes_acc),
    )(x_in, w_bf16, scale, bias)
    return out if M_pad == M else out[:M]


# ----------------------------------------------------------------------------
# Kernel 2: 3x3 conv (stride=1, pad=1) + BN + ReLU.
#   bf16 halo built in a VMEM scratch (border-only zeroing), 3x3 conv computed
#   as 9 shifted accumulating matmuls — no materialized im2col.
# ----------------------------------------------------------------------------
def _conv3x3_bn_relu_kernel(x_ref, w_ref, scale_ref, bias_ref, o_ref, xpad_ref,
                            *, H, W, Cin, Cout):
    # Zero only the 1-wide halo border; the interior is fully overwritten each
    # step.  Re-zeroing the border per step (not once under program_id==0)
    # stays correct when the N axis is megacore-sharded across TensorCores.
    zrow = jnp.zeros((1, W + 2, Cin), dtype=xpad_ref.dtype)
    zcol = jnp.zeros((H + 2, 1, Cin), dtype=xpad_ref.dtype)
    xpad_ref[0:1, :, :] = zrow
    xpad_ref[H + 1:H + 2, :, :] = zrow
    xpad_ref[:, 0:1, :] = zcol
    xpad_ref[:, W + 1:W + 2, :] = zcol
    # TODO(synk): the offset-1 interior store along W is sublane-misaligned;
    #             an H-only padded layout would make this an unmasked store.
    xpad_ref[1:H + 1, 1:W + 1, :] = x_ref[0]

    # 3x3 conv as 9 shifted accumulating MXU matmuls (identical FLOPs to the
    # im2col form, ~9x smaller LHS VMEM footprint, no concatenate copies).
    y = jnp.dot(xpad_ref[0:H, 0:W, :].reshape(H * W, Cin), w_ref[0],
                preferred_element_type=jnp.float32)
    for idx in range(1, 9):
        dh, dw = idx // 3, idx % 3
        patch = xpad_ref[dh:dh + H, dw:dw + W, :].reshape(H * W, Cin)
        y = y + jnp.dot(patch, w_ref[idx], preferred_element_type=jnp.float32)

    y = jnp.maximum(y * scale_ref[...] + bias_ref[...], 0.0)
    o_ref[...] = y.reshape(1, H, W, Cout).astype(o_ref.dtype)


def conv3x3_bn_relu(x_nhwc, w9_bf16, scale, bias):
    N, H, W, Cin = x_nhwc.shape
    Cout = w9_bf16.shape[2]
    flops = 2 * N * H * W * 9 * Cin * Cout
    bytes_acc = (N * H * W * Cin + 9 * Cin * Cout + N * H * W * Cout) * 2
    # TODO(synk): add H-row tiling (grid=(N, H//th) with +-1 row halo) for very
    #             large H*W so both v7x TensorCores stay busy at small N.
    return pl.pallas_call(
        functools.partial(_conv3x3_bn_relu_kernel, H=H, W=W, Cin=Cin, Cout=Cout),
        out_shape=jax.ShapeDtypeStruct((N, H, W, Cout), jnp.bfloat16),
        grid=(N,),
        in_specs=[
            pl.BlockSpec((1, H, W, Cin), lambda n: (n, 0, 0, 0)),
            pl.BlockSpec((9, Cin, Cout), lambda n: (0, 0, 0)),
            pl.BlockSpec((1, Cout), lambda n: (0, 0)),
            pl.BlockSpec((1, Cout), lambda n: (0, 0)),
        ],
        out_specs=pl.BlockSpec((1, H, W, Cout), lambda n: (n, 0, 0, 0)),
        scratch_shapes=[pltpu.VMEM((H + 2, W + 2, Cin), jnp.bfloat16)],
        compiler_params=pltpu.CompilerParams(
            dimension_semantics=("parallel",),
            vmem_limit_bytes=VMEM_LIMIT),
        cost_estimate=pl.CostEstimate(flops=flops, transcendentals=0,
                                      bytes_accessed=bytes_acc),
    )(x_nhwc, w9_bf16, scale, bias)


# ----------------------------------------------------------------------------
# Kernel 3: 1x1 conv + BN, tiled over per-sample pixels, with SE global-mean
#           emitted as an accumulated side output (no extra HBM pooling pass).
# ----------------------------------------------------------------------------
def _conv1x1_bn_pool_kernel(x_ref, w_ref, scale_ref, bias_ref, o_ref, sum_ref,
                            *, inv_hw):
    y = jnp.dot(x_ref[0], w_ref[...], preferred_element_type=jnp.float32)
    y = y * scale_ref[...] + bias_ref[...]
    o_ref[...] = y[None].astype(o_ref.dtype)

    @pl.when(pl.program_id(1) == 0)
    def _():
        sum_ref[...] = jnp.zeros_like(sum_ref)

    sum_ref[...] += (jnp.sum(y, axis=0, keepdims=True) * inv_hw)[None]


def conv1x1_bn_pool(x3d_bf16, w_bf16, scale, bias, *, tm):
    N, HW, Cin = x3d_bf16.shape
    Cout = w_bf16.shape[1]
    flops = 2 * N * HW * Cin * Cout
    bytes_acc = N * HW * Cin * 2 + Cin * Cout * 2 + N * HW * Cout * 2 + N * Cout * 4
    return pl.pallas_call(
        functools.partial(_conv1x1_bn_pool_kernel, inv_hw=1.0 / HW),
        out_shape=(jax.ShapeDtypeStruct((N, HW, Cout), jnp.bfloat16),
                   jax.ShapeDtypeStruct((N, 1, Cout), jnp.float32)),
        grid=(N, HW // tm),
        in_specs=[
            pl.BlockSpec((1, tm, Cin), lambda n, m: (n, m, 0)),
            pl.BlockSpec((Cin, Cout), lambda n, m: (0, 0)),
            pl.BlockSpec((1, Cout), lambda n, m: (0, 0)),
            pl.BlockSpec((1, Cout), lambda n, m: (0, 0)),
        ],
        out_specs=(pl.BlockSpec((1, tm, Cout), lambda n, m: (n, m, 0)),
                   pl.BlockSpec((1, 1, Cout), lambda n, m: (n, 0, 0))),
        compiler_params=pltpu.CompilerParams(
            dimension_semantics=("parallel", "arbitrary"),
            vmem_limit_bytes=VMEM_LIMIT),
        cost_estimate=pl.CostEstimate(flops=flops, transcendentals=0,
                                      bytes_accessed=bytes_acc),
    )(x3d_bf16, w_bf16, scale, bias)


# ----------------------------------------------------------------------------
# Kernel 4: SE FC stack (fc1 -> ReLU -> fc2 -> sigmoid), batched over all N.
# ----------------------------------------------------------------------------
def _se_fc_kernel(p_ref, w1_ref, b1_ref, w2_ref, b2_ref, s_ref):
    h = jnp.dot(p_ref[...], w1_ref[...], preferred_element_type=jnp.float32)
    h = jnp.maximum(h + b1_ref[...], 0.0)
    s = jnp.dot(h, w2_ref[...], preferred_element_type=jnp.float32) + b2_ref[...]
    s_ref[...] = jax.nn.sigmoid(s)


def se_fc(pooled, w1, b1, w2, b2):
    N, C = pooled.shape
    Cmid = w1.shape[1]
    return pl.pallas_call(
        _se_fc_kernel,
        out_shape=jax.ShapeDtypeStruct((N, C), jnp.float32),
        grid=(1,),
        in_specs=[
            pl.BlockSpec((N, C), lambda i: (0, 0)),
            pl.BlockSpec((C, Cmid), lambda i: (0, 0)),
            pl.BlockSpec((1, Cmid), lambda i: (0, 0)),
            pl.BlockSpec((Cmid, C), lambda i: (0, 0)),
            pl.BlockSpec((1, C), lambda i: (0, 0)),
        ],
        out_specs=pl.BlockSpec((N, C), lambda i: (0, 0)),
        compiler_params=pltpu.CompilerParams(
            dimension_semantics=("arbitrary",),
            vmem_limit_bytes=VMEM_LIMIT),
        cost_estimate=pl.CostEstimate(flops=4 * N * C * Cmid, transcendentals=N * C,
                                      bytes_accessed=(2 * N * C + 2 * C * Cmid) * 4),
    )(pooled, w1, b1, w2, b2)


# ----------------------------------------------------------------------------
# Kernel 5: channel re-scale + residual add + final ReLU (spatially tiled,
#           bf16 in / bf16 out — purely memory-bound).
# ----------------------------------------------------------------------------
def _scale_res_relu_kernel(y_ref, r_ref, s_ref, o_ref):
    y = y_ref[0].astype(jnp.float32) * s_ref[0]            # (tm,C) * (1,C)
    r = r_ref[0].astype(jnp.float32)
    o_ref[...] = jnp.maximum(y + r, 0.0)[None].astype(o_ref.dtype)


def scale_residual_relu(y3, resid, s3d, *, tm, out_dtype=jnp.bfloat16):
    N, HW, C = y3.shape
    bytes_acc = (N * HW * C * (y3.dtype.itemsize + resid.dtype.itemsize
                               + jnp.dtype(out_dtype).itemsize) + N * C * 4)
    return pl.pallas_call(
        _scale_res_relu_kernel,
        out_shape=jax.ShapeDtypeStruct((N, HW, C), out_dtype),
        grid=(N, HW // tm),
        in_specs=[
            pl.BlockSpec((1, tm, C), lambda n, m: (n, m, 0)),
            pl.BlockSpec((1, tm, C), lambda n, m: (n, m, 0)),
            pl.BlockSpec((1, 1, C), lambda n, m: (n, 0, 0)),
        ],
        out_specs=pl.BlockSpec((1, tm, C), lambda n, m: (n, m, 0)),
        compiler_params=pltpu.CompilerParams(
            dimension_semantics=("parallel", "parallel"),
            vmem_limit_bytes=VMEM_LIMIT),
        cost_estimate=pl.CostEstimate(flops=3 * N * HW * C, transcendentals=0,
                                      bytes_accessed=bytes_acc),
    )(y3, resid, s3d)


# ----------------------------------------------------------------------------
# Parameter construction, BN folding + lane padding (hoisted out of jit)
# ----------------------------------------------------------------------------
def make_params(key, inplanes, planes, reduction):
    outplanes = planes * EXPANSION
    cmid = outplanes // reduction
    keys = jax.random.split(key, 20)

    def rnd(k, shape, scale=0.1):
        return scale * jax.random.normal(k, shape, dtype=jnp.float32)

    p = {}
    p["conv1_w"] = rnd(keys[0], (inplanes, planes))          # 1x1 conv as (Cin, Cout)
    p["conv2_w"] = rnd(keys[1], (3, 3, planes, planes))      # HWIO
    p["conv3_w"] = rnd(keys[2], (planes, outplanes))         # 1x1 conv as (Cin, Cout)
    for i, (name, c) in enumerate([("bn1", planes), ("bn2", planes), ("bn3", outplanes)]):
        p[f"{name}_gamma"] = 1.0 + 0.05 * jax.random.normal(keys[3 + i], (c,), jnp.float32)
        p[f"{name}_beta"] = rnd(keys[6 + i], (c,), 0.05)
        p[f"{name}_mean"] = rnd(keys[9 + i], (c,), 0.05)
        p[f"{name}_var"] = 1.0 + jnp.abs(rnd(keys[12 + i], (c,), 0.05))
    p["fc1_w"] = rnd(keys[15], (outplanes, cmid))
    p["fc1_b"] = rnd(keys[16], (cmid,), 0.05)
    p["fc2_w"] = rnd(keys[17], (cmid, outplanes))
    p["fc2_b"] = rnd(keys[18], (outplanes,), 0.05)
    return p


def prepare_params(params):
    """Fold BN into per-channel scale/bias, zero-pad channel dims to multiples
    of 128 and cast matmul weights to bf16.  Call ONCE (outside jit) and reuse
    the result for every forward call."""
    inplanes, planes = params["conv1_w"].shape
    outplanes = params["conv3_w"].shape[1]
    cmid = params["fc1_w"].shape[1]
    Cin_p, P_p, Co_p, Cm_p = (_round_up(inplanes), _round_up(planes),
                              _round_up(outplanes), _round_up(cmid))

    def fold(name, c_p):
        scale = params[f"{name}_gamma"] / jnp.sqrt(params[f"{name}_var"] + BN_EPS)
        bias = params[f"{name}_beta"] - params[f"{name}_mean"] * scale
        return (_pad_to(scale, (c_p,)).reshape(1, c_p),
                _pad_to(bias, (c_p,)).reshape(1, c_p))

    s1, b1 = fold("bn1", P_p)
    s2, b2 = fold("bn2", P_p)
    s3, b3 = fold("bn3", Co_p)
    return dict(
        w1=_pad_to(params["conv1_w"], (Cin_p, P_p)).astype(jnp.bfloat16), s1=s1, b1=b1,
        w2=_pad_to(params["conv2_w"], (3, 3, P_p, P_p)).reshape(9, P_p, P_p)
            .astype(jnp.bfloat16), s2=s2, b2=b2,
        w3=_pad_to(params["conv3_w"], (P_p, Co_p)).astype(jnp.bfloat16), s3=s3, b3=b3,
        fc1_w=_pad_to(params["fc1_w"], (Co_p, Cm_p)),
        fc1_b=_pad_to(params["fc1_b"], (Cm_p,)).reshape(1, Cm_p),
        fc2_w=_pad_to(params["fc2_w"], (Cm_p, Co_p)),
        fc2_b=_pad_to(params["fc2_b"], (Co_p,)).reshape(1, Co_p),
    )


# ----------------------------------------------------------------------------
# Forward pass
# ----------------------------------------------------------------------------
def bottleneck_forward_nhwc(x_p, prep):
    """Bottleneck forward on channel-padded NHWC bf16 activations (stride=1,
    downsample=None, so the residual is the input).  Returns channel-padded
    NHWC bf16 — chain blocks in this layout and convert NCHW<->NHWC only at
    network boundaries."""
    N, H, W, Cin_p = x_p.shape
    P_p = prep["w1"].shape[1]
    Co_p = prep["w3"].shape[1]
    assert Cin_p == Co_p, "stride=1 / downsample=None path requires inplanes == planes*4"
    M, HW = N * H * W, H * W
    tm_hw = _pick_divisor_tile(HW, 512)

    # conv1 (1x1) + bn1 + relu — pixel-tiled bf16 MXU matmul, bf16 I/O
    y1 = conv1x1_bn_act(x_p.reshape(M, Cin_p), prep["w1"], prep["s1"], prep["b1"],
                        relu=True, target_tm=1024, out_dtype=jnp.bfloat16)
    y1 = y1.reshape(N, H, W, P_p)

    # conv2 (3x3, s=1, p=1) + bn2 + relu — in-kernel halo + 9 shifted matmuls
    y2 = conv3x3_bn_relu(y1, prep["w2"], prep["s2"], prep["b2"])   # bf16

    # conv3 (1x1) + bn3, fused with the SE global average-pool side output
    y3, pooled = conv1x1_bn_pool(y2.reshape(N, HW, P_p), prep["w3"],
                                 prep["s3"], prep["b3"], tm=tm_hw)
    pooled = pooled.reshape(N, Co_p)                               # f32 per-sample means

    # SE fc1 -> relu -> fc2 -> sigmoid, batched over N
    s = se_fc(pooled, prep["fc1_w"], prep["fc1_b"], prep["fc2_w"], prep["fc2_b"])

    # channel scale + residual add + final relu (residual = x, downsample None)
    out = scale_residual_relu(y3, x_p.reshape(N, HW, Co_p),
                              s.reshape(N, 1, Co_p), tm=tm_hw)
    return out.reshape(N, H, W, Co_p)


def bottleneck_forward(x_nchw, prep, *, out_channels):
    """NCHW wrapper (PyTorch parity) around the channel-padded NHWC forward."""
    x = jnp.transpose(x_nchw, (0, 2, 3, 1))                       # -> NHWC
    N, H, W, _ = x.shape
    Cin_p = prep["w1"].shape[0]
    x_p = _pad_to(x.astype(jnp.bfloat16), (N, H, W, Cin_p))       # bf16, lane padded
    out = bottleneck_forward_nhwc(x_p, prep)
    out = out[..., :out_channels].astype(jnp.float32)
    return jnp.transpose(out, (0, 3, 1, 2))                       # -> NCHW


# ----------------------------------------------------------------------------
# Pure-JAX reference for sanity checking
# ----------------------------------------------------------------------------
def reference_forward(x_nchw, params, eps=BN_EPS):
    x = jnp.transpose(x_nchw, (0, 2, 3, 1)).astype(jnp.float32)
    dn = ("NHWC", "HWIO", "NHWC")

    def bn(y, name):
        return ((y - params[f"{name}_mean"]) / jnp.sqrt(params[f"{name}_var"] + eps)
                * params[f"{name}_gamma"] + params[f"{name}_beta"])

    w1 = params["conv1_w"].reshape(1, 1, *params["conv1_w"].shape)
    w3 = params["conv3_w"].reshape(1, 1, *params["conv3_w"].shape)
    y = jax.lax.conv_general_dilated(x, w1, (1, 1), "SAME", dimension_numbers=dn)
    y = jax.nn.relu(bn(y, "bn1"))
    y = jax.lax.conv_general_dilated(y, params["conv2_w"], (1, 1), "SAME", dimension_numbers=dn)
    y = jax.nn.relu(bn(y, "bn2"))
    y = jax.lax.conv_general_dilated(y, w3, (1, 1), "SAME", dimension_numbers=dn)
    y = bn(y, "bn3")
    pooled = jnp.mean(y, axis=(1, 2), keepdims=True)
    h = jax.nn.relu(jnp.einsum("nhwc,cd->nhwd", pooled, params["fc1_w"]) + params["fc1_b"])
    s = jax.nn.sigmoid(jnp.einsum("nhwd,dc->nhwc", h, params["fc2_w"]) + params["fc2_b"])
    out = jax.nn.relu(y * s + x)
    return jnp.transpose(out, (0, 3, 1, 2))


if __name__ == "__main__":
    # Small shapes consistent with the module: inplanes == planes * expansion
    N, inplanes, planes, reduction = 2, 32, 8, 4
    H = W = 8

    key = jax.random.PRNGKey(0)
    kx, kp = jax.random.split(key)
    x = jax.random.normal(kx, (N, inplanes, H, W), dtype=jnp.float32)  # NCHW like PyTorch
    params = make_params(kp, inplanes, planes, reduction)

    prep = prepare_params(params)   # hoisted out of jit; computed once, reused
    outplanes = planes * EXPANSION

    fwd = jax.jit(functools.partial(bottleneck_forward, out_channels=outplanes))
    out = jax.block_until_ready(fwd(x, prep))
    ref = jax.block_until_ready(reference_forward(x, params))

    assert out.shape == (N, outplanes, H, W), out.shape
    max_err = float(jnp.max(jnp.abs(out - ref)))
    # bf16 MXU operands + bf16 activations/residual -> looser tolerance than f32
    assert jnp.allclose(out, ref, rtol=3e-2, atol=3e-2), max_err
    print("KERNEL_OK")
</pallas_src>

<mosaic_0001>
module attributes {stable_mosaic.version = 11 : i64} {
  func.func @_conv1x1_bn_act_kernel(%arg0: i32, %arg1: memref<128x128xbf16, #tpu.memory_space<vmem>>, %arg2: memref<128x128xbf16, #tpu.memory_space<vmem>>, %arg3: memref<1x128xf32, #tpu.memory_space<vmem>>, %arg4: memref<1x128xf32, #tpu.memory_space<vmem>>, %arg5: memref<128x128xbf16, #tpu.memory_space<vmem>>) attributes {dimension_semantics = [#tpu.dimension_semantics<parallel>], iteration_bounds = array<i64: 1>, scalar_prefetch = 0 : i64, scratch_operands = 0 : i64, tpu.core_type = #tpu.core_type<tc>, window_params = [{transform_indices = @transform_0, window_bounds = array<i64: 128, 128>}, {pipeline_mode = #tpu.pipeline_mode<synchronous>, transform_indices = @transform_1, window_bounds = array<i64: 128, 128>}, {pipeline_mode = #tpu.pipeline_mode<synchronous>, transform_indices = @transform_2, window_bounds = array<i64: 1, 128>}, {pipeline_mode = #tpu.pipeline_mode<synchronous>, transform_indices = @transform_3, window_bounds = array<i64: 1, 128>}, {transform_indices = @transform_4, window_bounds = array<i64: 128, 128>}]} {
    %c0 = arith.constant 0 : index
    %c0_0 = arith.constant 0 : index
    %0 = vector.load %arg1[%c0, %c0_0] : memref<128x128xbf16, #tpu.memory_space<vmem>>, vector<128x128xbf16>
    %c0_1 = arith.constant 0 : index
    %c0_2 = arith.constant 0 : index
    %1 = vector.load %arg2[%c0_1, %c0_2] : memref<128x128xbf16, #tpu.memory_space<vmem>>, vector<128x128xbf16>
    %cst = arith.constant dense<0.000000e+00> : vector<128x128xf32>
    %2 = tpu.matmul %0, %1, %cst {dimension_numbers = #tpu.dot_dimension_numbers<[1], [0], [0], [1], [0, 0, 1, 1], [], []>} : vector<128x128xbf16>, vector<128x128xbf16>, vector<128x128xf32> -> vector<128x128xf32>
    %c0_3 = arith.constant 0 : index
    %c0_4 = arith.constant 0 : index
    %3 = vector.load %arg3[%c0_3, %c0_4] : memref<1x128xf32, #tpu.memory_space<vmem>>, vector<1x128xf32>
    %4 = vector.broadcast %3 : vector<1x128xf32> to vector<128x128xf32>
    %5 = arith.mulf %2, %4 : vector<128x128xf32>
    %c0_5 = arith.constant 0 : index
    %c0_6 = arith.constant 0 : index
    %6 = vector.load %arg4[%c0_5, %c0_6] : memref<1x128xf32, #tpu.memory_space<vmem>>, vector<1x128xf32>
    %7 = vector.broadcast %6 : vector<1x128xf32> to vector<128x128xf32>
    %8 = arith.addf %5, %7 : vector<128x128xf32>
    %cst_7 = arith.constant 0.000000e+00 : f32
    %9 = vector.broadcast %cst_7 : f32 to vector<128x128xf32>
    %10 = arith.maximumf %8, %9 : vector<128x128xf32>
    %11 = arith.truncf %10 : vector<128x128xf32> to vector<128x128xbf16>
    %c0_8 = arith.constant 0 : index
    %c0_9 = arith.constant 0 : index
    %12 = vector.load %arg5[%c0_8, %c0_9] : memref<128x128xbf16, #tpu.memory_space<vmem>>, vector<128x128xbf16>
    tpu.vector_store %arg5[%c0_8, %c0_9], %11 {strides = array<i32>} : memref<128x128xbf16, #tpu.memory_space<vmem>>, vector<128x128xbf16>,
    return
  }
  func.func @transform_0(%arg0: i32) -> (i32, i32) {
    %c0_i32 = arith.constant 0 : i32
    %c0_i32_0 = arith.constant 0 : i32
    return %arg0, %c0_i32 : i32, i32
  }
  func.func @transform_1(%arg0: i32) -> (i32, i32) {
    %c0_i32 = arith.constant 0 : i32
    %c0_i32_0 = arith.constant 0 : i32
    %c0_i32_1 = arith.constant 0 : i32
    return %c0_i32, %c0_i32_0 : i32, i32
  }
  func.func @transform_2(%arg0: i32) -> (i32, i32) {
    %c0_i32 = arith.constant 0 : i32
    %c0_i32_0 = arith.constant 0 : i32
    %c0_i32_1 = arith.constant 0 : i32
    return %c0_i32, %c0_i32_0 : i32, i32
  }
  func.func @transform_3(%arg0: i32) -> (i32, i32) {
    %c0_i32 = arith.constant 0 : i32
    %c0_i32_0 = arith.constant 0 : i32
    %c0_i32_1 = arith.constant 0 : i32
    return %c0_i32, %c0_i32_0 : i32, i32
  }
  func.func @transform_4(%arg0: i32) -> (i32, i32) {
    %c0_i32 = arith.constant 0 : i32
    %c0_i32_0 = arith.constant 0 : i32
    return %arg0, %c0_i32 : i32, i32
  }
}

module attributes {stable_mosaic.version = 11 : i64} {
  func.func @_conv3x3_bn_relu_kernel(%arg0: i32, %arg1: memref<1x8x8x128xbf16, #tpu.memory_space<vmem>>, %arg2: memref<9x128x128xbf16, #tpu.memory_space<vmem>>, %arg3: memref<1x128xf32, #tpu.memory_space<vmem>>, %arg4: memref<1x128xf32, #tpu.memory_space<vmem>>, %arg5: memref<1x8x8x128xbf16, #tpu.memory_space<vmem>>, %arg6: memref<10x10x128xbf16, #tpu.memory_space<vmem>>) attributes {dimension_semantics = [#tpu.dimension_semantics<parallel>], iteration_bounds = array<i64: 2>, scalar_prefetch = 0 : i64, scratch_operands = 1 : i64, tpu.core_type = #tpu.core_type<tc>, window_params = [{transform_indices = @transform_0, window_bounds = array<i64: 1, 8, 8, 128>}, {pipeline_mode = #tpu.pipeline_mode<synchronous>, transform_indices = @transform_1, window_bounds = array<i64: 9, 128, 128>}, {pipeline_mode = #tpu.pipeline_mode<synchronous>, transform_indices = @transform_2, window_bounds = array<i64: 1, 128>}, {pipeline_mode = #tpu.pipeline_mode<synchronous>, transform_indices = @transform_3, window_bounds = array<i64: 1, 128>}, {transform_indices = @transform_4, window_bounds = array<i64: 1, 8, 8, 128>}]} {
    %cst = arith.constant 0.000000e+00 : bf16
    %0 = vector.broadcast %cst : bf16 to vector<1x10x128xbf16>
    %cst_0 = arith.constant 0.000000e+00 : bf16
    %1 = vector.broadcast %cst_0 : bf16 to vector<10x1x128xbf16>
    %c0 = arith.constant 0 : index
    %c0_1 = arith.constant 0 : index
    %c0_2 = arith.constant 0 : index
    %2 = vector.load %arg6[%c0, %c0_1, %c0_2] : memref<10x10x128xbf16, #tpu.memory_space<vmem>>, vector<1x10x128xbf16>
    tpu.vector_store %arg6[%c0, %c0_1, %c0_2], %0 {strides = array<i32>} : memref<10x10x128xbf16, #tpu.memory_space<vmem>>, vector<1x10x128xbf16>,
    %c9 = arith.constant 9 : index
    %c0_3 = arith.constant 0 : index
    %c0_4 = arith.constant 0 : index
    %3 = vector.load %arg6[%c9, %c0_3, %c0_4] : memref<10x10x128xbf16, #tpu.memory_space<vmem>>, vector<1x10x128xbf16>
    tpu.vector_store %arg6[%c9, %c0_3, %c0_4], %0 {strides = array<i32>} : memref<10x10x128xbf16, #tpu.memory_space<vmem>>, vector<1x10x128xbf16>,
    %c0_5 = arith.constant 0 : index
    %c0_6 = arith.constant 0 : index
    %c0_7 = arith.constant 0 : index
    %4 = vector.load %arg6[%c0_5, %c0_6, %c0_7] : memref<10x10x128xbf16, #tpu.memory_space<vmem>>, vector<10x1x128xbf16>
    tpu.vector_store %arg6[%c0_5, %c0_6, %c0_7], %1 {strides = array<i32>} : memref<10x10x128xbf16, #tpu.memory_space<vmem>>, vector<10x1x128xbf16>,
    %c0_8 = arith.constant 0 : index
    %c9_9 = arith.constant 9 : index
    %c0_10 = arith.constant 0 : index
    %5 = vector.load %arg6[%c0_8, %c9_9, %c0_10] : memref<10x10x128xbf16, #tpu.memory_space<vmem>>, vector<10x1x128xbf16>
    tpu.vector_store %arg6[%c0_8, %c9_9, %c0_10], %1 {strides = array<i32>} : memref<10x10x128xbf16, #tpu.memory_space<vmem>>, vector<10x1x128xbf16>,
    %c0_11 = arith.constant 0 : index
    %c0_12 = arith.constant 0 : index
    %c0_13 = arith.constant 0 : index
    %c0_14 = arith.constant 0 : index
    %6 = vector.load %arg1[%c0_11, %c0_12, %c0_13, %c0_14] : memref<1x8x8x128xbf16, #tpu.memory_space<vmem>>, vector<1x8x8x128xbf16>
    %7 = vector.shape_cast %6 : vector<1x8x8x128xbf16> to vector<8x8x128xbf16>
    %c1 = arith.constant 1 : index
    %c1_15 = arith.constant 1 : index
    %c0_16 = arith.constant 0 : index
    %8 = vector.load %arg6[%c1, %c1_15, %c0_16] : memref<10x10x128xbf16, #tpu.memory_space<vmem>>, vector<8x8x128xbf16>
    tpu.vector_store %arg6[%c1, %c1_15, %c0_16], %7 {strides = array<i32>} : memref<10x10x128xbf16, #tpu.memory_space<vmem>>, vector<8x8x128xbf16>,
    %c0_17 = arith.constant 0 : index
    %c0_18 = arith.constant 0 : index
    %c0_19 = arith.constant 0 : index
    %9 = vector.load %arg6[%c0_17, %c0_18, %c0_19] : memref<10x10x128xbf16, #tpu.memory_space<vmem>>, vector<8x8x128xbf16>
    %10 = vector.shape_cast %9 : vector<8x8x128xbf16> to vector<64x128xbf16>
    %c0_20 = arith.constant 0 : index
    %c0_21 = arith.constant 0 : index
    %c0_22 = arith.constant 0 : index
    %11 = vector.load %arg2[%c0_20, %c0_21, %c0_22] : memref<9x128x128xbf16, #tpu.memory_space<vmem>>, vector<1x128x128xbf16>
    %12 = vector.shape_cast %11 : vector<1x128x128xbf16> to vector<128x128xbf16>
    %cst_23 = arith.constant dense<0.000000e+00> : vector<64x128xf32>
    %13 = tpu.matmul %10, %12, %cst_23 {dimension_numbers = #tpu.dot_dimension_numbers<[1], [0], [0], [1], [0, 0, 1, 1], [], []>} : vector<64x128xbf16>, vector<128x128xbf16>, vector<64x128xf32> -> vector<64x128xf32>
    %c0_24 = arith.constant 0 : index
    %c1_25 = arith.constant 1 : index
    %c0_26 = arith.constant 0 : index
    %14 = vector.load %arg6[%c0_24, %c1_25, %c0_26] : memref<10x10x128xbf16, #tpu.memory_space<vmem>>, vector<8x8x128xbf16>
    %15 = vector.shape_cast %14 : vector<8x8x128xbf16> to vector<64x128xbf16>
    %c1_27 = arith.constant 1 : index
    %c0_28 = arith.constant 0 : index
    %c0_29 = arith.constant 0 : index
    %16 = vector.load %arg2[%c1_27, %c0_28, %c0_29] : memref<9x128x128xbf16, #tpu.memory_space<vmem>>, vector<1x128x128xbf16>
    %17 = vector.shape_cast %16 : vector<1x128x128xbf16> to vector<128x128xbf16>
    %cst_30 = arith.constant dense<0.000000e+00> : vector<64x128xf32>
    %18 = tpu.matmul %15, %17, %cst_30 {dimension_numbers = #tpu.dot_dimension_numbers<[1], [0], [0], [1], [0, 0, 1, 1], [], []>} : vector<64x128xbf16>, vector<128x128xbf16>, vector<64x128xf32> -> vector<64x128xf32>
    %19 = arith.addf %13, %18 : vector<64x128xf32>
    %c0_31 = arith.constant 0 : index
    %c2 = arith.constant 2 : index
    %c0_32 = arith.constant 0 : index
    %20 = vector.load %arg6[%c0_31, %c2, %c0_32] : memref<10x10x128xbf16, #tpu.memory_space<vmem>>, vector<8x8x128xbf16>
    %21 = vector.shape_cast %20 : vector<8x8x128xbf16> to vector<64x128xbf16>
    %c2_33 = arith.constant 2 : index
    %c0_34 = arith.constant 0 : index
    %c0_35 = arith.constant 0 : index
    %22 = vector.load %arg2[%c2_33, %c0_34, %c0_35] : memref<9x128x128xbf16, #tpu.memory_space<vmem>>, vector<1x128x128xbf16>
    %23 = vector.shape_cast %22 : vector<1x128x128xbf16> to vector<128x128xbf16>
    %cst_36 = arith.constant dense<0.000000e+00> : vector<64x128xf32>
    %24 = tpu.matmul %21, %23, %cst_36 {dimension_numbers = #tpu.dot_dimension_numbers<[1], [0], [0], [1], [0, 0, 1, 1], [], []>} : vector<64x128xbf16>, vector<128x128xbf16>, vector<64x128xf32> -> vector<64x128xf32>
    %25 = arith.addf %19, %24 : vector<64x128xf32>
    %c1_37 = arith.constant 1 : index
    %c0_38 = arith.constant 0 : index
    %c0_39 = arith.constant 0 : index
    %26 = vector.load %arg6[%c1_37, %c0_38, %c0_39] : memref<10x10x128xbf16, #tpu.memory_space<vmem>>, vector<8x8x128xbf16>
    %27 = vector.shape_cast %26 : vector<8x8x128xbf16> to vector<64x128xbf16>
    %c3 = arith.constant 3 : index
    %c0_40 = arith.constant 0 : index
    %c0_41 = arith.constant 0 : index
    %28 = vector.load %arg2[%c3, %c0_40, %c0_41] : memref<9x128x128xbf16, #tpu.memory_space<vmem>>, vector<1x128x128xbf16>
    %29 = vector.shape_cast %28 : vector<1x128x128xbf16> to vector<128x128xbf16>
    %cst_42 = arith.constant dense<0.000000e+00> : vector<64x128xf32>
    %30 = tpu.matmul %27, %29, %cst_42 {dimension_numbers = #tpu.dot_dimension_numbers<[1], [0], [0], [1], [0, 0, 1, 1], [], []>} : vector<64x128xbf16>, vector<128x128xbf16>, vector<64x128xf32> -> vector<64x128xf32>
    %31 = arith.addf %25, %30 : vector<64x128xf32>
    %c1_43 = arith.constant 1 : index
    %c1_44 = arith.constant 1 : index
    %c0_45 = arith.constant 0 : index
    %32 = vector.load %arg6[%c1_43, %c1_44, %c0_45] : memref<10x10x128xbf16, #tpu.memory_space<vmem>>, vector<8x8x128xbf16>
    %33 = vector.shape_cast %32 : vector<8x8x128xbf16> to vector<64x128xbf16>
    %c4 = arith.constant 4 : index
    %c0_46 = arith.constant 0 : index
    %c0_47 = arith.constant 0 : index
    %34 = vector.load %arg2[%c4, %c0_46, %c0_47] : memref<9x128x128xbf16, #tpu.memory_space<vmem>>, vector<1x128x128xbf16>
    %35 = vector.shape_cast %34 : vector<1x128x128xbf16> to vector<128x128xbf16>
    %cst_48 = arith.constant dense<0.000000e+00> : vector<64x128xf32>
    %36 = tpu.matmul %33, %35, %cst_48 {dimension_numbers = #tpu.dot_dimension_numbers<[1], [0], [0], [1], [0, 0, 1, 1], [], []>} : vector<64x128xbf16>, vector<128x128xbf16>, vector<64x128xf32> -> vector<64x128xf32>
    %37 = arith.addf %31, %36 : vector<64x128xf32>
    %c1_49 = arith.constant 1 : index
    %c2_50 = arith.constant 2 : index
    %c0_51 = arith.constant 0 : index
    %38 = vector.load %arg6[%c1_49, %c2_50, %c0_51] : memref<10x10x128xbf16, #tpu.memory_space<vmem>>, vector<8x8x128xbf16>
    %39 = vector.shape_cast %38 : vector<8x8x128xbf16> to vector<64x128xbf16>
    %c5 = arith.constant 5 : index
    %c0_52 = arith.constant 0 : index
    %c0_53 = arith.constant 0 : index
    %40 = vector.load %arg2[%c5, %c0_52, %c0_53] : memref<9x128x128xbf16, #tpu.memory_space<vmem>>, vector<1x128x128xbf16>
    %41 = vector.shape_cast %40 : vector<1x128x128xbf16> to vector<128x128xbf16>
    %cst_54 = arith.constant dense<0.000000e+00> : vector<64x128xf32>
    %42 = tpu.matmul %39, %41, %cst_54 {dimension_numbers = #tpu.dot_dimension_numbers<[1], [0], [0], [1], [0, 0, 1, 1], [], []>} : vector<64x128xbf16>, vector<128x128xbf16>, vector<64x128xf32> -> vector<64x128xf32>
    %43 = arith.addf %37, %42 : vector<64x128xf32>
    %c2_55 = arith.constant 2 : index
    %c0_56 = arith.constant 0 : index
    %c0_57 = arith.constant 0 : index
    %44 = vector.load %arg6[%c2_55, %c0_56, %c0_57] : memref<10x10x128xbf16, #tpu.memory_space<vmem>>, vector<8x8x128xbf16>
    %45 = vector.shape_cast %44 : vector<8x8x128xbf16> to vector<64x128xbf16>
    %c6 = arith.constant 6 : index
    %c0_58 = arith.constant 0 : index
    %c0_59 = arith.constant 0 : index
    %46 = vector.load %arg2[%c6, %c0_58, %c0_59] : memref<9x128x128xbf16, #tpu.memory_space<vmem>>, vector<1x128x128xbf16>
    %47 = vector.shape_cast %46 : vector<1x128x128xbf16> to vector<128x128xbf16>
    %cst_60 = arith.constant dense<0.000000e+00> : vector<64x128xf32>
    %48 = tpu.matmul %45, %47, %cst_60 {dimension_numbers = #tpu.dot_dimension_numbers<[1], [0], [0], [1], [0, 0, 1, 1], [], []>} : vector<64x128xbf16>, vector<128x128xbf16>, vector<64x128xf32> -> vector<64x128xf32>
    %49 = arith.addf %43, %48 : vector<64x128xf32>
    %c2_61 = arith.constant 2 : index
    %c1_62 = arith.constant 1 : index
    %c0_63 = arith.constant 0 : index
    %50 = vector.load %arg6[%c2_61, %c1_62, %c0_63] : memref<10x10x128xbf16, #tpu.memory_space<vmem>>, vector<8x8x128xbf16>
    %51 = vector.shape_cast %50 : vector<8x8x128xbf16> to vector<64x128xbf16>
    %c7 = arith.constant 7 : index
    %c0_64 = arith.constant 0 : index
    %c0_65 = arith.constant 0 : index
    %52 = vector.load %arg2[%c7, %c0_64, %c0_65] : memref<9x128x128xbf16, #tpu.memory_space<vmem>>, vector<1x128x128xbf16>
    %53 = vector.shape_cast %52 : vector<1x128x128xbf16> to vector<128x128xbf16>
    %cst_66 = arith.constant dense<0.000000e+00> : vector<64x128xf32>
    %54 = tpu.matmul %51, %53, %cst_66 {dimension_numbers = #tpu.dot_dimension_numbers<[1], [0], [0], [1], [0, 0, 1, 1], [], []>} : vector<64x128xbf16>, vector<128x128xbf16>, vector<64x128xf32> -> vector<64x128xf32>
    %55 = arith.addf %49, %54 : vector<64x128xf32>
    %c2_67 = arith.constant 2 : index
    %c2_68 = arith.constant 2 : index
    %c0_69 = arith.constant 0 : index
    %56 = vector.load %arg6[%c2_67, %c2_68, %c0_69] : memref<10x10x128xbf16, #tpu.memory_space<vmem>>, vector<8x8x128xbf16>
    %57 = vector.shape_cast %56 : vector<8x8x128xbf16> to vector<64x128xbf16>
    %c8 = arith.constant 8 : index
    %c0_70 = arith.constant 0 : index
    %c0_71 = arith.constant 0 : index
    %58 = vector.load %arg2[%c8, %c0_70, %c0_71] : memref<9x128x128xbf16, #tpu.memory_space<vmem>>, vector<1x128x128xbf16>
    %59 = vector.shape_cast %58 : vector<1x128x128xbf16> to vector<128x128xbf16>
    %cst_72 = arith.constant dense<0.000000e+00> : vector<64x128xf32>
    %60 = tpu.matmul %57, %59, %cst_72 {dimension_numbers = #tpu.dot_dimension_numbers<[1], [0], [0], [1], [0, 0, 1, 1], [], []>} : vector<64x128xbf16>, vector<128x128xbf16>, vector<64x128xf32> -> vector<64x128xf32>
    %61 = arith.addf %55, %60 : vector<64x128xf32>
    %c0_73 = arith.constant 0 : index
    %c0_74 = arith.constant 0 : index
    %62 = vector.load %arg3[%c0_73, %c0_74] : memref<1x128xf32, #tpu.memory_space<vmem>>, vector<1x128xf32>
    %63 = vector.broadcast %62 : vector<1x128xf32> to vector<64x128xf32>
    %64 = arith.mulf %61, %63 : vector<64x128xf32>
    %c0_75 = arith.constant 0 : index
    %c0_76 = arith.constant 0 : index
    %65 = vector.load %arg4[%c0_75, %c0_76] : memref<1x128xf32, #tpu.memory_space<vmem>>, vector<1x128xf32>
    %66 = vector.broadcast %65 : vector<1x128xf32> to vector<64x128xf32>
    %67 = arith.addf %64, %66 : vector<64x128xf32>
    %cst_77 = arith.constant 0.000000e+00 : f32
    %68 = vector.broadcast %cst_77 : f32 to vector<64x128xf32>
    %69 = arith.maximumf %67, %68 : vector<64x128xf32>
    %70 = vector.shape_cast %69 : vector<64x128xf32> to vector<1x8x8x128xf32>
    %71 = arith.truncf %70 : vector<1x8x8x128xf32> to vector<1x8x8x128xbf16>
    %c0_78 = arith.constant 0 : index
    %c0_79 = arith.constant 0 : index
    %c0_80 = arith.constant 0 : index
    %c0_81 = arith.constant 0 : index
    %72 = vector.load %arg5[%c0_78, %c0_79, %c0_80, %c0_81] : memref<1x8x8x128xbf16, #tpu.memory_space<vmem>>, vector<1x8x8x128xbf16>
    tpu.vector_store %arg5[%c0_78, %c0_79, %c0_80, %c0_81], %71 {strides = array<i32>} : memref<1x8x8x128xbf16, #tpu.memory_space<vmem>>, vector<1x8x8x128xbf16>,
    return
  }
  func.func @transform_0(%arg0: i32) -> (i32, i32, i32, i32) {
    %c0_i32 = arith.constant 0 : i32
    %c0_i32_0 = arith.constant 0 : i32
    %c0_i32_1 = arith.constant 0 : i32
    %c0_i32_2 = arith.constant 0 : i32
    return %arg0, %c0_i32, %c0_i32_0, %c0_i32_1 : i32, i32, i32, i32
  }
  func.func @transform_1(%arg0: i32) -> (i32, i32, i32) {
    %c0_i32 = arith.constant 0 : i32
    %c0_i32_0 = arith.constant 0 : i32
    %c0_i32_1 = arith.constant 0 : i32
    %c0_i32_2 = arith.constant 0 : i32
    return %c0_i32, %c0_i32_0, %c0_i32_1 : i32, i32, i32
  }
  func.func @transform_2(%arg0: i32) -> (i32, i32) {
    %c0_i32 = arith.constant 0 : i32
    %c0_i32_0 = arith.constant 0 : i32
    %c0_i32_1 = arith.constant 0 : i32
    return %c0_i32, %c0_i32_0 : i32, i32
  }
  func.func @transform_3(%arg0: i32) -> (i32, i32) {
    %c0_i32 = arith.constant 0 : i32
    %c0_i32_0 = arith.constant 0 : i32
    %c0_i32_1 = arith.constant 0 : i32
    return %c0_i32, %c0_i32_0 : i32, i32
  }
  func.func @transform_4(%arg0: i32) -> (i32, i32, i32, i32) {
    %c0_i32 = arith.constant 0 : i32
    %c0_i32_0 = arith.constant 0 : i32
    %c0_i32_1 = arith.constant 0 : i32
    %c0_i32_2 = arith.constant 0 : i32
    return %arg0, %c0_i32, %c0_i32_0, %c0_i32_1 : i32, i32, i32, i32
  }
}

module attributes {stable_mosaic.version = 11 : i64} {
  func.func @_conv1x1_bn_pool_kernel(%arg0: i32, %arg1: i32, %arg2: memref<1x64x128xbf16, #tpu.memory_space<vmem>>, %arg3: memref<128x128xbf16, #tpu.memory_space<vmem>>, %arg4: memref<1x128xf32, #tpu.memory_space<vmem>>, %arg5: memref<1x128xf32, #tpu.memory_space<vmem>>, %arg6: memref<1x64x128xbf16, #tpu.memory_space<vmem>>, %arg7: memref<1x1x128xf32, #tpu.memory_space<vmem>>) attributes {dimension_semantics = [#tpu.dimension_semantics<parallel>, #tpu.dimension_semantics<arbitrary>], iteration_bounds = array<i64: 2, 1>, scalar_prefetch = 0 : i64, scratch_operands = 0 : i64, tpu.core_type = #tpu.core_type<tc>, window_params = [{transform_indices = @transform_0, window_bounds = array<i64: 1, 64, 128>}, {pipeline_mode = #tpu.pipeline_mode<synchronous>, transform_indices = @transform_1, window_bounds = array<i64: 128, 128>}, {pipeline_mode = #tpu.pipeline_mode<synchronous>, transform_indices = @transform_2, window_bounds = array<i64: 1, 128>}, {pipeline_mode = #tpu.pipeline_mode<synchronous>, transform_indices = @transform_3, window_bounds = array<i64: 1, 128>}, {transform_indices = @transform_4, window_bounds = array<i64: 1, 64, 128>}, {transform_indices = @transform_5, window_bounds = array<i64: 1, 1, 128>}]} {
    %c0 = arith.constant 0 : index
    %c0_0 = arith.constant 0 : index
    %c0_1 = arith.constant 0 : index
    %0 = vector.load %arg2[%c0, %c0_0, %c0_1] : memref<1x64x128xbf16, #tpu.memory_space<vmem>>, vector<1x64x128xbf16>
    %1 = vector.shape_cast %0 : vector<1x64x128xbf16> to vector<64x128xbf16>
    %c0_2 = arith.constant 0 : index
    %c0_3 = arith.constant 0 : index
    %2 = vector.load %arg3[%c0_2, %c0_3] : memref<128x128xbf16, #tpu.memory_space<vmem>>, vector<128x128xbf16>
    %cst = arith.constant dense<0.000000e+00> : vector<64x128xf32>
    %3 = tpu.matmul %1, %2, %cst {dimension_numbers = #tpu.dot_dimension_numbers<[1], [0], [0], [1], [0, 0, 1, 1], [], []>} : vector<64x128xbf16>, vector<128x128xbf16>, vector<64x128xf32> -> vector<64x128xf32>
    %c0_4 = arith.constant 0 : index
    %c0_5 = arith.constant 0 : index
    %4 = vector.load %arg4[%c0_4, %c0_5] : memref<1x128xf32, #tpu.memory_space<vmem>>, vector<1x128xf32>
    %5 = vector.broadcast %4 : vector<1x128xf32> to vector<64x128xf32>
    %6 = arith.mulf %3, %5 : vector<64x128xf32>
    %c0_6 = arith.constant 0 : index
    %c0_7 = arith.constant 0 : index
    %7 = vector.load %arg5[%c0_6, %c0_7] : memref<1x128xf32, #tpu.memory_space<vmem>>, vector<1x128xf32>
    %8 = vector.broadcast %7 : vector<1x128xf32> to vector<64x128xf32>
    %9 = arith.addf %6, %8 : vector<64x128xf32>
    %10 = vector.shape_cast %9 : vector<64x128xf32> to vector<1x64x128xf32>
    %11 = arith.truncf %10 : vector<1x64x128xf32> to vector<1x64x128xbf16>
    %c0_8 = arith.constant 0 : index
    %c0_9 = arith.constant 0 : index
    %c0_10 = arith.constant 0 : index
    %12 = vector.load %arg6[%c0_8, %c0_9, %c0_10] : memref<1x64x128xbf16, #tpu.memory_space<vmem>>, vector<1x64x128xbf16>
    tpu.vector_store %arg6[%c0_8, %c0_9, %c0_10], %11 {strides = array<i32>} : memref<1x64x128xbf16, #tpu.memory_space<vmem>>, vector<1x64x128xbf16>,
    %c0_i32 = arith.constant 0 : i32
    %13 = arith.cmpi eq, %arg1, %c0_i32 : i32
    %14 = arith.extui %13 : i1 to i32
    %c0_i32_11 = arith.constant 0 : i32
    %15 = arith.cmpi ne, %14, %c0_i32_11 : i32
    scf.if %15 {
      %cst_20 = arith.constant 0.000000e+00 : f32
      %24 = vector.broadcast %cst_20 : f32 to vector<1x1x128xf32>
      %c0_21 = arith.constant 0 : index
      %c0_22 = arith.constant 0 : index
      %c0_23 = arith.constant 0 : index
      %25 = vector.load %arg7[%c0_21, %c0_22, %c0_23] : memref<1x1x128xf32, #tpu.memory_space<vmem>>, vector<1x1x128xf32>
      tpu.vector_store %arg7[%c0_21, %c0_22, %c0_23], %24 {strides = array<i32>} : memref<1x1x128xf32, #tpu.memory_space<vmem>>, vector<1x1x128xf32>,
    } else {
    }
    %c0_12 = arith.constant 0 : index
    %c0_13 = arith.constant 0 : index
    %c0_14 = arith.constant 0 : index
    %16 = vector.load %arg7[%c0_12, %c0_13, %c0_14] : memref<1x1x128xf32, #tpu.memory_space<vmem>>, vector<1x1x128xf32>
    %cst_15 = arith.constant dense<0.000000e+00> : vector<128xf32>
    %17 = vector.multi_reduction <add>, %9, %cst_15 [0] : vector<64x128xf32> to vector<128xf32>
    %18 = vector.shape_cast %17 : vector<128xf32> to vector<1x128xf32>
    %cst_16 = arith.constant 1.562500e-02 : f32
    %19 = vector.broadcast %cst_16 : f32 to vector<1x128xf32>
    %20 = arith.mulf %18, %19 : vector<1x128xf32>
    %21 = vector.shape_cast %20 : vector<1x128xf32> to vector<1x1x128xf32>
    %22 = arith.addf %16, %21 : vector<1x1x128xf32>
    %c0_17 = arith.constant 0 : index
    %c0_18 = arith.constant 0 : index
    %c0_19 = arith.constant 0 : index
    %23 = vector.load %arg7[%c0_17, %c0_18, %c0_19] : memref<1x1x128xf32, #tpu.memory_space<vmem>>, vector<1x1x128xf32>
    tpu.vector_store %arg7[%c0_17, %c0_18, %c0_19], %22 {strides = array<i32>} : memref<1x1x128xf32, #tpu.memory_space<vmem>>, vector<1x1x128xf32>,
    return
  }
  func.func @transform_0(%arg0: i32, %arg1: i32) -> (i32, i32, i32) {
    %c0_i32 = arith.constant 0 : i32
    %c0_i32_0 = arith.constant 0 : i32
    return %arg0, %arg1, %c0_i32 : i32, i32, i32
  }
  func.func @transform_1(%arg0: i32, %arg1: i32) -> (i32, i32) {
    %c0_i32 = arith.constant 0 : i32
    %c0_i32_0 = arith.constant 0 : i32
    %c0_i32_1 = arith.constant 0 : i32
    return %c0_i32, %c0_i32_0 : i32, i32
  }
  func.func @transform_2(%arg0: i32, %arg1: i32) -> (i32, i32) {
    %c0_i32 = arith.constant 0 : i32
    %c0_i32_0 = arith.constant 0 : i32
    %c0_i32_1 = arith.constant 0 : i32
    return %c0_i32, %c0_i32_0 : i32, i32
  }
  func.func @transform_3(%arg0: i32, %arg1: i32) -> (i32, i32) {
    %c0_i32 = arith.constant 0 : i32
    %c0_i32_0 = arith.constant 0 : i32
    %c0_i32_1 = arith.constant 0 : i32
    return %c0_i32, %c0_i32_0 : i32, i32
  }
  func.func @transform_4(%arg0: i32, %arg1: i32) -> (i32, i32, i32) {
    %c0_i32 = arith.constant 0 : i32
    %c0_i32_0 = arith.constant 0 : i32
    return %arg0, %arg1, %c0_i32 : i32, i32, i32
  }
  func.func @transform_5(%arg0: i32, %arg1: i32) -> (i32, i32, i32) {
    %c0_i32 = arith.constant 0 : i32
    %c0_i32_0 = arith.constant 0 : i32
    %c0_i32_1 = arith.constant 0 : i32
    return %arg0, %c0_i32, %c0_i32_0 : i32, i32, i32
  }
}

module attributes {stable_mosaic.version = 11 : i64} {
  func.func @_se_fc_kernel(%arg0: i32, %arg1: memref<2x128xf32, #tpu.memory_space<vmem>>, %arg2: memref<128x128xf32, #tpu.memory_space<vmem>>, %arg3: memref<1x128xf32, #tpu.memory_space<vmem>>, %arg4: memref<128x128xf32, #tpu.memory_space<vmem>>, %arg5: memref<1x128xf32, #tpu.memory_space<vmem>>, %arg6: memref<2x128xf32, #tpu.memory_space<vmem>>) attributes {dimension_semantics = [#tpu.dimension_semantics<arbitrary>], iteration_bounds = array<i64: 1>, scalar_prefetch = 0 : i64, scratch_operands = 0 : i64, tpu.core_type = #tpu.core_type<tc>, window_params = [{pipeline_mode = #tpu.pipeline_mode<synchronous>, transform_indices = @transform_0, window_bounds = array<i64: 2, 128>}, {pipeline_mode = #tpu.pipeline_mode<synchronous>, transform_indices = @transform_1, window_bounds = array<i64: 128, 128>}, {pipeline_mode = #tpu.pipeline_mode<synchronous>, transform_indices = @transform_2, window_bounds = array<i64: 1, 128>}, {pipeline_mode = #tpu.pipeline_mode<synchronous>, transform_indices = @transform_3, window_bounds = array<i64: 128, 128>}, {pipeline_mode = #tpu.pipeline_mode<synchronous>, transform_indices = @transform_4, window_bounds = array<i64: 1, 128>}, {pipeline_mode = #tpu.pipeline_mode<synchronous>, transform_indices = @transform_5, window_bounds = array<i64: 2, 128>}]} {
    %c0 = arith.constant 0 : index
    %c0_0 = arith.constant 0 : index
    %0 = vector.load %arg1[%c0, %c0_0] : memref<2x128xf32, #tpu.memory_space<vmem>>, vector<2x128xf32>
    %c0_1 = arith.constant 0 : index
    %c0_2 = arith.constant 0 : index
    %1 = vector.load %arg2[%c0_1, %c0_2] : memref<128x128xf32, #tpu.memory_space<vmem>>, vector<128x128xf32>
    %cst = arith.constant dense<0.000000e+00> : vector<2x128xf32>
    %2 = tpu.matmul %0, %1, %cst {dimension_numbers = #tpu.dot_dimension_numbers<[1], [0], [0], [1], [0, 0, 1, 1], [], []>} : vector<2x128xf32>, vector<128x128xf32>, vector<2x128xf32> -> vector<2x128xf32>
    %c0_3 = arith.constant 0 : index
    %c0_4 = arith.constant 0 : index
    %3 = vector.load %arg3[%c0_3, %c0_4] : memref<1x128xf32, #tpu.memory_space<vmem>>, vector<1x128xf32>
    %4 = vector.broadcast %3 : vector<1x128xf32> to vector<2x128xf32>
    %5 = arith.addf %2, %4 : vector<2x128xf32>
    %cst_5 = arith.constant 0.000000e+00 : f32
    %6 = vector.broadcast %cst_5 : f32 to vector<2x128xf32>
    %7 = arith.maximumf %5, %6 : vector<2x128xf32>
    %c0_6 = arith.constant 0 : index
    %c0_7 = arith.constant 0 : index
    %8 = vector.load %arg4[%c0_6, %c0_7] : memref<128x128xf32, #tpu.memory_space<vmem>>, vector<128x128xf32>
    %cst_8 = arith.constant dense<0.000000e+00> : vector<2x128xf32>
    %9 = tpu.matmul %7, %8, %cst_8 {dimension_numbers = #tpu.dot_dimension_numbers<[1], [0], [0], [1], [0, 0, 1, 1], [], []>} : vector<2x128xf32>, vector<128x128xf32>, vector<2x128xf32> -> vector<2x128xf32>
    %c0_9 = arith.constant 0 : index
    %c0_10 = arith.constant 0 : index
    %10 = vector.load %arg5[%c0_9, %c0_10] : memref<1x128xf32, #tpu.memory_space<vmem>>, vector<1x128xf32>
    %11 = vector.broadcast %10 : vector<1x128xf32> to vector<2x128xf32>
    %12 = arith.addf %9, %11 : vector<2x128xf32>
    %13 = arith.negf %12 : vector<2x128xf32>
    %14 = math.exp %13 : vector<2x128xf32>
    %cst_11 = arith.constant 1.000000e+00 : f32
    %15 = vector.broadcast %cst_11 : f32 to vector<2x128xf32>
    %16 = arith.addf %15, %14 : vector<2x128xf32>
    %17 = arith.divf %15, %16 : vector<2x128xf32>
    %c0_12 = arith.constant 0 : index
    %c0_13 = arith.constant 0 : index
    %18 = vector.load %arg6[%c0_12, %c0_13] : memref<2x128xf32, #tpu.memory_space<vmem>>, vector<2x128xf32>
    tpu.vector_store %arg6[%c0_12, %c0_13], %17 {strides = array<i32>} : memref<2x128xf32, #tpu.memory_space<vmem>>, vector<2x128xf32>,
    return
  }
  func.func @transform_0(%arg0: i32) -> (i32, i32) {
    %c0_i32 = arith.constant 0 : i32
    %c0_i32_0 = arith.constant 0 : i32
    %c0_i32_1 = arith.constant 0 : i32
    return %c0_i32, %c0_i32_0 : i32, i32
  }
  func.func @transform_1(%arg0: i32) -> (i32, i32) {
    %c0_i32 = arith.constant 0 : i32
    %c0_i32_0 = arith.constant 0 : i32
    %c0_i32_1 = arith.constant 0 : i32
    return %c0_i32, %c0_i32_0 : i32, i32
  }
  func.func @transform_2(%arg0: i32) -> (i32, i32) {
    %c0_i32 = arith.constant 0 : i32
    %c0_i32_0 = arith.constant 0 : i32
    %c0_i32_1 = arith.constant 0 : i32
    return %c0_i32, %c0_i32_0 : i32, i32
  }
  func.func @transform_3(%arg0: i32) -> (i32, i32) {
    %c0_i32 = arith.constant 0 : i32
    %c0_i32_0 = arith.constant 0 : i32
    %c0_i32_1 = arith.constant 0 : i32
    return %c0_i32, %c0_i32_0 : i32, i32
  }
  func.func @transform_4(%arg0: i32) -> (i32, i32) {
    %c0_i32 = arith.constant 0 : i32
    %c0_i32_0 = arith.constant 0 : i32
    %c0_i32_1 = arith.constant 0 : i32
    return %c0_i32, %c0_i32_0 : i32, i32
  }
  func.func @transform_5(%arg0: i32) -> (i32, i32) {
    %c0_i32 = arith.constant 0 : i32
    %c0_i32_0 = arith.constant 0 : i32
    %c0_i32_1 = arith.constant 0 : i32
    return %c0_i32, %c0_i32_0 : i32, i32
  }
}

module attributes {stable_mosaic.version = 11 : i64} {
  func.func @_scale_res_relu_kernel(%arg0: i32, %arg1: i32, %arg2: memref<1x64x128xbf16, #tpu.memory_space<vmem>>, %arg3: memref<1x64x128xbf16, #tpu.memory_space<vmem>>, %arg4: memref<1x1x128xf32, #tpu.memory_space<vmem>>, %arg5: memref<1x64x128xbf16, #tpu.memory_space<vmem>>) attributes {dimension_semantics = [#tpu.dimension_semantics<parallel>, #tpu.dimension_semantics<parallel>], iteration_bounds = array<i64: 2, 1>, scalar_prefetch = 0 : i64, scratch_operands = 0 : i64, tpu.core_type = #tpu.core_type<tc>, window_params = [{transform_indices = @transform_0, window_bounds = array<i64: 1, 64, 128>}, {transform_indices = @transform_1, window_bounds = array<i64: 1, 64, 128>}, {transform_indices = @transform_2, window_bounds = array<i64: 1, 1, 128>}, {transform_indices = @transform_3, window_bounds = array<i64: 1, 64, 128>}]} {
    %c0 = arith.constant 0 : index
    %c0_0 = arith.constant 0 : index
    %c0_1 = arith.constant 0 : index
    %0 = vector.load %arg2[%c0, %c0_0, %c0_1] : memref<1x64x128xbf16, #tpu.memory_space<vmem>>, vector<1x64x128xbf16>
    %1 = vector.shape_cast %0 : vector<1x64x128xbf16> to vector<64x128xbf16>
    %2 = arith.extf %1 : vector<64x128xbf16> to vector<64x128xf32>
    %c0_2 = arith.constant 0 : index
    %c0_3 = arith.constant 0 : index
    %c0_4 = arith.constant 0 : index
    %3 = vector.load %arg4[%c0_2, %c0_3, %c0_4] : memref<1x1x128xf32, #tpu.memory_space<vmem>>, vector<1x1x128xf32>
    %4 = vector.shape_cast %3 : vector<1x1x128xf32> to vector<1x128xf32>
    %5 = vector.broadcast %4 : vector<1x128xf32> to vector<64x128xf32>
    %6 = arith.mulf %2, %5 : vector<64x128xf32>
    %c0_5 = arith.constant 0 : index
    %c0_6 = arith.constant 0 : index
    %c0_7 = arith.constant 0 : index
    %7 = vector.load %arg3[%c0_5, %c0_6, %c0_7] : memref<1x64x128xbf16, #tpu.memory_space<vmem>>, vector<1x64x128xbf16>
    %8 = vector.shape_cast %7 : vector<1x64x128xbf16> to vector<64x128xbf16>
    %9 = arith.extf %8 : vector<64x128xbf16> to vector<64x128xf32>
    %10 = arith.addf %6, %9 : vector<64x128xf32>
    %cst = arith.constant 0.000000e+00 : f32
    %11 = vector.broadcast %cst : f32 to vector<64x128xf32>
    %12 = arith.maximumf %10, %11 : vector<64x128xf32>
    %13 = vector.shape_cast %12 : vector<64x128xf32> to vector<1x64x128xf32>
    %14 = arith.truncf %13 : vector<1x64x128xf32> to vector<1x64x128xbf16>
    %c0_8 = arith.constant 0 : index
    %c0_9 = arith.constant 0 : index
    %c0_10 = arith.constant 0 : index
    %15 = vector.load %arg5[%c0_8, %c0_9, %c0_10] : memref<1x64x128xbf16, #tpu.memory_space<vmem>>, vector<1x64x128xbf16>
    tpu.vector_store %arg5[%c0_8, %c0_9, %c0_10], %14 {strides = array<i32>} : memref<1x64x128xbf16, #tpu.memory_space<vmem>>, vector<1x64x128xbf16>,
    return
  }
  func.func @transform_0(%arg0: i32, %arg1: i32) -> (i32, i32, i32) {
    %c0_i32 = arith.constant 0 : i32
    %c0_i32_0 = arith.constant 0 : i32
    return %arg0, %arg1, %c0_i32 : i32, i32, i32
  }
  func.func @transform_1(%arg0: i32, %arg1: i32) -> (i32, i32, i32) {
    %c0_i32 = arith.constant 0 : i32
    %c0_i32_0 = arith.constant 0 : i32
    return %arg0, %arg1, %c0_i32 : i32, i32, i32
  }
  func.func @transform_2(%arg0: i32, %arg1: i32) -> (i32, i32, i32) {
    %c0_i32 = arith.constant 0 : i32
    %c0_i32_0 = arith.constant 0 : i32
    %c0_i32_1 = arith.constant 0 : i32
    return %arg0, %c0_i32, %c0_i32_0 : i32, i32, i32
  }
  func.func @transform_3(%arg0: i32, %arg1: i32) -> (i32, i32, i32) {
    %c0_i32 = arith.constant 0 : i32
    %c0_i32_0 = arith.constant 0 : i32
    return %arg0, %arg1, %c0_i32 : i32, i32, i32
  }
}

</mosaic_0001>

<llo_original>
// kernel: bottleneck_forward.5
$region0: #{bottleneck_forward.5}
  #allocation0 [shape = 'u32[]', space=smem, size = 0x4, offset = 0x4, fixed_abs, tag = 'smem constant byte address 0x4 - core index']
  #allocation1 [shape = 'u32[144,128]{1,0:T(1,128)}', space=vmem, size = 0x12000, scoped, tag = 'internal scratch']
  %s0 = inlined_call_operand.vmem [shape: bf16[128,128], index: 0, kind: input, shape index: {}]
  %s1 = inlined_call_operand.hbm [shape: bf16[128,128], index: 1, kind: input, shape index: {}]
  %s2 = inlined_call_operand.hbm [shape: f32[1,128], index: 2, kind: input, shape index: {}]
  %s3 = inlined_call_operand.hbm [shape: f32[1,128], index: 3, kind: input, shape index: {}]
  %s4 = inlined_call_operand.vmem [shape: bf16[128,128], index: 4, kind: output, shape index: {}]
  %s5 = sld [smem:[#allocation0]]
  $region38: #{bottleneck_forward.5} parent=0
    _
  %s7 = ssub.s32 1, %s5
  %s8 = scalar_select 0, %s7, %s5
  $region1: #{bottleneck_forward.5} parent=0
    #allocation2 [shape = 'u8[32768]{0}', space=vmem, size = 0x8000, scoped, tag = 'input window, operand 1, single buffered']
    #allocation3 [shape = 's32[1]{0}', space=sflag, size = 0x4, scoped, tag = 'scoped memory for bottleneck_forward.5']
    #allocation4 [shape = 'u8[512]{0}', space=vmem, size = 0x400, scoped, tag = 'input window, operand 2, single buffered']
    #allocation5 [shape = 's32[1]{0}', space=sflag, size = 0x4, scoped, tag = 'scoped memory for bottleneck_forward.5']
    #allocation6 [shape = 'u8[512]{0}', space=vmem, size = 0x400, scoped, tag = 'input window, operand 3, single buffered']
    %9 = vsyncpa [#allocation3], 0
    %10 = vsyncpa [#allocation5], 0
    // Predicated region
    $region2: #{bottleneck_forward.5} parent=1 // pred_check
      _
    $region3: #{bottleneck_forward.5} parent=1 // pred_check_branch
      %12 = sbr.rel (0) target = $region5
    $region4: #{bottleneck_forward.5} parent=1 // pred_region
      _
    $region5: #{bottleneck_forward.5} parent=1 // pred_fallthru
      _
    // Predicated region
    $region6: #{bottleneck_forward.5} parent=1 // pred_check
      _
    $region7: #{bottleneck_forward.5} parent=1 // pred_check_branch
      %14 = sbr.rel (0) target = $region9
    $region8: #{bottleneck_forward.5} parent=1 // pred_region
      %s16 = ssub.s32 1024, 1024
      %17 = vsyncadd [#allocation3], %s16
      %s18 = sshll.u32 [#allocation2], 4
      %s19 = int_to_ptr.vmem [resolvable:$true] %s18
      %24 = dma.hbm_to_vmem [thread:$0]  %s1, 1024, %s19, [#allocation3], 64, 64, 4
    $region9: #{bottleneck_forward.5} parent=1 // pred_fallthru
      _
    // Predicated region
    $region10: #{bottleneck_forward.5} parent=1 // pred_check
      _
    $region11: #{bottleneck_forward.5} parent=1 // pred_check_branch
      %26 = sbr.rel (0) target = $region13
    $region12: #{bottleneck_forward.5} parent=1 // pred_region
      %s28 = ssub.s32 16, 16
      %29 = vsyncadd [#allocation5], %s28
      %s31 = sshll.u32 [#allocation4], 4
      %s32 = int_to_ptr.vmem [resolvable:$true] %s31
      %34 = dma.hbm_to_vmem [thread:$0]  %s2, 16, %s32, [#allocation5]
    $region13: #{bottleneck_forward.5} parent=1 // pred_fallthru
      _
    // Predicated region
    $region14: #{bottleneck_forward.5} parent=1 // pred_check
      _
    $region15: #{bottleneck_forward.5} parent=1 // pred_check_branch
      %36 = sbr.rel (0) target = $region17
    $region16: #{bottleneck_forward.5} parent=1 // pred_region
      %s38 = ssub.s32 16, 16
      %39 = vsyncadd [#allocation5], %s38
      %s41 = sshll.u32 [#allocation6], 4
      %s42 = int_to_ptr.vmem [resolvable:$true] %s41
      %44 = dma.hbm_to_vmem [thread:$0]  %s3, 16, %s42, [#allocation5]
    $region17: #{bottleneck_forward.5} parent=1 // pred_fallthru
      _
    // Predicated region
    $region18: #{bottleneck_forward.5} parent=1 // pred_check
      _
    $region19: #{bottleneck_forward.5} parent=1 // pred_check_branch
      %46 = sbr.rel (0) target = $region21
    $region20: #{bottleneck_forward.5} parent=1 // pred_region
      %47 = dma.done [#allocation3], 1024
    $region21: #{bottleneck_forward.5} parent=1 // pred_fallthru
      _
    // Predicated region
    $region22: #{bottleneck_forward.5} parent=1 // pred_check
      _
    $region23: #{bottleneck_forward.5} parent=1 // pred_check_branch
      %49 = sbr.rel (0) target = $region25
    $region24: #{bottleneck_forward.5} parent=1 // pred_region
      %50 = dma.done [#allocation5], 16
    $region25: #{bottleneck_forward.5} parent=1 // pred_fallthru
      _
    // Predicated region
    $region26: #{bottleneck_forward.5} parent=1 // pred_check
      _
    $region27: #{bottleneck_forward.5} parent=1 // pred_check_branch
      %52 = sbr.rel (0) target = $region29
    $region28: #{bottleneck_forward.5} parent=1 // pred_region
      %53 = dma.done [#allocation5], 16
    $region29: #{bottleneck_forward.5} parent=1 // pred_fallthru
      _
    %v55 = vld [vmem:[%s0] sm:$0xf]
    %v56 = vld [vmem:[%s0 + $0x4] sm:$0xf]
    %v57 = vld [vmem:[%s0 + $0x8] sm:$0xf]
    %v58 = vld [vmem:[%s0 + $0xc] sm:$0xf]
    %v59 = vld [vmem:[%s0 + $0x10] sm:$0xf]
    %v60 = vld [vmem:[%s0 + $0x14] sm:$0xf]
    %v61 = vld [vmem:[%s0 + $0x18] sm:$0xf]
    %v62 = vld [vmem:[%s0 + $0x1c] sm:$0xf]
    %v63 = vld [vmem:[%s0 + $0x20] sm:$0xf]
    %v64 = vld [vmem:[%s0 + $0x24] sm:$0xf]
    %v65 = vld [vmem:[%s0 + $0x28] sm:$0xf]
    %v66 = vld [vmem:[%s0 + $0x2c] sm:$0xf]
    %v67 = vld [vmem:[%s0 + $0x30] sm:$0xf]
    %v68 = vld [vmem:[%s0 + $0x34] sm:$0xf]
    %v69 = vld [vmem:[%s0 + $0x38] sm:$0xf]
    %v70 = vld [vmem:[%s0 + $0x3c] sm:$0xf]
    %v71 = vld [vmem:[#allocation2] sm:$0xf]
    %v72 = vld [vmem:[#allocation2 + $0x4] sm:$0xf]
    %v73 = vld [vmem:[#allocation2 + $0x8] sm:$0xf]
    %v74 = vld [vmem:[#allocation2 + $0xc] sm:$0xf]
    %v75 = vld [vmem:[#allocation2 + $0x10] sm:$0xf]
    %v76 = vld [vmem:[#allocation2 + $0x14] sm:$0xf]
    %v77 = vld [vmem:[#allocation2 + $0x18] sm:$0xf]
    %v78 = vld [vmem:[#allocation2 + $0x1c] sm:$0xf]
    %v79 = vld [vmem:[#allocation2 + $0x20] sm:$0xf]
    %v80 = vld [vmem:[#allocation2 + $0x24] sm:$0xf]
    %v81 = vld [vmem:[#allocation2 + $0x28] sm:$0xf]
    %v82 = vld [vmem:[#allocation2 + $0x2c] sm:$0xf]
    %v83 = vld [vmem:[#allocation2 + $0x30] sm:$0xf]
    %v84 = vld [vmem:[#allocation2 + $0x34] sm:$0xf]
    %v85 = vld [vmem:[#allocation2 + $0x38] sm:$0xf]
    %v86 = vld [vmem:[#allocation2 + $0x3c] sm:$0xf]
    %v103 = vunpack.c.l.b16 %v55
    %v104 = vunpack.c.l.b16 %v56
    %v105 = vunpack.c.l.b16 %v57
    %v106 = vunpack.c.l.b16 %v58
    %v107 = vunpack.c.l.b16 %v59
    %v108 = vunpack.c.l.b16 %v60
    %v109 = vunpack.c.l.b16 %v61
    %v110 = vunpack.c.l.b16 %v62
    %v111 = vunpack.c.l.b16 %v63
    %v112 = vunpack.c.l.b16 %v64
    %v113 = vunpack.c.l.b16 %v65
    %v114 = vunpack.c.l.b16 %v66
    %v115 = vunpack.c.l.b16 %v67
    %v116 = vunpack.c.l.b16 %v68
    %v117 = vunpack.c.l.b16 %v69
    %v118 = vunpack.c.l.b16 %v70
    %v119 = vpack.c.b16 %v104, %v103
    %v120 = vpack.c.b16 %v106, %v105
    %v121 = vpack.c.b16 %v108, %v107
    %v122 = vpack.c.b16 %v110, %v109
    %v123 = vpack.c.b16 %v112, %v111
    %v124 = vpack.c.b16 %v114, %v113
    %v125 = vpack.c.b16 %v116, %v115
    %v126 = vpack.c.b16 %v118, %v117
    %v151 = vunpack.c.l.b16 %v71
    %v152 = vunpack.c.l.b16 %v72
    %v153 = vunpack.c.l.b16 %v73
    %v154 = vunpack.c.l.b16 %v74
    %v155 = vunpack.c.l.b16 %v75
    %v156 = vunpack.c.l.b16 %v76
    %v157 = vunpack.c.l.b16 %v77
    %v158 = vunpack.c.l.b16 %v78
    %v159 = vunpack.c.l.b16 %v79
    %v160 = vunpack.c.l.b16 %v80
    %v161 = vunpack.c.l.b16 %v81
    %v162 = vunpack.c.l.b16 %v82
    %v163 = vunpack.c.l.b16 %v83
    %v164 = vunpack.c.l.b16 %v84
    %v165 = vunpack.c.l.b16 %v85
    %v166 = vunpack.c.l.b16 %v86
    %v167 = vpack.c.b16 %v152, %v151
    %v168 = vpack.c.b16 %v154, %v153
    %v169 = vpack.c.b16 %v156, %v155
    %v170 = vpack.c.b16 %v158, %v157
    %v171 = vpack.c.b16 %v160, %v159
    %v172 = vpack.c.b16 %v162, %v161
    %v173 = vpack.c.b16 %v164, %v163
    %v174 = vpack.c.b16 %v166, %v165
    %183 = vmatprep.subr.bf16.mxu0 0
    %184 = vmatpush1.bf16.msra.mxu0 %v167
    %185 = vmatprep.subr.bf16.mxu0 0
    %186 = vmatpush1.bf16.msra.mxu0 %v168
    %187 = vmatprep.subr.bf16.mxu0 0
    %188 = vmatpush1.bf16.msra.mxu0 %v169
    %189 = vmatprep.subr.bf16.mxu0 0
    %190 = vmatpush1.bf16.msra.mxu0 %v170
    %191 = vmatprep.subr.bf16.mxu0 0
    %192 = vmatpush1.bf16.msra.mxu0 %v171
    %193 = vmatprep.subr.bf16.mxu0 0
    %194 = vmatpush1.bf16.msra.mxu0 %v172
    %195 = vmatprep.subr.bf16.mxu0 0
    %196 = vmatpush1.bf16.msra.mxu0 %v173
    %197 = vmatprep.subr.bf16.mxu0 0
    %198 = vmatpush1.bf16.msra.mxu0 %v174
    %199 = vmatprep.subr.bf16.mxu0 0
    %200 = vmatpush1.bf16.msra.mxu0 0
    %201 = vmatprep.subr.bf16.mxu0 0
    %202 = vmatpush1.bf16.msra.mxu0 0
    %203 = vmatprep.subr.bf16.mxu0 0
    %204 = vmatpush1.bf16.msra.mxu0 0
    %205 = vmatprep.subr.bf16.mxu0 0
    %206 = vmatpush1.bf16.msra.mxu0 0
    %207 = vmatprep.subr.bf16.mxu0 0
    %208 = vmatpush1.bf16.msra.mxu0 0
    %209 = vmatprep.subr.bf16.mxu0 0
    %210 = vmatpush1.bf16.msra.mxu0 0
    %211 = vmatprep.subr.bf16.mxu0 0
    %212 = vmatpush1.bf16.msra.mxu0 0
    %213 = vmatprep.subr.bf16.mxu0 0
    %214 = vmatpush1.bf16.msra.mxu0 0
    %215 = vmatprep.mubr.bf16.mxu0 0
    %216 = vmatmul.mubr.bf16.gmra.mrb[0].mxu0 %v119
    %v217 = vpop.f32.mrb[0].mxu0
    %v218 = vadd.f32 0.0, %v217
    %v219 = vpop.f32.mrb[0].mxu0
    %v220 = vpop.f32.mrb[0].mxu0
    %v221 = vadd.f32 0.0, %v220
    %v222 = vpop.f32.mrb[0].mxu0
    %223 = vmatprep.mubr.bf16.mxu0 0
    %224 = vmatmul.mubr.bf16.gmra.mrb[0].mxu0 %v120
    %v225 = vpop.f32.mrb[0].mxu0
    %v226 = vadd.f32 0.0, %v225
    %v227 = vpop.f32.mrb[0].mxu0
    %v228 = vpop.f32.mrb[0].mxu0
    %v229 = vadd.f32 0.0, %v228
    %v230 = vpop.f32.mrb[0].mxu0
    %231 = vmatprep.mubr.bf16.mxu0 0
    %232 = vmatmul.mubr.bf16.gmra.mrb[0].mxu0 %v121
    %v233 = vpop.f32.mrb[0].mxu0
    %v234 = vadd.f32 0.0, %v233
    %v235 = vpop.f32.mrb[0].mxu0
    %v236 = vpop.f32.mrb[0].mxu0
    %v237 = vadd.f32 0.0, %v236
    %v238 = vpop.f32.mrb[0].mxu0
    %239 = vmatprep.mubr.bf16.mxu0 0
    %240 = vmatmul.mubr.bf16.gmra.mrb[0].mxu0 %v122
    %v241 = vpop.f32.mrb[0].mxu0
    %v242 = vadd.f32 0.0, %v241
    %v243 = vpop.f32.mrb[0].mxu0
    %v244 = vpop.f32.mrb[0].mxu0
    %v245 = vadd.f32 0.0, %v244
    %v246 = vpop.f32.mrb[0].mxu0
    %247 = vmatprep.mubr.bf16.mxu0 0
    %248 = vmatmul.mubr.bf16.gmra.mrb[0].mxu0 %v123
    %v249 = vpop.f32.mrb[0].mxu0
    %v250 = vadd.f32 0.0, %v249
    %v251 = vpop.f32.mrb[0].mxu0
    %v252 = vpop.f32.mrb[0].mxu0
    %v253 = vadd.f32 0.0, %v252
    %v254 = vpop.f32.mrb[0].mxu0
    %255 = vmatprep.mubr.bf16.mxu0 0
    %256 = vmatmul.mubr.bf16.gmra.mrb[0].mxu0 %v124
    %v257 = vpop.f32.mrb[0].mxu0
    %v258 = vadd.f32 0.0, %v257
    %v259 = vpop.f32.mrb[0].mxu0
    %v260 = vpop.f32.mrb[0].mxu0
    %v261 = vadd.f32 0.0, %v260
    %v262 = vpop.f32.mrb[0].mxu0
    %263 = vmatprep.mubr.bf16.mxu0 0
    %264 = vmatmul.mubr.bf16.gmra.mrb[0].mxu0 %v125
    %v265 = vpop.f32.mrb[0].mxu0
    %v266 = vadd.f32 0.0, %v265
    %v267 = vpop.f32.mrb[0].mxu0
    %v268 = vpop.f32.mrb[0].mxu0
    %v269 = vadd.f32 0.0, %v268
    %v270 = vpop.f32.mrb[0].mxu0
    %271 = vmatprep.mubr.bf16.mxu0 0
    %272 = vmatmul.mubr.bf16.gmra.mrb[0].mxu0 %v126
    %v273 = vpop.f32.mrb[0].mxu0
    %v274 = vadd.f32 0.0, %v273
    %v275 = vpop.f32.mrb[0].mxu0
    %v276 = vpop.f32.mrb[0].mxu0
    %v277 = vadd.f32 0.0, %v276
    %v278 = vpop.f32.mrb[0].mxu0
    %279 = vdwg.mxu0
    %v280 = vld [vmem:[#allocation4] sm:$0x1]
    %v282 = vlaneseq
    %v283 = vshrl.u32 %v282, 7
    %v284 = vsub.s32 0, %v283
    %v285 = vrot.slane %v280, %v284
    %v287 = vmul.f32 %v218, %v285
    %v288 = vmul.f32 %v221, %v285
    %v289 = vmul.f32 %v226, %v285
    %v290 = vmul.f32 %v229, %v285
    %v291 = vmul.f32 %v234, %v285
    %v292 = vmul.f32 %v237, %v285
    %v293 = vmul.f32 %v242, %v285
    %v294 = vmul.f32 %v245, %v285
    %v295 = vmul.f32 %v250, %v285
    %v296 = vmul.f32 %v253, %v285
    %v297 = vmul.f32 %v258, %v285
    %v298 = vmul.f32 %v261, %v285
    %v299 = vmul.f32 %v266, %v285
    %v300 = vmul.f32 %v269, %v285
    %v301 = vmul.f32 %v274, %v285
    %v302 = vmul.f32 %v277, %v285
    %v303 = vld [vmem:[#allocation6] sm:$0x1]
    %v305 = vlaneseq
    %v306 = vshrl.u32 %v305, 7
    %v307 = vsub.s32 0, %v306
    %v308 = vrot.slane %v303, %v307
    %v310 = vadd.f32 %v287, %v308
    %v311 = vadd.f32 %v288, %v308
    %v312 = vadd.f32 %v289, %v308
    %v313 = vadd.f32 %v290, %v308
    %v314 = vadd.f32 %v291, %v308
    %v315 = vadd.f32 %v292, %v308
    %v316 = vadd.f32 %v293, %v308
    %v317 = vadd.f32 %v294, %v308
    %v318 = vadd.f32 %v295, %v308
    %v319 = vadd.f32 %v296, %v308
    %v320 = vadd.f32 %v297, %v308
    %v321 = vadd.f32 %v298, %v308
    %v322 = vadd.f32 %v299, %v308
    %v323 = vadd.f32 %v300, %v308
    %v324 = vadd.f32 %v301, %v308
    %v325 = vadd.f32 %v302, %v308
    %v326 = vmax.f32 %v310, 0.0
    %v327 = vmax.f32 %v311, 0.0
    %v328 = vmax.f32 %v312, 0.0
    %v329 = vmax.f32 %v313, 0.0
    %v330 = vmax.f32 %v314, 0.0
    %v331 = vmax.f32 %v315, 0.0
    %v332 = vmax.f32 %v316, 0.0
    %v333 = vmax.f32 %v317, 0.0
    %v334 = vmax.f32 %v318, 0.0
    %v335 = vmax.f32 %v319, 0.0
    %v336 = vmax.f32 %v320, 0.0
    %v337 = vmax.f32 %v321, 0.0
    %v338 = vmax.f32 %v322, 0.0
    %v339 = vmax.f32 %v323, 0.0
    %v340 = vmax.f32 %v324, 0.0
    %v341 = vmax.f32 %v325, 0.0
    %v342 = vpack.c.bf16 %v327, %v326
    %v343 = vpack.c.bf16 %v329, %v328
    %v344 = vpack.c.bf16 %v331, %v330
    %v345 = vpack.c.bf16 %v333, %v332
    %v346 = vpack.c.bf16 %v335, %v334
    %v347 = vpack.c.bf16 %v337, %v336
    %v348 = vpack.c.bf16 %v339, %v338
    %v349 = vpack.c.bf16 %v341, %v340
    %v358 = vunpack.c.l.b16 %v342
    %v359 = vunpack.c.h.b16 %v342
    %v360 = vunpack.c.l.b16 %v343
    %v361 = vunpack.c.h.b16 %v343
    %v362 = vunpack.c.l.b16 %v344
    %v363 = vunpack.c.h.b16 %v344
    %v364 = vunpack.c.l.b16 %v345
    %v365 = vunpack.c.h.b16 %v345
    %v366 = vunpack.c.l.b16 %v346
    %v367 = vunpack.c.h.b16 %v346
    %v368 = vunpack.c.l.b16 %v347
    %v369 = vunpack.c.h.b16 %v347
    %v370 = vunpack.c.l.b16 %v348
    %v371 = vunpack.c.h.b16 %v348
    %v372 = vunpack.c.l.b16 %v349
    %v373 = vunpack.c.h.b16 %v349
    %v374 = vpack.c.b16 %v358, %v358
    %v375 = vpack.c.b16 %v359, %v359
    %v376 = vpack.c.b16 %v360, %v360
    %v377 = vpack.c.b16 %v361, %v361
    %v378 = vpack.c.b16 %v362, %v362
    %v379 = vpack.c.b16 %v363, %v363
    %v380 = vpack.c.b16 %v364, %v364
    %v381 = vpack.c.b16 %v365, %v365
    %v382 = vpack.c.b16 %v366, %v366
    %v383 = vpack.c.b16 %v367, %v367
    %v384 = vpack.c.b16 %v368, %v368
    %v385 = vpack.c.b16 %v369, %v369
    %v386 = vpack.c.b16 %v370, %v370
    %v387 = vpack.c.b16 %v371, %v371
    %v388 = vpack.c.b16 %v372, %v372
    %v389 = vpack.c.b16 %v373, %v373
    %406 = vst [vmem:[%s4] sm:$0xf] %v374
    %407 = vst [vmem:[%s4 + $0x4] sm:$0xf] %v375
    %408 = vst [vmem:[%s4 + $0x8] sm:$0xf] %v376
    %409 = vst [vmem:[%s4 + $0xc] sm:$0xf] %v377
    %410 = vst [vmem:[%s4 + $0x10] sm:$0xf] %v378
    %411 = vst [vmem:[%s4 + $0x14] sm:$0xf] %v379
    %412 = vst [vmem:[%s4 + $0x18] sm:$0xf] %v380
    %413 = vst [vmem:[%s4 + $0x1c] sm:$0xf] %v381
    %414 = vst [vmem:[%s4 + $0x20] sm:$0xf] %v382
    %415 = vst [vmem:[%s4 + $0x24] sm:$0xf] %v383
    %416 = vst [vmem:[%s4 + $0x28] sm:$0xf] %v384
    %417 = vst [vmem:[%s4 + $0x2c] sm:$0xf] %v385
    %418 = vst [vmem:[%s4 + $0x30] sm:$0xf] %v386
    %419 = vst [vmem:[%s4 + $0x34] sm:$0xf] %v387
    %420 = vst [vmem:[%s4 + $0x38] sm:$0xf] %v388
    %421 = vst [vmem:[%s4 + $0x3c] sm:$0xf] %v389
    // Predicated region
    $region30: #{bottleneck_forward.5} parent=1 // pred_check
      _
    $region31: #{bottleneck_forward.5} parent=1 // pred_check_branch
      %423 = sbr.rel (0) target = $region33
    $region32: #{bottleneck_forward.5} parent=1 // pred_region
      _
    $region33: #{bottleneck_forward.5} parent=1 // pred_fallthru
      _
    // Predicated region
    $region34: #{bottleneck_forward.5} parent=1 // pred_check
      _
    $region35: #{bottleneck_forward.5} parent=1 // pred_check_branch
      %425 = sbr.rel (0) target = $region37
    $region36: #{bottleneck_forward.5} parent=1 // pred_region
      _
    $region37: #{bottleneck_forward.5} parent=1 // pred_fallthru
      _
    %426 = vsyncpa [#allocation3], 1
    %427 = vsyncpa [#allocation5], 1

// kernel: bottleneck_forward.8
$region0: #{bottleneck_forward.8}
  #allocation0 [shape = 'u32[]', space=smem, size = 0x4, offset = 0x4, fixed_abs, tag = 'smem constant byte address 0x4 - core index']
  #allocation1 [shape = 'u32[144,128]{1,0:T(1,128)}', space=vmem, size = 0x12000, scoped, tag = 'internal scratch']
  %s0 = inlined_call_operand.vmem [shape: f32[2,128], index: 0, kind: input, shape index: {}]
  %s1 = inlined_call_operand.vmem [shape: f32[128,128], index: 1, kind: input, shape index: {}]
  %s2 = inlined_call_operand.vmem [shape: f32[1,128], index: 2, kind: input, shape index: {}]
  %s3 = inlined_call_operand.vmem [shape: f32[128,128], index: 3, kind: input, shape index: {}]
  %s4 = inlined_call_operand.vmem [shape: f32[1,128], index: 4, kind: input, shape index: {}]
  %s5 = inlined_call_operand.vmem [shape: f32[2,128], index: 5, kind: output, shape index: {}]
  %s6 = sld [smem:[#allocation0]]
  $region30: #{bottleneck_forward.8} parent=0
    _
  %s8 = ssub.s32 1, %s6
  %s9 = scalar_select 0, %s8, %s6
  // Predicated region
  $region2: #{bottleneck_forward.8} parent=0 // pred_check
    _
  $region3: #{bottleneck_forward.8} parent=0 // pred_check_branch
    %11 = sbr.rel (0) target = $region5
  $region4: #{bottleneck_forward.8} parent=0 // pred_region
    _
  $region5: #{bottleneck_forward.8} parent=0 // pred_fallthru
    _
  // Predicated region
  $region6: #{bottleneck_forward.8} parent=0 // pred_check
    _
  $region7: #{bottleneck_forward.8} parent=0 // pred_check_branch
    %13 = sbr.rel (0) target = $region9
  $region8: #{bottleneck_forward.8} parent=0 // pred_region
    _
  $region9: #{bottleneck_forward.8} parent=0 // pred_fallthru
    _
  // Predicated region
  $region10: #{bottleneck_forward.8} parent=0 // pred_check
    _
  $region11: #{bottleneck_forward.8} parent=0 // pred_check_branch
    %15 = sbr.rel (0) target = $region13
  $region12: #{bottleneck_forward.8} parent=0 // pred_region
    _
  $region13: #{bottleneck_forward.8} parent=0 // pred_fallthru
    _
  // Predicated region
  $region14: #{bottleneck_forward.8} parent=0 // pred_check
    _
  $region15: #{bottleneck_forward.8} parent=0 // pred_check_branch
    %17 = sbr.rel (0) target = $region17
  $region16: #{bottleneck_forward.8} parent=0 // pred_region
    _
  $region17: #{bottleneck_forward.8} parent=0 // pred_fallthru
    _
  // Predicated region
  $region18: #{bottleneck_forward.8} parent=0 // pred_check
    _
  $region19: #{bottleneck_forward.8} parent=0 // pred_check_branch
    %19 = sbr.rel (0) target = $region21
  $region20: #{bottleneck_forward.8} parent=0 // pred_region
    _
  $region21: #{bottleneck_forward.8} parent=0 // pred_fallthru
    _
  %v20 = vld [vmem:[%s0] sm:$0x3]
  %v21 = vld [vmem:[%s1] sm:$0xff]
  %v22 = vld [vmem:[%s1 + $0x8] sm:$0xff]
  %v23 = vld [vmem:[%s1 + $0x10] sm:$0xff]
  %v24 = vld [vmem:[%s1 + $0x18] sm:$0xff]
  %v25 = vld [vmem:[%s1 + $0x20] sm:$0xff]
  %v26 = vld [vmem:[%s1 + $0x28] sm:$0xff]
  %v27 = vld [vmem:[%s1 + $0x30] sm:$0xff]
  %v28 = vld [vmem:[%s1 + $0x38] sm:$0xff]
  %v29 = vld [vmem:[%s1 + $0x40] sm:$0xff]
  %v30 = vld [vmem:[%s1 + $0x48] sm:$0xff]
  %v31 = vld [vmem:[%s1 + $0x50] sm:$0xff]
  %v32 = vld [vmem:[%s1 + $0x58] sm:$0xff]
  %v33 = vld [vmem:[%s1 + $0x60] sm:$0xff]
  %v34 = vld [vmem:[%s1 + $0x68] sm:$0xff]
  %v35 = vld [vmem:[%s1 + $0x70] sm:$0xff]
  %v36 = vld [vmem:[%s1 + $0x78] sm:$0xff]
  %v37 = vld [vmem:[%s2] sm:$0x1]
  %v39 = vlaneseq
  %v40 = vshrl.u32 %v39, 7
  %v41 = vsub.s32 0, %v40
  %v42 = vrot.slane %v37, %v41
  %44 = vmatprep.subr.mxu0 0.0
  %45 = vmatpush1.msra.mxu0 %v21
  %46 = vmatprep.subr.mxu0 0.0
  %47 = vmatpush1.msra.mxu0 %v22
  %48 = vmatprep.subr.mxu0 0.0
  %49 = vmatpush1.msra.mxu0 %v23
  %50 = vmatprep.subr.mxu0 0.0
  %51 = vmatpush1.msra.mxu0 %v24
  %52 = vmatprep.subr.mxu0 0.0
  %53 = vmatpush1.msra.mxu0 %v25
  %54 = vmatprep.subr.mxu0 0.0
  %55 = vmatpush1.msra.mxu0 %v26
  %56 = vmatprep.subr.mxu0 0.0
  %57 = vmatpush1.msra.mxu0 %v27
  %58 = vmatprep.subr.mxu0 0.0
  %59 = vmatpush1.msra.mxu0 %v28
  %60 = vmatprep.subr.mxu0 0.0
  %61 = vmatpush1.msra.mxu0 %v29
  %62 = vmatprep.subr.mxu0 0.0
  %63 = vmatpush1.msra.mxu0 %v30
  %64 = vmatprep.subr.mxu0 0.0
  %65 = vmatpush1.msra.mxu0 %v31
  %66 = vmatprep.subr.mxu0 0.0
  %67 = vmatpush1.msra.mxu0 %v32
  %68 = vmatprep.subr.mxu0 0.0
  %69 = vmatpush1.msra.mxu0 %v33
  %70 = vmatprep.subr.mxu0 0.0
  %71 = vmatpush1.msra.mxu0 %v34
  %72 = vmatprep.subr.mxu0 0.0
  %73 = vmatpush1.msra.mxu0 %v35
  %74 = vmatprep.subr.mxu0 0.0
  %75 = vmatpush1.msra.mxu0 %v36
  %76 = vmatprep.subr.mxu0 0.0
  %77 = vmatpush1.msra.mxu0 0.0
  %78 = vmatprep.subr.mxu0 0.0
  %79 = vmatpush1.msra.mxu0 0.0
  %80 = vmatprep.subr.mxu0 0.0
  %81 = vmatpush1.msra.mxu0 0.0
  %82 = vmatprep.subr.mxu0 0.0
  %83 = vmatpush1.msra.mxu0 0.0
  %84 = vmatprep.subr.mxu0 0.0
  %85 = vmatpush1.msra.mxu0 0.0
  %86 = vmatprep.subr.mxu0 0.0
  %87 = vmatpush1.msra.mxu0 0.0
  %88 = vmatprep.subr.mxu0 0.0
  %89 = vmatpush1.msra.mxu0 0.0
  %90 = vmatprep.subr.mxu0 0.0
  %91 = vmatpush1.msra.mxu0 0.0
  %92 = vmatprep.subr.mxu0 0.0
  %93 = vmatpush1.msra.mxu0 0.0
  %94 = vmatprep.subr.mxu0 0.0
  %95 = vmatpush1.msra.mxu0 0.0
  %96 = vmatprep.subr.mxu0 0.0
  %97 = vmatpush1.msra.mxu0 0.0
  %98 = vmatprep.subr.mxu0 0.0
  %99 = vmatpush1.msra.mxu0 0.0
  %100 = vmatprep.subr.mxu0 0.0
  %101 = vmatpush1.msra.mxu0 0.0
  %102 = vmatprep.subr.mxu0 0.0
  %103 = vmatpush1.msra.mxu0 0.0
  %104 = vmatprep.subr.mxu0 0.0
  %105 = vmatpush1.msra.mxu0 0.0
  %106 = vmatprep.subr.mxu0 0.0
  %107 = vmatpush1.msra.mxu0 0.0
  %108 = vmatprep.mubr.f32.mxu0 0.0
  %109 = vmatmul.mubr.f32.gmra.mrb[0].mxu0 %v20
  %v110 = vpop.f32.mrb[0].mxu0
  %v111 = vadd.f32 %v42, %v110
  %v112 = vpop.f32.mrb[0].mxu0
  %113 = vdwg.mxu0
  %v114 = vmax.f32 %v111, 0.0
  %v115 = vld [vmem:[%s3] sm:$0xff]
  %v116 = vld [vmem:[%s3 + $0x8] sm:$0xff]
  %v117 = vld [vmem:[%s3 + $0x10] sm:$0xff]
  %v118 = vld [vmem:[%s3 + $0x18] sm:$0xff]
  %v119 = vld [vmem:[%s3 + $0x20] sm:$0xff]
  %v120 = vld [vmem:[%s3 + $0x28] sm:$0xff]
  %v121 = vld [vmem:[%s3 + $0x30] sm:$0xff]
  %v122 = vld [vmem:[%s3 + $0x38] sm:$0xff]
  %v123 = vld [vmem:[%s3 + $0x40] sm:$0xff]
  %v124 = vld [vmem:[%s3 + $0x48] sm:$0xff]
  %v125 = vld [vmem:[%s3 + $0x50] sm:$0xff]
  %v126 = vld [vmem:[%s3 + $0x58] sm:$0xff]
  %v127 = vld [vmem:[%s3 + $0x60] sm:$0xff]
  %v128 = vld [vmem:[%s3 + $0x68] sm:$0xff]
  %v129 = vld [vmem:[%s3 + $0x70] sm:$0xff]
  %v130 = vld [vmem:[%s3 + $0x78] sm:$0xff]
  %v131 = vld [vmem:[%s4] sm:$0x1]
  %v133 = vlaneseq
  %v134 = vshrl.u32 %v133, 7
  %v135 = vsub.s32 0, %v134
  %v136 = vrot.slane %v131, %v135
  %138 = vmatprep.subr.mxu0 0.0
  %139 = vmatpush1.msra.mxu0 %v115
  %140 = vmatprep.subr.mxu0 0.0
  %141 = vmatpush1.msra.mxu0 %v116
  %142 = vmatprep.subr.mxu0 0.0
  %143 = vmatpush1.msra.mxu0 %v117
  %144 = vmatprep.subr.mxu0 0.0
  %145 = vmatpush1.msra.mxu0 %v118
  %146 = vmatprep.subr.mxu0 0.0
  %147 = vmatpush1.msra.mxu0 %v119
  %148 = vmatprep.subr.mxu0 0.0
  %149 = vmatpush1.msra.mxu0 %v120
  %150 = vmatprep.subr.mxu0 0.0
  %151 = vmatpush1.msra.mxu0 %v121
  %152 = vmatprep.subr.mxu0 0.0
  %153 = vmatpush1.msra.mxu0 %v122
  %154 = vmatprep.subr.mxu0 0.0
  %155 = vmatpush1.msra.mxu0 %v123
  %156 = vmatprep.subr.mxu0 0.0
  %157 = vmatpush1.msra.mxu0 %v124
  %158 = vmatprep.subr.mxu0 0.0
  %159 = vmatpush1.msra.mxu0 %v125
  %160 = vmatprep.subr.mxu0 0.0
  %161 = vmatpush1.msra.mxu0 %v126
  %162 = vmatprep.subr.mxu0 0.0
  %163 = vmatpush1.msra.mxu0 %v127
  %164 = vmatprep.subr.mxu0 0.0
  %165 = vmatpush1.msra.mxu0 %v128
  %166 = vmatprep.subr.mxu0 0.0
  %167 = vmatpush1.msra.mxu0 %v129
  %168 = vmatprep.subr.mxu0 0.0
  %169 = vmatpush1.msra.mxu0 %v130
  %170 = vmatprep.subr.mxu0 0.0
  %171 = vmatpush1.msra.mxu0 0.0
  %172 = vmatprep.subr.mxu0 0.0
  %173 = vmatpush1.msra.mxu0 0.0
  %174 = vmatprep.subr.mxu0 0.0
  %175 = vmatpush1.msra.mxu0 0.0
  %176 = vmatprep.subr.mxu0 0.0
  %177 = vmatpush1.msra.mxu0 0.0
  %178 = vmatprep.subr.mxu0 0.0
  %179 = vmatpush1.msra.mxu0 0.0
  %180 = vmatprep.subr.mxu0 0.0
  %181 = vmatpush1.msra.mxu0 0.0
  %182 = vmatprep.subr.mxu0 0.0
  %183 = vmatpush1.msra.mxu0 0.0
  %184 = vmatprep.subr.mxu0 0.0
  %185 = vmatpush1.msra.mxu0 0.0
  %186 = vmatprep.subr.mxu0 0.0
  %187 = vmatpush1.msra.mxu0 0.0
  %188 = vmatprep.subr.mxu0 0.0
  %189 = vmatpush1.msra.mxu0 0.0
  %190 = vmatprep.subr.mxu0 0.0
  %191 = vmatpush1.msra.mxu0 0.0
  %192 = vmatprep.subr.mxu0 0.0
  %193 = vmatpush1.msra.mxu0 0.0
  %194 = vmatprep.subr.mxu0 0.0
  %195 = vmatpush1.msra.mxu0 0.0
  %196 = vmatprep.subr.mxu0 0.0
  %197 = vmatpush1.msra.mxu0 0.0
  %198 = vmatprep.subr.mxu0 0.0
  %199 = vmatpush1.msra.mxu0 0.0
  %200 = vmatprep.subr.mxu0 0.0
  %201 = vmatpush1.msra.mxu0 0.0
  %202 = vmatprep.mubr.f32.mxu0 0.0
  %203 = vmatmul.mubr.f32.gmra.mrb[0].mxu0 %v114
  %v204 = vpop.f32.mrb[0].mxu0
  %v205 = vadd.f32 %v136, %v204
  %v206 = vpop.f32.mrb[0].mxu0
  %207 = vdwg.mxu0
  %v208 = vxor.u32 %v205, 2147483648
  %v209 = vmul.f32 %v208, 1.442695
  %v210 = vpow.pop %v209
  %v211 = vadd.f32 %v210, 1.0
  %v212 = vrcp.pop %v211
  %v213 = vmul.f32 1.0, %v212
  %214 = vst [vmem:[%s5] sm:$0x3] %v213
  // Predicated region
  $region22: #{bottleneck_forward.8} parent=0 // pred_check
    _
  $region23: #{bottleneck_forward.8} parent=0 // pred_check_branch
    %216 = sbr.rel (0) target = $region25
  $region24: #{bottleneck_forward.8} parent=0 // pred_region
    _
  $region25: #{bottleneck_forward.8} parent=0 // pred_fallthru
    _
  // Predicated region
  $region26: #{bottleneck_forward.8} parent=0 // pred_check
    _
  $region27: #{bottleneck_forward.8} parent=0 // pred_check_branch
    %218 = sbr.rel (0) target = $region29
  $region28: #{bottleneck_forward.8} parent=0 // pred_region
    _
  $region29: #{bottleneck_forward.8} parent=0 // pred_fallthru
    _

// kernel: bottleneck_forward.7
$region0: #{bottleneck_forward.7}
  #allocation0 [shape = 'u32[]', space=smem, size = 0x4, offset = 0x4, fixed_abs, tag = 'smem constant byte address 0x4 - core index']
  #allocation1 [shape = 'u32[144,128]{1,0:T(1,128)}', space=vmem, size = 0x12000, scoped, tag = 'internal scratch']
  %s0 = inlined_call_operand.vmem [shape: bf16[2,64,128], index: 0, kind: input, shape index: {}]
  %s1 = inlined_call_operand.vmem [shape: bf16[128,128], index: 1, kind: input, shape index: {}]
  %s2 = inlined_call_operand.vmem [shape: f32[1,128], index: 2, kind: input, shape index: {}]
  %s3 = inlined_call_operand.vmem [shape: f32[1,128], index: 3, kind: input, shape index: {}]
  %s4 = inlined_call_operand.vmem [shape: bf16[2,64,128], index: 4, kind: output, shape index: {0}]
  %s5 = inlined_call_operand.vmem [shape: f32[2,1,128], index: 5, kind: output, shape index: {1}]
  %6 = xla_tuple %s4, %s5
  %s7 = sld [smem:[#allocation0]]
  $region61: #{bottleneck_forward.7} parent=0
    _
  %s9 = ssub.s32 1, %s7
  %s10 = scalar_select 0, %s9, %s7
  loop: start=0, step=1, limit=4
  $region2: #{bottleneck_forward.7} parent=0 // loop_pre_header
    _
  $region3: #{bottleneck_forward.7} parent=0 // loop_header
    %s12 = sphi 0, %s16
    %p13 = scmp.ge.s32.totalorder %s12, 4
    %s19 = sphi 0, %s31
    %s20 = sphi 0, %s27
    %s21 = sphi 0, %s19
    %s22 = sphi 0, %s20
    %s23 = sphi 0, %s21
    %s24 = sphi 0, %s22
    %s36 = sphi 0, %s38
    %s39 = sphi 0, %s36
    %s40 = sphi 0, %s39
    %s56 = sphi 0, %s40
    %s60 = sphi 0, %s60
    %s62 = sphi 0, %s60
    %s63 = sphi 0, %s62
    %s77 = sphi 0, %s63
    %s81 = sphi 0, %s81
    %s83 = sphi 0, %s81
    %s84 = sphi 0, %s83
    %s98 = sphi 0, %s84
    %s102 = sphi 0, %s102
    %s104 = sphi 0, %s102
    %s105 = sphi 0, %s104
    %s119 = sphi 0, %s105
    %s127 = sphi 0, %s129
    %s130 = sphi 0, %s127
    %s131 = sphi 0, %s130
    %s147 = sphi 0, %s131
    %s153 = sphi 0, %s155
    %s156 = sphi 0, %s153
    %s157 = sphi 0, %s156
    %s173 = sphi 0, %s157
  $region4: #{bottleneck_forward.7} parent=0 // loop_header_branch
    %15 = sbr.rel (%p13) target = $region8
  $region5: #{bottleneck_forward.7} parent=0 // loop_body
    %s17 = ssub.s32 %s12, 1
    %s18 = ssub.s32 %s12, 2
    %s25 = sadd.s32 1, %s20
    %p26 = scmp.ge.s32.totalorder %s25, 1
    %s27 = scalar_select %p26, 0, %s25
    %s28 = sadd.s32 1, %s19
    %s29 = scalar_select %p26, %s28, %s19
    %p30 = scmp.ge.s32.totalorder %s29, 2
    %s31 = scalar_select %p30, 0, %s29
    %s32 = ssub.s32 %s19, %s31
    %s33 = ssub.s32 %s20, %s27
    %s34 = sor.u32 %s32, %s33
    %p35 = scmp.eq.s32.totalorder %s34, 0
    %s37 = sadd.s32 %s36, 1
    %s38 = scalar_select %p35, %s36, %s37
    %p41 = pneg %p35
    %p42 = scmp.eq.s32.totalorder %s12, 1
    %p43 = por %p41, %p42
    %p44 = scmp.ne.s32.totalorder %s36, %s39
    %p45 = scmp.eq.s32.totalorder %s12, 0
    %p46 = por %p44, %p45
    %p47 = scmp.ne.s32.totalorder %s36, %s39
    %p48 = scmp.eq.s32.totalorder %s17, 1
    %p49 = por %p47, %p48
    %p50 = scmp.ne.s32.totalorder %s39, %s40
    %p51 = scmp.eq.s32.totalorder %s17, 0
    %p52 = por %p50, %p51
    %p53 = scmp.ne.s32.totalorder %s39, %s40
    %p54 = scmp.eq.s32.totalorder %s18, 1
    %p55 = por %p53, %p54
    %p57 = scmp.ne.s32.totalorder %s40, %s56
    %p58 = scmp.eq.s32.totalorder %s18, 0
    %p59 = por %p57, %p58
    %s61 = sadd.s32 %s60, 1
    %p64 = scmp.eq.s32.totalorder %s12, 1
    %p65 = scmp.ne.s32.totalorder %s60, %s62
    %p66 = scmp.eq.s32.totalorder %s12, 0
    %p67 = por %p65, %p66
    %p68 = scmp.ne.s32.totalorder %s60, %s62
    %p69 = scmp.eq.s32.totalorder %s17, 1
    %p70 = por %p68, %p69
    %p71 = scmp.ne.s32.totalorder %s62, %s63
    %p72 = scmp.eq.s32.totalorder %s17, 0
    %p73 = por %p71, %p72
    %p74 = scmp.ne.s32.totalorder %s62, %s63
    %p75 = scmp.eq.s32.totalorder %s18, 1
    %p76 = por %p74, %p75
    %p78 = scmp.ne.s32.totalorder %s63, %s77
    %p79 = scmp.eq.s32.totalorder %s18, 0
    %p80 = por %p78, %p79
    %s82 = sadd.s32 %s81, 1
    %p85 = scmp.eq.s32.totalorder %s12, 1
    %p86 = scmp.ne.s32.totalorder %s81, %s83
    %p87 = scmp.eq.s32.totalorder %s12, 0
    %p88 = por %p86, %p87
    %p89 = scmp.ne.s32.totalorder %s81, %s83
    %p90 = scmp.eq.s32.totalorder %s17, 1
    %p91 = por %p89, %p90
    %p92 = scmp.ne.s32.totalorder %s83, %s84
    %p93 = scmp.eq.s32.totalorder %s17, 0
    %p94 = por %p92, %p93
    %p95 = scmp.ne.s32.totalorder %s83, %s84
    %p96 = scmp.eq.s32.totalorder %s18, 1
    %p97 = por %p95, %p96
    %p99 = scmp.ne.s32.totalorder %s84, %s98
    %p100 = scmp.eq.s32.totalorder %s18, 0
    %p101 = por %p99, %p100
    %s103 = sadd.s32 %s102, 1
    %p106 = scmp.eq.s32.totalorder %s12, 1
    %p107 = scmp.ne.s32.totalorder %s102, %s104
    %p108 = scmp.eq.s32.totalorder %s12, 0
    %p109 = por %p107, %p108
    %p110 = scmp.ne.s32.totalorder %s102, %s104
    %p111 = scmp.eq.s32.totalorder %s17, 1
    %p112 = por %p110, %p111
    %p113 = scmp.ne.s32.totalorder %s104, %s105
    %p114 = scmp.eq.s32.totalorder %s17, 0
    %p115 = por %p113, %p114
    %p116 = scmp.ne.s32.totalorder %s104, %s105
    %p117 = scmp.eq.s32.totalorder %s18, 1
    %p118 = por %p116, %p117
    %p120 = scmp.ne.s32.totalorder %s105, %s119
    %p121 = scmp.eq.s32.totalorder %s18, 0
    %p122 = por %p120, %p121
    %s123 = ssub.s32 %s19, %s31
    %s124 = ssub.s32 %s20, %s27
    %s125 = sor.u32 %s123, %s124
    %p126 = scmp.eq.s32.totalorder %s125, 0
    %s128 = sadd.s32 %s127, 1
    %s129 = scalar_select %p126, %s127, %s128
    %p132 = pneg %p126
    %p133 = scmp.eq.s32.totalorder %s12, 1
    %p134 = por %p132, %p133
    %p135 = scmp.ne.s32.totalorder %s127, %s130
    %p136 = scmp.eq.s32.totalorder %s12, 0
    %p137 = por %p135, %p136
    %p138 = scmp.ne.s32.totalorder %s127, %s130
    %p139 = scmp.eq.s32.totalorder %s17, 1
    %p140 = por %p138, %p139
    %p141 = scmp.ne.s32.totalorder %s130, %s131
    %p142 = scmp.eq.s32.totalorder %s17, 0
    %p143 = por %p141, %p142
    %p144 = scmp.ne.s32.totalorder %s130, %s131
    %p145 = scmp.eq.s32.totalorder %s18, 1
    %p146 = por %p144, %p145
    %p148 = scmp.ne.s32.totalorder %s131, %s147
    %p149 = scmp.eq.s32.totalorder %s18, 0
    %p150 = por %p148, %p149
    %s151 = ssub.s32 %s19, %s31
    %p152 = scmp.eq.s32.totalorder %s151, 0
    %s154 = sadd.s32 %s153, 1
    %s155 = scalar_select %p152, %s153, %s154
    %p158 = pneg %p152
    %p159 = scmp.eq.s32.totalorder %s12, 1
    %p160 = por %p158, %p159
    %p161 = scmp.ne.s32.totalorder %s153, %s156
    %p162 = scmp.eq.s32.totalorder %s12, 0
    %p163 = por %p161, %p162
    %p164 = scmp.ne.s32.totalorder %s153, %s156
    %p165 = scmp.eq.s32.totalorder %s17, 1
    %p166 = por %p164, %p165
    %p167 = scmp.ne.s32.totalorder %s156, %s157
    %p168 = scmp.eq.s32.totalorder %s17, 0
    %p169 = por %p167, %p168
    %p170 = scmp.ne.s32.totalorder %s156, %s157
    %p171 = scmp.eq.s32.totalorder %s18, 1
    %p172 = por %p170, %p171
    %p174 = scmp.ne.s32.totalorder %s157, %s173
    %p175 = scmp.eq.s32.totalorder %s18, 0
    %p176 = por %p174, %p175
    %p177 = scmp.le.s32.totalorder 1, %s12
    %p178 = scmp.lt.s32.totalorder %s12, 3
    %p179 = pnand %p177, %p178
    %p180 = pneg %p179
    // Predicated region
    $region9: #{bottleneck_forward.7} parent=5 // pred_check
      _
    $region10: #{bottleneck_forward.7} parent=5 // pred_check_branch
      %182 = sbr.rel (%p179) target = $region12
    $region11: #{bottleneck_forward.7} parent=5 // pred_region
      %s183 = ssub.s32 %s12, 1
      // Predicated region
      $region13: #{bottleneck_forward.7} parent=11 // pred_check
        %p184 = pneg %p73
      $region14: #{bottleneck_forward.7} parent=11 // pred_check_branch
        %186 = sbr.rel (%p184) target = $region16
      $region15: #{bottleneck_forward.7} parent=11 // pred_region
        _
      $region16: #{bottleneck_forward.7} parent=11 // pred_fallthru
        _
      // Predicated region
      $region17: #{bottleneck_forward.7} parent=11 // pred_check
        %p187 = pneg %p94
      $region18: #{bottleneck_forward.7} parent=11 // pred_check_branch
        %189 = sbr.rel (%p187) target = $region20
      $region19: #{bottleneck_forward.7} parent=11 // pred_region
        _
      $region20: #{bottleneck_forward.7} parent=11 // pred_fallthru
        _
      // Predicated region
      $region21: #{bottleneck_forward.7} parent=11 // pred_check
        %p190 = pneg %p115
      $region22: #{bottleneck_forward.7} parent=11 // pred_check_branch
        %192 = sbr.rel (%p190) target = $region24
      $region23: #{bottleneck_forward.7} parent=11 // pred_region
        _
      $region24: #{bottleneck_forward.7} parent=11 // pred_fallthru
        _
    $region12: #{bottleneck_forward.7} parent=5 // pred_fallthru
      _
    %p193 = scmp.lt.s32.totalorder %s12, 2
    // Predicated region
    $region25: #{bottleneck_forward.7} parent=5 // pred_check
      %p194 = pneg %p193
    $region26: #{bottleneck_forward.7} parent=5 // pred_check_branch
      %196 = sbr.rel (%p194) target = $region28
    $region27: #{bottleneck_forward.7} parent=5 // pred_region
      // Predicated region
      $region29: #{bottleneck_forward.7} parent=27 // pred_check
        %p197 = pneg %p46
      $region30: #{bottleneck_forward.7} parent=27 // pred_check_branch
        %199 = sbr.rel (%p197) target = $region32
      $region31: #{bottleneck_forward.7} parent=27 // pred_region
        %s200 = smul.u32 8, %s20
        %p201 = scmp.lt.s32.totalorder %s19, 1
        %s202 = scalar_select %p201, %s19, 1
        %p203 = scmp.lt.s32.totalorder %s200, 7
        %s204 = scalar_select %p203, %s200, 7
        %s205 = smul.addr %s202, 8
        %s206 = sadd.s32 %s204, %s205
        %s207 = smul.addr %s206, 4
        %s208 = scalar_lea.vmem %s0, %s207
        %s209 = smul.u32 8, %s20
      $region32: #{bottleneck_forward.7} parent=27 // pred_fallthru
        _
    $region28: #{bottleneck_forward.7} parent=5 // pred_fallthru
      _
    %p210 = scmp.le.s32.totalorder 1, %s12
    %p211 = scmp.lt.s32.totalorder %s12, 3
    %p212 = pnand %p210, %p211
    %p213 = pneg %p212
    // Predicated region
    $region33: #{bottleneck_forward.7} parent=5 // pred_check
      _
    $region34: #{bottleneck_forward.7} parent=5 // pred_check_branch
      %215 = sbr.rel (%p212) target = $region36
    $region35: #{bottleneck_forward.7} parent=5 // pred_region
      %s216 = ssub.s32 %s12, 1
      %s217 = smul.u32 8, %s22
      %p218 = scmp.lt.s32.totalorder %s21, 1
      %s219 = scalar_select %p218, %s21, 1
      %p220 = scmp.lt.s32.totalorder %s217, 7
      %s221 = scalar_select %p220, %s217, 7
      %s222 = smul.addr %s219, 8
      %s223 = sadd.s32 %s221, %s222
      %s224 = smul.addr %s223, 4
      %s225 = scalar_lea.vmem %s0, %s224
      %p226 = pneg %p52
      %p227 = pneg %p49
      %p228 = pneg %p73
      %p229 = pneg %p70
      %p230 = pneg %p94
      %p231 = pneg %p91
      %p232 = pneg %p115
      %p233 = pneg %p112
      %p234 = pneg %p143
      %p235 = pneg %p140
      %s236 = smul.u32 8, %s22
      %p237 = scmp.lt.s32.totalorder %s21, 1
      %s238 = scalar_select %p237, %s21, 1
      %p239 = scmp.lt.s32.totalorder %s236, 7
      %s240 = scalar_select %p239, %s236, 7
      %s241 = smul.addr %s238, 8
      %s242 = sadd.s32 %s240, %s241
      %s243 = smul.addr %s242, 4
      %s244 = scalar_lea.vmem %s4, %s243
      %p245 = pneg %p169
      %p246 = pneg %p166
      %p247 = scmp.lt.s32.totalorder %s21, 1
      %s248 = scalar_select %p247, %s21, 1
      %s249 = scalar_lea.vmem %s5, %s248
      %s250 = smul.u32 8, %s22
      %p251 = scmp.lt.s32.totalorder %s21, 1
      %s252 = scalar_select %p251, %s21, 1
      %p253 = scmp.lt.s32.totalorder %s250, 7
      %s254 = scalar_select %p253, %s250, 7
      %s255 = smul.addr %s252, 8
      %s256 = sadd.s32 %s254, %s255
      %s257 = smul.addr %s256, 4
      %s258 = scalar_lea.vmem %s0, %s257
      %s259 = smul.u32 8, %s22
      %s260 = smul.u32 8, %s22
      %p261 = scmp.lt.s32.totalorder %s21, 1
      %s262 = scalar_select %p261, %s21, 1
      %p263 = scmp.lt.s32.totalorder %s260, 7
      %s264 = scalar_select %p263, %s260, 7
      %s265 = smul.addr %s262, 8
      %s266 = sadd.s32 %s264, %s265
      %s267 = smul.addr %s266, 4
      %s268 = scalar_lea.vmem %s4, %s267
      %s269 = smul.u32 8, %s22
      %p270 = scmp.lt.s32.totalorder %s21, 1
      %s271 = scalar_select %p270, %s21, 1
      %s272 = scalar_lea.vmem %s5, %s271
      %v274 = vld [vmem:[%s258] sm:$0xf]
      %v275 = vld [vmem:[%s258 + $0x4] sm:$0xf]
      %v276 = vld [vmem:[%s258 + $0x8] sm:$0xf]
      %v277 = vld [vmem:[%s258 + $0xc] sm:$0xf]
      %v278 = vld [vmem:[%s258 + $0x10] sm:$0xf]
      %v279 = vld [vmem:[%s258 + $0x14] sm:$0xf]
      %v280 = vld [vmem:[%s258 + $0x18] sm:$0xf]
      %v281 = vld [vmem:[%s258 + $0x1c] sm:$0xf]
      %v282 = vld [vmem:[%s1] sm:$0xf]
      %v283 = vld [vmem:[%s1 + $0x4] sm:$0xf]
      %v284 = vld [vmem:[%s1 + $0x8] sm:$0xf]
      %v285 = vld [vmem:[%s1 + $0xc] sm:$0xf]
      %v286 = vld [vmem:[%s1 + $0x10] sm:$0xf]
      %v287 = vld [vmem:[%s1 + $0x14] sm:$0xf]
      %v288 = vld [vmem:[%s1 + $0x18] sm:$0xf]
      %v289 = vld [vmem:[%s1 + $0x1c] sm:$0xf]
      %v290 = vld [vmem:[%s1 + $0x20] sm:$0xf]
      %v291 = vld [vmem:[%s1 + $0x24] sm:$0xf]
      %v292 = vld [vmem:[%s1 + $0x28] sm:$0xf]
      %v293 = vld [vmem:[%s1 + $0x2c] sm:$0xf]
      %v294 = vld [vmem:[%s1 + $0x30] sm:$0xf]
      %v295 = vld [vmem:[%s1 + $0x34] sm:$0xf]
      %v296 = vld [vmem:[%s1 + $0x38] sm:$0xf]
      %v297 = vld [vmem:[%s1 + $0x3c] sm:$0xf]
      %v306 = vunpack.c.l.b16 %v274
      %v307 = vunpack.c.l.b16 %v275
      %v308 = vunpack.c.l.b16 %v276
      %v309 = vunpack.c.l.b16 %v277
      %v310 = vunpack.c.l.b16 %v278
      %v311 = vunpack.c.l.b16 %v279
      %v312 = vunpack.c.l.b16 %v280
      %v313 = vunpack.c.l.b16 %v281
      %v314 = vpack.c.b16 %v307, %v306
      %v315 = vpack.c.b16 %v309, %v308
      %v316 = vpack.c.b16 %v311, %v310
      %v317 = vpack.c.b16 %v313, %v312
      %v338 = vunpack.c.l.b16 %v282
      %v339 = vunpack.c.l.b16 %v283
      %v340 = vunpack.c.l.b16 %v284
      %v341 = vunpack.c.l.b16 %v285
      %v342 = vunpack.c.l.b16 %v286
      %v343 = vunpack.c.l.b16 %v287
      %v344 = vunpack.c.l.b16 %v288
      %v345 = vunpack.c.l.b16 %v289
      %v346 = vunpack.c.l.b16 %v290
      %v347 = vunpack.c.l.b16 %v291
      %v348 = vunpack.c.l.b16 %v292
      %v349 = vunpack.c.l.b16 %v293
      %v350 = vunpack.c.l.b16 %v294
      %v351 = vunpack.c.l.b16 %v295
      %v352 = vunpack.c.l.b16 %v296
      %v353 = vunpack.c.l.b16 %v297
      %v354 = vpack.c.b16 %v339, %v338
      %v355 = vpack.c.b16 %v341, %v340
      %v356 = vpack.c.b16 %v343, %v342
      %v357 = vpack.c.b16 %v345, %v344
      %v358 = vpack.c.b16 %v347, %v346
      %v359 = vpack.c.b16 %v349, %v348
      %v360 = vpack.c.b16 %v351, %v350
      %v361 = vpack.c.b16 %v353, %v352
      %370 = vmatprep.subr.bf16.mxu0 0
      %371 = vmatpush1.bf16.msra.mxu0 %v354
      %372 = vmatprep.subr.bf16.mxu0 0
      %373 = vmatpush1.bf16.msra.mxu0 %v355
      %374 = vmatprep.subr.bf16.mxu0 0
      %375 = vmatpush1.bf16.msra.mxu0 %v356
      %376 = vmatprep.subr.bf16.mxu0 0
      %377 = vmatpush1.bf16.msra.mxu0 %v357
      %378 = vmatprep.subr.bf16.mxu0 0
      %379 = vmatpush1.bf16.msra.mxu0 %v358
      %380 = vmatprep.subr.bf16.mxu0 0
      %381 = vmatpush1.bf16.msra.mxu0 %v359
      %382 = vmatprep.subr.bf16.mxu0 0
      %383 = vmatpush1.bf16.msra.mxu0 %v360
      %384 = vmatprep.subr.bf16.mxu0 0
      %385 = vmatpush1.bf16.msra.mxu0 %v361
      %386 = vmatprep.subr.bf16.mxu0 0
      %387 = vmatpush1.bf16.msra.mxu0 0
      %388 = vmatprep.subr.bf16.mxu0 0
      %389 = vmatpush1.bf16.msra.mxu0 0
      %390 = vmatprep.subr.bf16.mxu0 0
      %391 = vmatpush1.bf16.msra.mxu0 0
      %392 = vmatprep.subr.bf16.mxu0 0
      %393 = vmatpush1.bf16.msra.mxu0 0
      %394 = vmatprep.subr.bf16.mxu0 0
      %395 = vmatpush1.bf16.msra.mxu0 0
      %396 = vmatprep.subr.bf16.mxu0 0
      %397 = vmatpush1.bf16.msra.mxu0 0
      %398 = vmatprep.subr.bf16.mxu0 0
      %399 = vmatpush1.bf16.msra.mxu0 0
      %400 = vmatprep.subr.bf16.mxu0 0
      %401 = vmatpush1.bf16.msra.mxu0 0
      %402 = vmatprep.mubr.bf16.mxu0 0
      %403 = vmatmul.mubr.bf16.gmra.mrb[0].mxu0 %v314
      %v404 = vpop.f32.mrb[0].mxu0
      %v405 = vadd.f32 0.0, %v404
      %v406 = vpop.f32.mrb[0].mxu0
      %v407 = vpop.f32.mrb[0].mxu0
      %v408 = vadd.f32 0.0, %v407
      %v409 = vpop.f32.mrb[0].mxu0
      %410 = vmatprep.mubr.bf16.mxu0 0
      %411 = vmatmul.mubr.bf16.gmra.mrb[0].mxu0 %v315
      %v412 = vpop.f32.mrb[0].mxu0
      %v413 = vadd.f32 0.0, %v412
      %v414 = vpop.f32.mrb[0].mxu0
      %v415 = vpop.f32.mrb[0].mxu0
      %v416 = vadd.f32 0.0, %v415
      %v417 = vpop.f32.mrb[0].mxu0
      %418 = vmatprep.mubr.bf16.mxu0 0
      %419 = vmatmul.mubr.bf16.gmra.mrb[0].mxu0 %v316
      %v420 = vpop.f32.mrb[0].mxu0
      %v421 = vadd.f32 0.0, %v420
      %v422 = vpop.f32.mrb[0].mxu0
      %v423 = vpop.f32.mrb[0].mxu0
      %v424 = vadd.f32 0.0, %v423
      %v425 = vpop.f32.mrb[0].mxu0
      %426 = vmatprep.mubr.bf16.mxu0 0
      %427 = vmatmul.mubr.bf16.gmra.mrb[0].mxu0 %v317
      %v428 = vpop.f32.mrb[0].mxu0
      %v429 = vadd.f32 0.0, %v428
      %v430 = vpop.f32.mrb[0].mxu0
      %v431 = vpop.f32.mrb[0].mxu0
      %v432 = vadd.f32 0.0, %v431
      %v433 = vpop.f32.mrb[0].mxu0
      %434 = vdwg.mxu0
      %v435 = vld [vmem:[%s2] sm:$0x1]
      %v437 = vlaneseq
      %v438 = vshrl.u32 %v437, 7
      %v439 = vsub.s32 0, %v438
      %v440 = vrot.slane %v435, %v439
      %v442 = vmul.f32 %v405, %v440
      %v443 = vmul.f32 %v408, %v440
      %v444 = vmul.f32 %v413, %v440
      %v445 = vmul.f32 %v416, %v440
      %v446 = vmul.f32 %v421, %v440
      %v447 = vmul.f32 %v424, %v440
      %v448 = vmul.f32 %v429, %v440
      %v449 = vmul.f32 %v432, %v440
      %v450 = vld [vmem:[%s3] sm:$0x1]
      %v452 = vlaneseq
      %v453 = vshrl.u32 %v452, 7
      %v454 = vsub.s32 0, %v453
      %v455 = vrot.slane %v450, %v454
      %v457 = vadd.f32 %v442, %v455
      %v458 = vadd.f32 %v443, %v455
      %v459 = vadd.f32 %v444, %v455
      %v460 = vadd.f32 %v445, %v455
      %v461 = vadd.f32 %v446, %v455
      %v462 = vadd.f32 %v447, %v455
      %v463 = vadd.f32 %v448, %v455
      %v464 = vadd.f32 %v449, %v455
      %v465 = vpack.c.bf16 %v458, %v457
      %v466 = vpack.c.bf16 %v460, %v459
      %v467 = vpack.c.bf16 %v462, %v461
      %v468 = vpack.c.bf16 %v464, %v463
      %v473 = vunpack.c.l.b16 %v465
      %v474 = vunpack.c.h.b16 %v465
      %v475 = vunpack.c.l.b16 %v466
      %v476 = vunpack.c.h.b16 %v466
      %v477 = vunpack.c.l.b16 %v467
      %v478 = vunpack.c.h.b16 %v467
      %v479 = vunpack.c.l.b16 %v468
      %v480 = vunpack.c.h.b16 %v468
      %v481 = vpack.c.b16 %v473, %v473
      %v482 = vpack.c.b16 %v474, %v474
      %v483 = vpack.c.b16 %v475, %v475
      %v484 = vpack.c.b16 %v476, %v476
      %v485 = vpack.c.b16 %v477, %v477
      %v486 = vpack.c.b16 %v478, %v478
      %v487 = vpack.c.b16 %v479, %v479
      %v488 = vpack.c.b16 %v480, %v480
      %497 = vst [vmem:[%s268] sm:$0xf] %v481
      %498 = vst [vmem:[%s268 + $0x4] sm:$0xf] %v482
      %499 = vst [vmem:[%s268 + $0x8] sm:$0xf] %v483
      %500 = vst [vmem:[%s268 + $0xc] sm:$0xf] %v484
      %501 = vst [vmem:[%s268 + $0x10] sm:$0xf] %v485
      %502 = vst [vmem:[%s268 + $0x14] sm:$0xf] %v486
      %503 = vst [vmem:[%s268 + $0x18] sm:$0xf] %v487
      %504 = vst [vmem:[%s268 + $0x1c] sm:$0xf] %v488
      %p505 = scmp.eq.s32.totalorder %s22, 0
      // Predicated region
      $region37: #{bottleneck_forward.7} parent=35 // pred_check
        %p506 = pneg %p505
      $region38: #{bottleneck_forward.7} parent=35 // pred_check_branch
        %508 = sbr.rel (%p506) target = $region40
      $region39: #{bottleneck_forward.7} parent=35 // pred_region
        %509 = vst [vmem:[%s272] sm:$0x1] 0.0
      $region40: #{bottleneck_forward.7} parent=35 // pred_fallthru
        _
      %v510 = vld [vmem:[%s272] sm:$0x1]
      %v511 = vadd.f32 %v457, %v458
      %v512 = vadd.f32 %v511, %v459
      %v513 = vadd.f32 %v512, %v460
      %v514 = vadd.f32 %v513, %v461
      %v515 = vadd.f32 %v514, %v462
      %v516 = vadd.f32 %v515, %v463
      %v517 = vadd.f32 %v516, %v464
      %v518 = vrot.slane %v517, 4
      %v519 = vadd.f32 %v517, %v518
      %v520 = vrot.slane %v519, 2
      %v521 = vadd.f32 %v519, %v520
      %v522 = vrot.slane %v521, 1
      %v523 = vadd.f32 %v521, %v522
      %v524 = vmul.f32 %v523, 0.015625
      %v525 = vadd.f32 %v510, %v524
      %526 = vst [vmem:[%s272] sm:$0x1] %v525
      %s527 = smul.u32 8, %s22
      %p528 = scmp.lt.s32.totalorder %s21, 1
      %s529 = scalar_select %p528, %s21, 1
      %p530 = scmp.lt.s32.totalorder %s527, 7
      %s531 = scalar_select %p530, %s527, 7
      %s532 = smul.addr %s529, 8
      %s533 = sadd.s32 %s531, %s532
      %s534 = smul.addr %s533, 4
      %s535 = scalar_lea.vmem %s4, %s534
      %p536 = scmp.lt.s32.totalorder %s21, 1
      %s537 = scalar_select %p536, %s21, 1
      %s538 = scalar_lea.vmem %s5, %s537
      // Predicated region
      $region41: #{bottleneck_forward.7} parent=35 // pred_check
        %p539 = pneg %p140
      $region42: #{bottleneck_forward.7} parent=35 // pred_check_branch
        %541 = sbr.rel (%p539) target = $region44
      $region43: #{bottleneck_forward.7} parent=35 // pred_region
        %s542 = smul.u32 8, %s22
      $region44: #{bottleneck_forward.7} parent=35 // pred_fallthru
        _
      // Predicated region
      $region45: #{bottleneck_forward.7} parent=35 // pred_check
        %p543 = pneg %p166
      $region46: #{bottleneck_forward.7} parent=35 // pred_check_branch
        %545 = sbr.rel (%p543) target = $region48
      $region47: #{bottleneck_forward.7} parent=35 // pred_region
        _
      $region48: #{bottleneck_forward.7} parent=35 // pred_fallthru
        _
    $region36: #{bottleneck_forward.7} parent=5 // pred_fallthru
      _
    %p546 = scmp.le.s32.totalorder 2, %s12
    // Predicated region
    $region49: #{bottleneck_forward.7} parent=5 // pred_check
      %p547 = pneg %p546
    $region50: #{bottleneck_forward.7} parent=5 // pred_check_branch
      %549 = sbr.rel (%p547) target = $region52
    $region51: #{bottleneck_forward.7} parent=5 // pred_region
      %s550 = ssub.s32 %s12, 2
      // Predicated region
      $region53: #{bottleneck_forward.7} parent=51 // pred_check
        %p551 = pneg %p146
      $region54: #{bottleneck_forward.7} parent=51 // pred_check_branch
        %553 = sbr.rel (%p551) target = $region56
      $region55: #{bottleneck_forward.7} parent=51 // pred_region
        %s554 = smul.u32 8, %s24
        %p555 = scmp.lt.s32.totalorder %s23, 1
        %s556 = scalar_select %p555, %s23, 1
        %p557 = scmp.lt.s32.totalorder %s554, 7
        %s558 = scalar_select %p557, %s554, 7
        %s559 = smul.addr %s556, 8
        %s560 = sadd.s32 %s558, %s559
        %s561 = smul.addr %s560, 4
        %s562 = scalar_lea.vmem %s4, %s561
      $region56: #{bottleneck_forward.7} parent=51 // pred_fallthru
        _
      // Predicated region
      $region57: #{bottleneck_forward.7} parent=51 // pred_check
        %p563 = pneg %p172
      $region58: #{bottleneck_forward.7} parent=51 // pred_check_branch
        %565 = sbr.rel (%p563) target = $region60
      $region59: #{bottleneck_forward.7} parent=51 // pred_region
        %p566 = scmp.lt.s32.totalorder %s23, 1
        %s567 = scalar_select %p566, %s23, 1
        %s568 = scalar_lea.vmem %s5, %s567
      $region60: #{bottleneck_forward.7} parent=51 // pred_fallthru
        _
    $region52: #{bottleneck_forward.7} parent=5 // pred_fallthru
      _
  $region6: #{bottleneck_forward.7} parent=0 // loop_footer
    %s16 = sadd.s32 1, %s12
  $region7: #{bottleneck_forward.7} parent=0 // loop_footer_branch
    %11 = sbr.rel target = $region3
  $region8: #{bottleneck_forward.7} parent=0 // loop_exit
    _

// kernel: bottleneck_forward.9
$region0: #{bottleneck_forward.9}
  #allocation0 [shape = 'u32[]', space=smem, size = 0x4, offset = 0x4, fixed_abs, tag = 'smem constant byte address 0x4 - core index']
  #allocation1 [shape = 'u32[144,128]{1,0:T(1,128)}', space=vmem, size = 0x12000, scoped, tag = 'internal scratch']
  %s0 = inlined_call_operand.vmem [shape: bf16[2,64,128], index: 0, kind: input, shape index: {}]
  %s1 = inlined_call_operand.vmem [shape: bf16[2,64,128], index: 1, kind: input, shape index: {}]
  %s2 = inlined_call_operand.vmem [shape: f32[2,1,128], index: 2, kind: input, shape index: {}]
  %s3 = inlined_call_operand.vmem [shape: bf16[2,64,128], index: 3, kind: output, shape index: {}]
  %s4 = sld [smem:[#allocation0]]
  $region45: #{bottleneck_forward.9} parent=0
    _
  %s6 = ssub.s32 1, %s4
  %s7 = scalar_select 0, %s6, %s4
  loop: start=0, step=1, limit=4
  $region2: #{bottleneck_forward.9} parent=0 // loop_pre_header
    _
  $region3: #{bottleneck_forward.9} parent=0 // loop_header
    %s9 = sphi 0, %s13
    %p10 = scmp.ge.s32.totalorder %s9, 4
    %s16 = sphi 0, %s28
    %s17 = sphi 0, %s24
    %s18 = sphi 0, %s16
    %s19 = sphi 0, %s17
    %s20 = sphi 0, %s18
    %s21 = sphi 0, %s19
    %s33 = sphi 0, %s35
    %s36 = sphi 0, %s33
    %s37 = sphi 0, %s36
    %s53 = sphi 0, %s37
    %s61 = sphi 0, %s63
    %s64 = sphi 0, %s61
    %s65 = sphi 0, %s64
    %s81 = sphi 0, %s65
    %s87 = sphi 0, %s89
    %s90 = sphi 0, %s87
    %s91 = sphi 0, %s90
    %s107 = sphi 0, %s91
    %s115 = sphi 0, %s117
    %s118 = sphi 0, %s115
    %s119 = sphi 0, %s118
    %s135 = sphi 0, %s119
  $region4: #{bottleneck_forward.9} parent=0 // loop_header_branch
    %12 = sbr.rel (%p10) target = $region8
  $region5: #{bottleneck_forward.9} parent=0 // loop_body
    %s14 = ssub.s32 %s9, 1
    %s15 = ssub.s32 %s9, 2
    %s22 = sadd.s32 1, %s17
    %p23 = scmp.ge.s32.totalorder %s22, 1
    %s24 = scalar_select %p23, 0, %s22
    %s25 = sadd.s32 1, %s16
    %s26 = scalar_select %p23, %s25, %s16
    %p27 = scmp.ge.s32.totalorder %s26, 2
    %s28 = scalar_select %p27, 0, %s26
    %s29 = ssub.s32 %s16, %s28
    %s30 = ssub.s32 %s17, %s24
    %s31 = sor.u32 %s29, %s30
    %p32 = scmp.eq.s32.totalorder %s31, 0
    %s34 = sadd.s32 %s33, 1
    %s35 = scalar_select %p32, %s33, %s34
    %p38 = pneg %p32
    %p39 = scmp.eq.s32.totalorder %s9, 1
    %p40 = por %p38, %p39
    %p41 = scmp.ne.s32.totalorder %s33, %s36
    %p42 = scmp.eq.s32.totalorder %s9, 0
    %p43 = por %p41, %p42
    %p44 = scmp.ne.s32.totalorder %s33, %s36
    %p45 = scmp.eq.s32.totalorder %s14, 1
    %p46 = por %p44, %p45
    %p47 = scmp.ne.s32.totalorder %s36, %s37
    %p48 = scmp.eq.s32.totalorder %s14, 0
    %p49 = por %p47, %p48
    %p50 = scmp.ne.s32.totalorder %s36, %s37
    %p51 = scmp.eq.s32.totalorder %s15, 1
    %p52 = por %p50, %p51
    %p54 = scmp.ne.s32.totalorder %s37, %s53
    %p55 = scmp.eq.s32.totalorder %s15, 0
    %p56 = por %p54, %p55
    %s57 = ssub.s32 %s16, %s28
    %s58 = ssub.s32 %s17, %s24
    %s59 = sor.u32 %s57, %s58
    %p60 = scmp.eq.s32.totalorder %s59, 0
    %s62 = sadd.s32 %s61, 1
    %s63 = scalar_select %p60, %s61, %s62
    %p66 = pneg %p60
    %p67 = scmp.eq.s32.totalorder %s9, 1
    %p68 = por %p66, %p67
    %p69 = scmp.ne.s32.totalorder %s61, %s64
    %p70 = scmp.eq.s32.totalorder %s9, 0
    %p71 = por %p69, %p70
    %p72 = scmp.ne.s32.totalorder %s61, %s64
    %p73 = scmp.eq.s32.totalorder %s14, 1
    %p74 = por %p72, %p73
    %p75 = scmp.ne.s32.totalorder %s64, %s65
    %p76 = scmp.eq.s32.totalorder %s14, 0
    %p77 = por %p75, %p76
    %p78 = scmp.ne.s32.totalorder %s64, %s65
    %p79 = scmp.eq.s32.totalorder %s15, 1
    %p80 = por %p78, %p79
    %p82 = scmp.ne.s32.totalorder %s65, %s81
    %p83 = scmp.eq.s32.totalorder %s15, 0
    %p84 = por %p82, %p83
    %s85 = ssub.s32 %s16, %s28
    %p86 = scmp.eq.s32.totalorder %s85, 0
    %s88 = sadd.s32 %s87, 1
    %s89 = scalar_select %p86, %s87, %s88
    %p92 = pneg %p86
    %p93 = scmp.eq.s32.totalorder %s9, 1
    %p94 = por %p92, %p93
    %p95 = scmp.ne.s32.totalorder %s87, %s90
    %p96 = scmp.eq.s32.totalorder %s9, 0
    %p97 = por %p95, %p96
    %p98 = scmp.ne.s32.totalorder %s87, %s90
    %p99 = scmp.eq.s32.totalorder %s14, 1
    %p100 = por %p98, %p99
    %p101 = scmp.ne.s32.totalorder %s90, %s91
    %p102 = scmp.eq.s32.totalorder %s14, 0
    %p103 = por %p101, %p102
    %p104 = scmp.ne.s32.totalorder %s90, %s91
    %p105 = scmp.eq.s32.totalorder %s15, 1
    %p106 = por %p104, %p105
    %p108 = scmp.ne.s32.totalorder %s91, %s107
    %p109 = scmp.eq.s32.totalorder %s15, 0
    %p110 = por %p108, %p109
    %s111 = ssub.s32 %s16, %s28
    %s112 = ssub.s32 %s17, %s24
    %s113 = sor.u32 %s111, %s112
    %p114 = scmp.eq.s32.totalorder %s113, 0
    %s116 = sadd.s32 %s115, 1
    %s117 = scalar_select %p114, %s115, %s116
    %p120 = pneg %p114
    %p121 = scmp.eq.s32.totalorder %s9, 1
    %p122 = por %p120, %p121
    %p123 = scmp.ne.s32.totalorder %s115, %s118
    %p124 = scmp.eq.s32.totalorder %s9, 0
    %p125 = por %p123, %p124
    %p126 = scmp.ne.s32.totalorder %s115, %s118
    %p127 = scmp.eq.s32.totalorder %s14, 1
    %p128 = por %p126, %p127
    %p129 = scmp.ne.s32.totalorder %s118, %s119
    %p130 = scmp.eq.s32.totalorder %s14, 0
    %p131 = por %p129, %p130
    %p132 = scmp.ne.s32.totalorder %s118, %s119
    %p133 = scmp.eq.s32.totalorder %s15, 1
    %p134 = por %p132, %p133
    %p136 = scmp.ne.s32.totalorder %s119, %s135
    %p137 = scmp.eq.s32.totalorder %s15, 0
    %p138 = por %p136, %p137
    %p139 = scmp.le.s32.totalorder 1, %s9
    %p140 = scmp.lt.s32.totalorder %s9, 3
    %p141 = pnand %p139, %p140
    %p142 = pneg %p141
    // Predicated region
    $region9: #{bottleneck_forward.9} parent=5 // pred_check
      _
    $region10: #{bottleneck_forward.9} parent=5 // pred_check_branch
      %144 = sbr.rel (%p141) target = $region12
    $region11: #{bottleneck_forward.9} parent=5 // pred_region
      %s145 = ssub.s32 %s9, 1
    $region12: #{bottleneck_forward.9} parent=5 // pred_fallthru
      _
    %p146 = scmp.lt.s32.totalorder %s9, 2
    // Predicated region
    $region13: #{bottleneck_forward.9} parent=5 // pred_check
      %p147 = pneg %p146
    $region14: #{bottleneck_forward.9} parent=5 // pred_check_branch
      %149 = sbr.rel (%p147) target = $region16
    $region15: #{bottleneck_forward.9} parent=5 // pred_region
      // Predicated region
      $region17: #{bottleneck_forward.9} parent=15 // pred_check
        %p150 = pneg %p43
      $region18: #{bottleneck_forward.9} parent=15 // pred_check_branch
        %152 = sbr.rel (%p150) target = $region20
      $region19: #{bottleneck_forward.9} parent=15 // pred_region
        %s153 = smul.u32 8, %s17
        %p154 = scmp.lt.s32.totalorder %s16, 1
        %s155 = scalar_select %p154, %s16, 1
        %p156 = scmp.lt.s32.totalorder %s153, 7
        %s157 = scalar_select %p156, %s153, 7
        %s158 = smul.addr %s155, 8
        %s159 = sadd.s32 %s157, %s158
        %s160 = smul.addr %s159, 4
        %s161 = scalar_lea.vmem %s0, %s160
        %s162 = smul.u32 8, %s17
      $region20: #{bottleneck_forward.9} parent=15 // pred_fallthru
        _
      // Predicated region
      $region21: #{bottleneck_forward.9} parent=15 // pred_check
        %p163 = pneg %p71
      $region22: #{bottleneck_forward.9} parent=15 // pred_check_branch
        %165 = sbr.rel (%p163) target = $region24
      $region23: #{bottleneck_forward.9} parent=15 // pred_region
        %s166 = smul.u32 8, %s17
        %p167 = scmp.lt.s32.totalorder %s16, 1
        %s168 = scalar_select %p167, %s16, 1
        %p169 = scmp.lt.s32.totalorder %s166, 7
        %s170 = scalar_select %p169, %s166, 7
        %s171 = smul.addr %s168, 8
        %s172 = sadd.s32 %s170, %s171
        %s173 = smul.addr %s172, 4
        %s174 = scalar_lea.vmem %s1, %s173
        %s175 = smul.u32 8, %s17
      $region24: #{bottleneck_forward.9} parent=15 // pred_fallthru
        _
      // Predicated region
      $region25: #{bottleneck_forward.9} parent=15 // pred_check
        %p176 = pneg %p97
      $region26: #{bottleneck_forward.9} parent=15 // pred_check_branch
        %178 = sbr.rel (%p176) target = $region28
      $region27: #{bottleneck_forward.9} parent=15 // pred_region
        %p179 = scmp.lt.s32.totalorder %s16, 1
        %s180 = scalar_select %p179, %s16, 1
        %s181 = scalar_lea.vmem %s2, %s180
      $region28: #{bottleneck_forward.9} parent=15 // pred_fallthru
        _
    $region16: #{bottleneck_forward.9} parent=5 // pred_fallthru
      _
    %p182 = scmp.le.s32.totalorder 1, %s9
    %p183 = scmp.lt.s32.totalorder %s9, 3
    %p184 = pnand %p182, %p183
    %p185 = pneg %p184
    // Predicated region
    $region29: #{bottleneck_forward.9} parent=5 // pred_check
      _
    $region30: #{bottleneck_forward.9} parent=5 // pred_check_branch
      %187 = sbr.rel (%p184) target = $region32
    $region31: #{bottleneck_forward.9} parent=5 // pred_region
      %s188 = ssub.s32 %s9, 1
      %s189 = smul.u32 8, %s19
      %p190 = scmp.lt.s32.totalorder %s18, 1
      %s191 = scalar_select %p190, %s18, 1
      %p192 = scmp.lt.s32.totalorder %s189, 7
      %s193 = scalar_select %p192, %s189, 7
      %s194 = smul.addr %s191, 8
      %s195 = sadd.s32 %s193, %s194
      %s196 = smul.addr %s195, 4
      %s197 = scalar_lea.vmem %s0, %s196
      %p198 = pneg %p49
      %p199 = pneg %p46
      %s200 = smul.u32 8, %s19
      %p201 = scmp.lt.s32.totalorder %s18, 1
      %s202 = scalar_select %p201, %s18, 1
      %p203 = scmp.lt.s32.totalorder %s200, 7
      %s204 = scalar_select %p203, %s200, 7
      %s205 = smul.addr %s202, 8
      %s206 = sadd.s32 %s204, %s205
      %s207 = smul.addr %s206, 4
      %s208 = scalar_lea.vmem %s1, %s207
      %p209 = pneg %p77
      %p210 = pneg %p74
      %p211 = scmp.lt.s32.totalorder %s18, 1
      %s212 = scalar_select %p211, %s18, 1
      %s213 = scalar_lea.vmem %s2, %s212
      %p214 = pneg %p103
      %p215 = pneg %p100
      %p216 = pneg %p131
      %p217 = pneg %p128
      %s218 = smul.u32 8, %s19
      %p219 = scmp.lt.s32.totalorder %s18, 1
      %s220 = scalar_select %p219, %s18, 1
      %p221 = scmp.lt.s32.totalorder %s218, 7
      %s222 = scalar_select %p221, %s218, 7
      %s223 = smul.addr %s220, 8
      %s224 = sadd.s32 %s222, %s223
      %s225 = smul.addr %s224, 4
      %s226 = scalar_lea.vmem %s3, %s225
      %s227 = smul.u32 8, %s19
      %p228 = scmp.lt.s32.totalorder %s18, 1
      %s229 = scalar_select %p228, %s18, 1
      %p230 = scmp.lt.s32.totalorder %s227, 7
      %s231 = scalar_select %p230, %s227, 7
      %s232 = smul.addr %s229, 8
      %s233 = sadd.s32 %s231, %s232
      %s234 = smul.addr %s233, 4
      %s235 = scalar_lea.vmem %s0, %s234
      %s236 = smul.u32 8, %s19
      %s237 = smul.u32 8, %s19
      %p238 = scmp.lt.s32.totalorder %s18, 1
      %s239 = scalar_select %p238, %s18, 1
      %p240 = scmp.lt.s32.totalorder %s237, 7
      %s241 = scalar_select %p240, %s237, 7
      %s242 = smul.addr %s239, 8
      %s243 = sadd.s32 %s241, %s242
      %s244 = smul.addr %s243, 4
      %s245 = scalar_lea.vmem %s1, %s244
      %s246 = smul.u32 8, %s19
      %p247 = scmp.lt.s32.totalorder %s18, 1
      %s248 = scalar_select %p247, %s18, 1
      %s249 = scalar_lea.vmem %s2, %s248
      %s250 = smul.u32 8, %s19
      %p251 = scmp.lt.s32.totalorder %s18, 1
      %s252 = scalar_select %p251, %s18, 1
      %p253 = scmp.lt.s32.totalorder %s250, 7
      %s254 = scalar_select %p253, %s250, 7
      %s255 = smul.addr %s252, 8
      %s256 = sadd.s32 %s254, %s255
      %s257 = smul.addr %s256, 4
      %s258 = scalar_lea.vmem %s3, %s257
      %s259 = smul.u32 8, %s19
      %v260 = vld [vmem:[%s235] sm:$0xf]
      %v261 = vld [vmem:[%s235 + $0x4] sm:$0xf]
      %v262 = vld [vmem:[%s235 + $0x8] sm:$0xf]
      %v263 = vld [vmem:[%s235 + $0xc] sm:$0xf]
      %v264 = vld [vmem:[%s235 + $0x10] sm:$0xf]
      %v265 = vld [vmem:[%s235 + $0x14] sm:$0xf]
      %v266 = vld [vmem:[%s235 + $0x18] sm:$0xf]
      %v267 = vld [vmem:[%s235 + $0x1c] sm:$0xf]
      %v268 = vunpack.c.l.bf16 %v260
      %v269 = vunpack.c.l.bf16 %v261
      %v270 = vunpack.c.l.bf16 %v262
      %v271 = vunpack.c.l.bf16 %v263
      %v272 = vunpack.c.l.bf16 %v264
      %v273 = vunpack.c.l.bf16 %v265
      %v274 = vunpack.c.l.bf16 %v266
      %v275 = vunpack.c.l.bf16 %v267
      %v276 = vld [vmem:[%s249] sm:$0x1]
      %v278 = vlaneseq
      %v279 = vshrl.u32 %v278, 7
      %v280 = vsub.s32 0, %v279
      %v281 = vrot.slane %v276, %v280
      %v283 = vmul.f32 %v268, %v281
      %v284 = vmul.f32 %v269, %v281
      %v285 = vmul.f32 %v270, %v281
      %v286 = vmul.f32 %v271, %v281
      %v287 = vmul.f32 %v272, %v281
      %v288 = vmul.f32 %v273, %v281
      %v289 = vmul.f32 %v274, %v281
      %v290 = vmul.f32 %v275, %v281
      %v291 = vld [vmem:[%s245] sm:$0xf]
      %v292 = vld [vmem:[%s245 + $0x4] sm:$0xf]
      %v293 = vld [vmem:[%s245 + $0x8] sm:$0xf]
      %v294 = vld [vmem:[%s245 + $0xc] sm:$0xf]
      %v295 = vld [vmem:[%s245 + $0x10] sm:$0xf]
      %v296 = vld [vmem:[%s245 + $0x14] sm:$0xf]
      %v297 = vld [vmem:[%s245 + $0x18] sm:$0xf]
      %v298 = vld [vmem:[%s245 + $0x1c] sm:$0xf]
      %v299 = vunpack.c.l.bf16 %v291
      %v300 = vunpack.c.l.bf16 %v292
      %v301 = vunpack.c.l.bf16 %v293
      %v302 = vunpack.c.l.bf16 %v294
      %v303 = vunpack.c.l.bf16 %v295
      %v304 = vunpack.c.l.bf16 %v296
      %v305 = vunpack.c.l.bf16 %v297
      %v306 = vunpack.c.l.bf16 %v298
      %v307 = vadd.f32 %v283, %v299
      %v308 = vadd.f32 %v284, %v300
      %v309 = vadd.f32 %v285, %v301
      %v310 = vadd.f32 %v286, %v302
      %v311 = vadd.f32 %v287, %v303
      %v312 = vadd.f32 %v288, %v304
      %v313 = vadd.f32 %v289, %v305
      %v314 = vadd.f32 %v290, %v306
      %v315 = vmax.f32 %v307, 0.0
      %v316 = vmax.f32 %v308, 0.0
      %v317 = vmax.f32 %v309, 0.0
      %v318 = vmax.f32 %v310, 0.0
      %v319 = vmax.f32 %v311, 0.0
      %v320 = vmax.f32 %v312, 0.0
      %v321 = vmax.f32 %v313, 0.0
      %v322 = vmax.f32 %v314, 0.0
      %v323 = vpack.c.bf16 %v316, %v315
      %v324 = vpack.c.bf16 %v318, %v317
      %v325 = vpack.c.bf16 %v320, %v319
      %v326 = vpack.c.bf16 %v322, %v321
      %v331 = vunpack.c.l.b16 %v323
      %v332 = vunpack.c.h.b16 %v323
      %v333 = vunpack.c.l.b16 %v324
      %v334 = vunpack.c.h.b16 %v324
      %v335 = vunpack.c.l.b16 %v325
      %v336 = vunpack.c.h.b16 %v325
      %v337 = vunpack.c.l.b16 %v326
      %v338 = vunpack.c.h.b16 %v326
      %v339 = vpack.c.b16 %v331, %v331
      %v340 = vpack.c.b16 %v332, %v332
      %v341 = vpack.c.b16 %v333, %v333
      %v342 = vpack.c.b16 %v334, %v334
      %v343 = vpack.c.b16 %v335, %v335
      %v344 = vpack.c.b16 %v336, %v336
      %v345 = vpack.c.b16 %v337, %v337
      %v346 = vpack.c.b16 %v338, %v338
      %355 = vst [vmem:[%s258] sm:$0xf] %v339
      %356 = vst [vmem:[%s258 + $0x4] sm:$0xf] %v340
      %357 = vst [vmem:[%s258 + $0x8] sm:$0xf] %v341
      %358 = vst [vmem:[%s258 + $0xc] sm:$0xf] %v342
      %359 = vst [vmem:[%s258 + $0x10] sm:$0xf] %v343
      %360 = vst [vmem:[%s258 + $0x14] sm:$0xf] %v344
      %361 = vst [vmem:[%s258 + $0x18] sm:$0xf] %v345
      %362 = vst [vmem:[%s258 + $0x1c] sm:$0xf] %v346
      %s363 = smul.u32 8, %s19
      %p364 = scmp.lt.s32.totalorder %s18, 1
      %s365 = scalar_select %p364, %s18, 1
      %p366 = scmp.lt.s32.totalorder %s363, 7
      %s367 = scalar_select %p366, %s363, 7
      %s368 = smul.addr %s365, 8
      %s369 = sadd.s32 %s367, %s368
      %s370 = smul.addr %s369, 4
      %s371 = scalar_lea.vmem %s3, %s370
      // Predicated region
      $region33: #{bottleneck_forward.9} parent=31 // pred_check
        %p372 = pneg %p128
      $region34: #{bottleneck_forward.9} parent=31 // pred_check_branch
        %374 = sbr.rel (%p372) target = $region36
      $region35: #{bottleneck_forward.9} parent=31 // pred_region
        %s375 = smul.u32 8, %s19
      $region36: #{bottleneck_forward.9} parent=31 // pred_fallthru
        _
    $region32: #{bottleneck_forward.9} parent=5 // pred_fallthru
      _
    %p376 = scmp.le.s32.totalorder 2, %s9
    // Predicated region
    $region37: #{bottleneck_forward.9} parent=5 // pred_check
      %p377 = pneg %p376
    $region38: #{bottleneck_forward.9} parent=5 // pred_check_branch
      %379 = sbr.rel (%p377) target = $region40
    $region39: #{bottleneck_forward.9} parent=5 // pred_region
      %s380 = ssub.s32 %s9, 2
      // Predicated region
      $region41: #{bottleneck_forward.9} parent=39 // pred_check
        %p381 = pneg %p134
      $region42: #{bottleneck_forward.9} parent=39 // pred_check_branch
        %383 = sbr.rel (%p381) target = $region44
      $region43: #{bottleneck_forward.9} parent=39 // pred_region
        %s384 = smul.u32 8, %s21
        %p385 = scmp.lt.s32.totalorder %s20, 1
        %s386 = scalar_select %p385, %s20, 1
        %p387 = scmp.lt.s32.totalorder %s384, 7
        %s388 = scalar_select %p387, %s384, 7
        %s389 = smul.addr %s386, 8
        %s390 = sadd.s32 %s388, %s389
        %s391 = smul.addr %s390, 4
        %s392 = scalar_lea.vmem %s3, %s391
      $region44: #{bottleneck_forward.9} parent=39 // pred_fallthru
        _
    $region40: #{bottleneck_forward.9} parent=5 // pred_fallthru
      _
  $region6: #{bottleneck_forward.9} parent=0 // loop_footer
    %s13 = sadd.s32 1, %s9
  $region7: #{bottleneck_forward.9} parent=0 // loop_footer_branch
    %8 = sbr.rel target = $region3
  $region8: #{bottleneck_forward.9} parent=0 // loop_exit
    _

// kernel: bottleneck_forward.6
$region0: #{bottleneck_forward.6}
  #allocation0 [shape = 'u32[]', space=smem, size = 0x4, offset = 0x4, fixed_abs, tag = 'smem constant byte address 0x4 - core index']
  #allocation1 [shape = 'u32[144,128]{1,0:T(1,128)}', space=vmem, size = 0x12000, scoped, tag = 'internal scratch']
  #allocation2 [shape = 'bf16[10,10,128]{2,1,0:T(8,128)(2,1)}', space=vmem, size = 0xa000, scoped, tag = 'scratch operand']
  %s0 = inlined_call_operand.vmem [shape: bf16[2,8,8,128], index: 0, kind: input, shape index: {}]
  %s1 = inlined_call_operand.vmem [shape: bf16[9,128,128], index: 1, kind: input, shape index: {}]
  %s2 = inlined_call_operand.vmem [shape: f32[1,128], index: 2, kind: input, shape index: {}]
  %s3 = inlined_call_operand.vmem [shape: f32[1,128], index: 3, kind: input, shape index: {}]
  %s4 = inlined_call_operand.vmem [shape: bf16[2,8,8,128], index: 4, kind: output, shape index: {}]
  %s5 = sld [smem:[#allocation0]]
  $region49: #{bottleneck_forward.6} parent=0
    _
  %s7 = ssub.s32 1, %s5
  %s8 = scalar_select 0, %s7, %s5
  loop: start=0, step=1, limit=4
  $region2: #{bottleneck_forward.6} parent=0 // loop_pre_header
    _
  $region3: #{bottleneck_forward.6} parent=0 // loop_header
    %s10 = sphi 0, %s14
    %p11 = scmp.ge.s32.totalorder %s10, 4
    %s20 = sphi 0, %s22
    %s23 = sphi 0, %s20
    %s24 = sphi 0, %s23
    %s40 = sphi 0, %s24
    %s44 = sphi 0, %s44
    %s46 = sphi 0, %s44
    %s47 = sphi 0, %s46
    %s61 = sphi 0, %s47
    %s65 = sphi 0, %s65
    %s67 = sphi 0, %s65
    %s68 = sphi 0, %s67
    %s82 = sphi 0, %s68
    %s86 = sphi 0, %s86
    %s88 = sphi 0, %s86
    %s89 = sphi 0, %s88
    %s103 = sphi 0, %s89
    %s109 = sphi 0, %s111
    %s112 = sphi 0, %s109
    %s113 = sphi 0, %s112
    %s129 = sphi 0, %s113
  $region4: #{bottleneck_forward.6} parent=0 // loop_header_branch
    %13 = sbr.rel (%p11) target = $region8
  $region5: #{bottleneck_forward.6} parent=0 // loop_body
    %s15 = ssub.s32 %s10, 1
    %s16 = ssub.s32 %s10, 2
    %s17 = sadd.s32 %s10, 1
    %s18 = ssub.s32 %s10, %s17
    %p19 = scmp.eq.s32.totalorder %s18, 0
    %s21 = sadd.s32 %s20, 1
    %s22 = scalar_select %p19, %s20, %s21
    %p25 = pneg %p19
    %p26 = scmp.eq.s32.totalorder %s10, 1
    %p27 = por %p25, %p26
    %p28 = scmp.ne.s32.totalorder %s20, %s23
    %p29 = scmp.eq.s32.totalorder %s10, 0
    %p30 = por %p28, %p29
    %p31 = scmp.ne.s32.totalorder %s20, %s23
    %p32 = scmp.eq.s32.totalorder %s15, 1
    %p33 = por %p31, %p32
    %p34 = scmp.ne.s32.totalorder %s23, %s24
    %p35 = scmp.eq.s32.totalorder %s15, 0
    %p36 = por %p34, %p35
    %p37 = scmp.ne.s32.totalorder %s23, %s24
    %p38 = scmp.eq.s32.totalorder %s16, 1
    %p39 = por %p37, %p38
    %p41 = scmp.ne.s32.totalorder %s24, %s40
    %p42 = scmp.eq.s32.totalorder %s16, 0
    %p43 = por %p41, %p42
    %s45 = sadd.s32 %s44, 1
    %p48 = scmp.eq.s32.totalorder %s10, 1
    %p49 = scmp.ne.s32.totalorder %s44, %s46
    %p50 = scmp.eq.s32.totalorder %s10, 0
    %p51 = por %p49, %p50
    %p52 = scmp.ne.s32.totalorder %s44, %s46
    %p53 = scmp.eq.s32.totalorder %s15, 1
    %p54 = por %p52, %p53
    %p55 = scmp.ne.s32.totalorder %s46, %s47
    %p56 = scmp.eq.s32.totalorder %s15, 0
    %p57 = por %p55, %p56
    %p58 = scmp.ne.s32.totalorder %s46, %s47
    %p59 = scmp.eq.s32.totalorder %s16, 1
    %p60 = por %p58, %p59
    %p62 = scmp.ne.s32.totalorder %s47, %s61
    %p63 = scmp.eq.s32.totalorder %s16, 0
    %p64 = por %p62, %p63
    %s66 = sadd.s32 %s65, 1
    %p69 = scmp.eq.s32.totalorder %s10, 1
    %p70 = scmp.ne.s32.totalorder %s65, %s67
    %p71 = scmp.eq.s32.totalorder %s10, 0
    %p72 = por %p70, %p71
    %p73 = scmp.ne.s32.totalorder %s65, %s67
    %p74 = scmp.eq.s32.totalorder %s15, 1
    %p75 = por %p73, %p74
    %p76 = scmp.ne.s32.totalorder %s67, %s68
    %p77 = scmp.eq.s32.totalorder %s15, 0
    %p78 = por %p76, %p77
    %p79 = scmp.ne.s32.totalorder %s67, %s68
    %p80 = scmp.eq.s32.totalorder %s16, 1
    %p81 = por %p79, %p80
    %p83 = scmp.ne.s32.totalorder %s68, %s82
    %p84 = scmp.eq.s32.totalorder %s16, 0
    %p85 = por %p83, %p84
    %s87 = sadd.s32 %s86, 1
    %p90 = scmp.eq.s32.totalorder %s10, 1
    %p91 = scmp.ne.s32.totalorder %s86, %s88
    %p92 = scmp.eq.s32.totalorder %s10, 0
    %p93 = por %p91, %p92
    %p94 = scmp.ne.s32.totalorder %s86, %s88
    %p95 = scmp.eq.s32.totalorder %s15, 1
    %p96 = por %p94, %p95
    %p97 = scmp.ne.s32.totalorder %s88, %s89
    %p98 = scmp.eq.s32.totalorder %s15, 0
    %p99 = por %p97, %p98
    %p100 = scmp.ne.s32.totalorder %s88, %s89
    %p101 = scmp.eq.s32.totalorder %s16, 1
    %p102 = por %p100, %p101
    %p104 = scmp.ne.s32.totalorder %s89, %s103
    %p105 = scmp.eq.s32.totalorder %s16, 0
    %p106 = por %p104, %p105
    %s107 = ssub.s32 %s10, %s17
    %p108 = scmp.eq.s32.totalorder %s107, 0
    %s110 = sadd.s32 %s109, 1
    %s111 = scalar_select %p108, %s109, %s110
    %p114 = pneg %p108
    %p115 = scmp.eq.s32.totalorder %s10, 1
    %p116 = por %p114, %p115
    %p117 = scmp.ne.s32.totalorder %s109, %s112
    %p118 = scmp.eq.s32.totalorder %s10, 0
    %p119 = por %p117, %p118
    %p120 = scmp.ne.s32.totalorder %s109, %s112
    %p121 = scmp.eq.s32.totalorder %s15, 1
    %p122 = por %p120, %p121
    %p123 = scmp.ne.s32.totalorder %s112, %s113
    %p124 = scmp.eq.s32.totalorder %s15, 0
    %p125 = por %p123, %p124
    %p126 = scmp.ne.s32.totalorder %s112, %s113
    %p127 = scmp.eq.s32.totalorder %s16, 1
    %p128 = por %p126, %p127
    %p130 = scmp.ne.s32.totalorder %s113, %s129
    %p131 = scmp.eq.s32.totalorder %s16, 0
    %p132 = por %p130, %p131
    %p133 = scmp.le.s32.totalorder 1, %s10
    %p134 = scmp.lt.s32.totalorder %s10, 3
    %p135 = pnand %p133, %p134
    %p136 = pneg %p135
    // Predicated region
    $region9: #{bottleneck_forward.6} parent=5 // pred_check
      _
    $region10: #{bottleneck_forward.6} parent=5 // pred_check_branch
      %138 = sbr.rel (%p135) target = $region12
    $region11: #{bottleneck_forward.6} parent=5 // pred_region
      %s139 = ssub.s32 %s10, 1
      // Predicated region
      $region13: #{bottleneck_forward.6} parent=11 // pred_check
        %p140 = pneg %p57
      $region14: #{bottleneck_forward.6} parent=11 // pred_check_branch
        %142 = sbr.rel (%p140) target = $region16
      $region15: #{bottleneck_forward.6} parent=11 // pred_region
        _
      $region16: #{bottleneck_forward.6} parent=11 // pred_fallthru
        _
      // Predicated region
      $region17: #{bottleneck_forward.6} parent=11 // pred_check
        %p143 = pneg %p78
      $region18: #{bottleneck_forward.6} parent=11 // pred_check_branch
        %145 = sbr.rel (%p143) target = $region20
      $region19: #{bottleneck_forward.6} parent=11 // pred_region
        _
      $region20: #{bottleneck_forward.6} parent=11 // pred_fallthru
        _
      // Predicated region
      $region21: #{bottleneck_forward.6} parent=11 // pred_check
        %p146 = pneg %p99
      $region22: #{bottleneck_forward.6} parent=11 // pred_check_branch
        %148 = sbr.rel (%p146) target = $region24
      $region23: #{bottleneck_forward.6} parent=11 // pred_region
        _
      $region24: #{bottleneck_forward.6} parent=11 // pred_fallthru
        _
    $region12: #{bottleneck_forward.6} parent=5 // pred_fallthru
      _
    %p149 = scmp.lt.s32.totalorder %s10, 2
    // Predicated region
    $region25: #{bottleneck_forward.6} parent=5 // pred_check
      %p150 = pneg %p149
    $region26: #{bottleneck_forward.6} parent=5 // pred_check_branch
      %152 = sbr.rel (%p150) target = $region28
    $region27: #{bottleneck_forward.6} parent=5 // pred_region
      // Predicated region
      $region29: #{bottleneck_forward.6} parent=27 // pred_check
        %p153 = pneg %p30
      $region30: #{bottleneck_forward.6} parent=27 // pred_check_branch
        %155 = sbr.rel (%p153) target = $region32
      $region31: #{bottleneck_forward.6} parent=27 // pred_region
        %p156 = scmp.lt.s32.totalorder %s10, 1
        %s157 = scalar_select %p156, %s10, 1
        %s158 = smul.addr %s157, 8
        %s159 = smul.addr %s158, 4
        %s160 = scalar_lea.vmem %s0, %s159
      $region32: #{bottleneck_forward.6} parent=27 // pred_fallthru
        _
    $region28: #{bottleneck_forward.6} parent=5 // pred_fallthru
      _
    %p161 = scmp.le.s32.totalorder 1, %s10
    %p162 = scmp.lt.s32.totalorder %s10, 3
    %p163 = pnand %p161, %p162
    %p164 = pneg %p163
    // Predicated region
    $region33: #{bottleneck_forward.6} parent=5 // pred_check
      _
    $region34: #{bottleneck_forward.6} parent=5 // pred_check_branch
      %166 = sbr.rel (%p163) target = $region36
    $region35: #{bottleneck_forward.6} parent=5 // pred_region
      %s167 = ssub.s32 %s10, 1
      %p168 = scmp.lt.s32.totalorder %s15, 1
      %s169 = scalar_select %p168, %s15, 1
      %s170 = smul.addr %s169, 8
      %s171 = smul.addr %s170, 4
      %s172 = scalar_lea.vmem %s0, %s171
      %p173 = pneg %p36
      %p174 = pneg %p33
      %p175 = pneg %p57
      %p176 = pneg %p54
      %p177 = pneg %p78
      %p178 = pneg %p75
      %p179 = pneg %p99
      %p180 = pneg %p96
      %p181 = pneg %p125
      %p182 = pneg %p122
      %p183 = scmp.lt.s32.totalorder %s15, 1
      %s184 = scalar_select %p183, %s15, 1
      %s185 = smul.addr %s184, 8
      %s186 = smul.addr %s185, 4
      %s187 = scalar_lea.vmem %s4, %s186
      %p188 = scmp.lt.s32.totalorder %s15, 1
      %s189 = scalar_select %p188, %s15, 1
      %s190 = smul.addr %s189, 8
      %s191 = smul.addr %s190, 4
      %s192 = scalar_lea.vmem %s0, %s191
      %p193 = scmp.lt.s32.totalorder %s15, 1
      %s194 = scalar_select %p193, %s15, 1
      %s195 = smul.addr %s194, 8
      %s196 = smul.addr %s195, 4
      %s197 = scalar_lea.vmem %s4, %s196
      %199 = vst [vmem:[#allocation2] sm:$0xf] 0
      %200 = vst [vmem:[#allocation2 + $0x4] sm:$0x1] 0
      %s201 = scalar_lea.vmem [#allocation2], 72
      %202 = vst [vmem:[%s201] sm:$0xf] 0
      %203 = vst [vmem:[%s201 + $0x4] sm:$0x1] 0
      %vm204 = vcmask 1040384
      %vm205 = vsmask.f32 256
      %vm206 = vmand %vm204, %vm205
      %v207 = vld [vmem:[#allocation2] sm:$0x1]
      %v208 = vsel %vm206, 0, %v207
      %209 = vst [vmem:[#allocation2] sm:$0x1] %v208
      %v210 = vld [vmem:[#allocation2 + $0x8] sm:$0x1]
      %v211 = vsel %vm206, 0, %v210
      %212 = vst [vmem:[#allocation2 + $0x8] sm:$0x1] %v211
      %v213 = vld [vmem:[#allocation2 + $0x10] sm:$0x1]
      %v214 = vsel %vm206, 0, %v213
      %215 = vst [vmem:[#allocation2 + $0x10] sm:$0x1] %v214
      %v216 = vld [vmem:[#allocation2 + $0x18] sm:$0x1]
      %v217 = vsel %vm206, 0, %v216
      %218 = vst [vmem:[#allocation2 + $0x18] sm:$0x1] %v217
      %v219 = vld [vmem:[#allocation2 + $0x20] sm:$0x1]
      %v220 = vsel %vm206, 0, %v219
      %221 = vst [vmem:[#allocation2 + $0x20] sm:$0x1] %v220
      %v222 = vld [vmem:[#allocation2 + $0x28] sm:$0x1]
      %v223 = vsel %vm206, 0, %v222
      %224 = vst [vmem:[#allocation2 + $0x28] sm:$0x1] %v223
      %v225 = vld [vmem:[#allocation2 + $0x30] sm:$0x1]
      %v226 = vsel %vm206, 0, %v225
      %227 = vst [vmem:[#allocation2 + $0x30] sm:$0x1] %v226
      %v228 = vld [vmem:[#allocation2 + $0x38] sm:$0x1]
      %v229 = vsel %vm206, 0, %v228
      %230 = vst [vmem:[#allocation2 + $0x38] sm:$0x1] %v229
      %v231 = vld [vmem:[#allocation2 + $0x40] sm:$0x1]
      %v232 = vsel %vm206, 0, %v231
      %233 = vst [vmem:[#allocation2 + $0x40] sm:$0x1] %v232
      %v234 = vld [vmem:[#allocation2 + $0x48] sm:$0x1]
      %v235 = vsel %vm206, 0, %v234
      %236 = vst [vmem:[#allocation2 + $0x48] sm:$0x1] %v235
      %vm237 = vsmask.f32 7938
      %vm238 = vmand %vm204, %vm237
      %v239 = vld [vmem:[#allocation2 + $0x4] sm:$0x1]
      %v240 = vsel %vm238, 0, %v239
      %241 = vst [vmem:[#allocation2 + $0x4] sm:$0x1] %v240
      %v242 = vld [vmem:[#allocation2 + $0xc] sm:$0x1]
      %v243 = vsel %vm238, 0, %v242
      %244 = vst [vmem:[#allocation2 + $0xc] sm:$0x1] %v243
      %v245 = vld [vmem:[#allocation2 + $0x14] sm:$0x1]
      %v246 = vsel %vm238, 0, %v245
      %247 = vst [vmem:[#allocation2 + $0x14] sm:$0x1] %v246
      %v248 = vld [vmem:[#allocation2 + $0x1c] sm:$0x1]
      %v249 = vsel %vm238, 0, %v248
      %250 = vst [vmem:[#allocation2 + $0x1c] sm:$0x1] %v249
      %v251 = vld [vmem:[#allocation2 + $0x24] sm:$0x1]
      %v252 = vsel %vm238, 0, %v251
      %253 = vst [vmem:[#allocation2 + $0x24] sm:$0x1] %v252
      %v254 = vld [vmem:[#allocation2 + $0x2c] sm:$0x1]
      %v255 = vsel %vm238, 0, %v254
      %256 = vst [vmem:[#allocation2 + $0x2c] sm:$0x1] %v255
      %v257 = vld [vmem:[#allocation2 + $0x34] sm:$0x1]
      %v258 = vsel %vm238, 0, %v257
      %259 = vst [vmem:[#allocation2 + $0x34] sm:$0x1] %v258
      %v260 = vld [vmem:[#allocation2 + $0x3c] sm:$0x1]
      %v261 = vsel %vm238, 0, %v260
      %262 = vst [vmem:[#allocation2 + $0x3c] sm:$0x1] %v261
      %v263 = vld [vmem:[#allocation2 + $0x44] sm:$0x1]
      %v264 = vsel %vm238, 0, %v263
      %265 = vst [vmem:[#allocation2 + $0x44] sm:$0x1] %v264
      %v266 = vld [vmem:[#allocation2 + $0x4c] sm:$0x1]
      %v267 = vsel %vm238, 0, %v266
      %268 = vst [vmem:[#allocation2 + $0x4c] sm:$0x1] %v267
      %v269 = vld [vmem:[%s192] sm:$0xf]
      %v270 = vld [vmem:[%s192 + $0x4] sm:$0xf]
      %v271 = vld [vmem:[%s192 + $0x8] sm:$0xf]
      %v272 = vld [vmem:[%s192 + $0xc] sm:$0xf]
      %v273 = vld [vmem:[%s192 + $0x10] sm:$0xf]
      %v274 = vld [vmem:[%s192 + $0x14] sm:$0xf]
      %v275 = vld [vmem:[%s192 + $0x18] sm:$0xf]
      %v276 = vld [vmem:[%s192 + $0x1c] sm:$0xf]
      %v278 = vshrl.u32 %v269, 16
      %v280 = vrot.slane %v278, 7
      %v281 = vshll.u32 %v269, 16
      %v283 = vor.u32 %v280, %v281
      %v284 = vrot.slane %v280, 4
      %v286 = vshrl.u32 %v270, 16
      %v288 = vrot.slane %v286, 7
      %v289 = vshll.u32 %v270, 16
      %v291 = vor.u32 %v288, %v289
      %v292 = vrot.slane %v288, 4
      %v294 = vshrl.u32 %v271, 16
      %v296 = vrot.slane %v294, 7
      %v297 = vshll.u32 %v271, 16
      %v299 = vor.u32 %v296, %v297
      %v300 = vrot.slane %v296, 4
      %v302 = vshrl.u32 %v272, 16
      %v304 = vrot.slane %v302, 7
      %v305 = vshll.u32 %v272, 16
      %v307 = vor.u32 %v304, %v305
      %v308 = vrot.slane %v304, 4
      %v310 = vshrl.u32 %v273, 16
      %v312 = vrot.slane %v310, 7
      %v313 = vshll.u32 %v273, 16
      %v315 = vor.u32 %v312, %v313
      %v316 = vrot.slane %v312, 4
      %v318 = vshrl.u32 %v274, 16
      %v320 = vrot.slane %v318, 7
      %v321 = vshll.u32 %v274, 16
      %v323 = vor.u32 %v320, %v321
      %v324 = vrot.slane %v320, 4
      %v326 = vshrl.u32 %v275, 16
      %v328 = vrot.slane %v326, 7
      %v329 = vshll.u32 %v275, 16
      %v331 = vor.u32 %v328, %v329
      %v332 = vrot.slane %v328, 4
      %v334 = vshrl.u32 %v276, 16
      %v336 = vrot.slane %v334, 7
      %v337 = vshll.u32 %v276, 16
      %v339 = vor.u32 %v336, %v337
      %v340 = vrot.slane %v336, 4
      %s357 = scalar_lea.vmem [#allocation2], 8
      %vm358 = vcmask 1043456
      %vm359 = vmand %vm358, %vm237
      %v360 = vld [vmem:[%s357] sm:$0xf]
      %v361 = vsel %vm359, %v283, %v360
      %362 = vst [vmem:[%s357] sm:$0xf] %v361
      %v363 = vld [vmem:[%s357 + $0x4] sm:$0x1]
      %v364 = vsel %vm206, %v284, %v363
      %365 = vst [vmem:[%s357 + $0x4] sm:$0x1] %v364
      %v366 = vld [vmem:[%s357 + $0x8] sm:$0xf]
      %v367 = vsel %vm359, %v291, %v366
      %368 = vst [vmem:[%s357 + $0x8] sm:$0xf] %v367
      %v369 = vld [vmem:[%s357 + $0xc] sm:$0x1]
      %v370 = vsel %vm206, %v292, %v369
      %371 = vst [vmem:[%s357 + $0xc] sm:$0x1] %v370
      %v372 = vld [vmem:[%s357 + $0x10] sm:$0xf]
      %v373 = vsel %vm359, %v299, %v372
      %374 = vst [vmem:[%s357 + $0x10] sm:$0xf] %v373
      %v375 = vld [vmem:[%s357 + $0x14] sm:$0x1]
      %v376 = vsel %vm206, %v300, %v375
      %377 = vst [vmem:[%s357 + $0x14] sm:$0x1] %v376
      %v378 = vld [vmem:[%s357 + $0x18] sm:$0xf]
      %v379 = vsel %vm359, %v307, %v378
      %380 = vst [vmem:[%s357 + $0x18] sm:$0xf] %v379
      %v381 = vld [vmem:[%s357 + $0x1c] sm:$0x1]
      %v382 = vsel %vm206, %v308, %v381
      %383 = vst [vmem:[%s357 + $0x1c] sm:$0x1] %v382
      %v384 = vld [vmem:[%s357 + $0x20] sm:$0xf]
      %v385 = vsel %vm359, %v315, %v384
      %386 = vst [vmem:[%s357 + $0x20] sm:$0xf] %v385
      %v387 = vld [vmem:[%s357 + $0x24] sm:$0x1]
      %v388 = vsel %vm206, %v316, %v387
      %389 = vst [vmem:[%s357 + $0x24] sm:$0x1] %v388
      %v390 = vld [vmem:[%s357 + $0x28] sm:$0xf]
      %v391 = vsel %vm359, %v323, %v390
      %392 = vst [vmem:[%s357 + $0x28] sm:$0xf] %v391
      %v393 = vld [vmem:[%s357 + $0x2c] sm:$0x1]
      %v394 = vsel %vm206, %v324, %v393
      %395 = vst [vmem:[%s357 + $0x2c] sm:$0x1] %v394
      %v396 = vld [vmem:[%s357 + $0x30] sm:$0xf]
      %v397 = vsel %vm359, %v331, %v396
      %398 = vst [vmem:[%s357 + $0x30] sm:$0xf] %v397
      %v399 = vld [vmem:[%s357 + $0x34] sm:$0x1]
      %v400 = vsel %vm206, %v332, %v399
      %401 = vst [vmem:[%s357 + $0x34] sm:$0x1] %v400
      %v402 = vld [vmem:[%s357 + $0x38] sm:$0xf]
      %v403 = vsel %vm359, %v339, %v402
      %404 = vst [vmem:[%s357 + $0x38] sm:$0xf] %v403
      %v405 = vld [vmem:[%s357 + $0x3c] sm:$0x1]
      %v406 = vsel %vm206, %v340, %v405
      %407 = vst [vmem:[%s357 + $0x3c] sm:$0x1] %v406
      %v408 = vld [vmem:[#allocation2] sm:$0xf]
      %v409 = vld [vmem:[#allocation2 + $0x8] sm:$0xf]
      %v410 = vld [vmem:[#allocation2 + $0x10] sm:$0xf]
      %v411 = vld [vmem:[#allocation2 + $0x18] sm:$0xf]
      %v412 = vld [vmem:[#allocation2 + $0x20] sm:$0xf]
      %v413 = vld [vmem:[#allocation2 + $0x28] sm:$0xf]
      %v414 = vld [vmem:[#allocation2 + $0x30] sm:$0xf]
      %v415 = vld [vmem:[#allocation2 + $0x38] sm:$0xf]
      %v416 = vld [vmem:[%s1] sm:$0xf]
      %v417 = vld [vmem:[%s1 + $0x4] sm:$0xf]
      %v418 = vld [vmem:[%s1 + $0x8] sm:$0xf]
      %v419 = vld [vmem:[%s1 + $0xc] sm:$0xf]
      %v420 = vld [vmem:[%s1 + $0x10] sm:$0xf]
      %v421 = vld [vmem:[%s1 + $0x14] sm:$0xf]
      %v422 = vld [vmem:[%s1 + $0x18] sm:$0xf]
      %v423 = vld [vmem:[%s1 + $0x1c] sm:$0xf]
      %v424 = vld [vmem:[%s1 + $0x20] sm:$0xf]
      %v425 = vld [vmem:[%s1 + $0x24] sm:$0xf]
      %v426 = vld [vmem:[%s1 + $0x28] sm:$0xf]
      %v427 = vld [vmem:[%s1 + $0x2c] sm:$0xf]
      %v428 = vld [vmem:[%s1 + $0x30] sm:$0xf]
      %v429 = vld [vmem:[%s1 + $0x34] sm:$0xf]
      %v430 = vld [vmem:[%s1 + $0x38] sm:$0xf]
      %v431 = vld [vmem:[%s1 + $0x3c] sm:$0xf]
      %v432 = vld [vmem:[#allocation2 + $0x4] sm:$0x1]
      %v433 = vld [vmem:[#allocation2 + $0xc] sm:$0x1]
      %v434 = vld [vmem:[#allocation2 + $0x14] sm:$0x1]
      %v435 = vld [vmem:[#allocation2 + $0x1c] sm:$0x1]
      %v436 = vld [vmem:[#allocation2 + $0x24] sm:$0x1]
      %v437 = vld [vmem:[#allocation2 + $0x2c] sm:$0x1]
      %v438 = vld [vmem:[#allocation2 + $0x34] sm:$0x1]
      %v439 = vld [vmem:[#allocation2 + $0x3c] sm:$0x1]
      %vm440 = vsmask.f32 3328
      %vm441 = vsmask.f32 7440
      %vm442 = vmor %vm440, %vm441
      %v444 = vshrl.u32 %v408, 16
      %v446 = vrot.slane %v444, 4
      %v447 = vshll.u32 %v408, 16
      %v449 = vrot.slane %v447, 5
      %v450 = vor.u32 %v446, %v449
      %v451 = vrot.slane %v450, 4
      %v453 = vshll.u32 %v432, 16
      %v455 = vrot.slane %v453, 5
      %v456 = vsel %vm442, %v451, %v455
      %v458 = vshrl.u32 %v409, 16
      %v460 = vrot.slane %v458, 4
      %v461 = vshll.u32 %v409, 16
      %v463 = vrot.slane %v461, 5
      %v464 = vor.u32 %v460, %v463
      %v465 = vrot.slane %v464, 4
      %v467 = vshll.u32 %v433, 16
      %v469 = vrot.slane %v467, 5
      %v470 = vsel %vm442, %v465, %v469
      %v472 = vshrl.u32 %v410, 16
      %v474 = vrot.slane %v472, 4
      %v475 = vshll.u32 %v410, 16
      %v477 = vrot.slane %v475, 5
      %v478 = vor.u32 %v474, %v477
      %v479 = vrot.slane %v478, 4
      %v481 = vshll.u32 %v434, 16
      %v483 = vrot.slane %v481, 5
      %v484 = vsel %vm442, %v479, %v483
      %v486 = vshrl.u32 %v411, 16
      %v488 = vrot.slane %v486, 4
      %v489 = vshll.u32 %v411, 16
      %v491 = vrot.slane %v489, 5
      %v492 = vor.u32 %v488, %v491
      %v493 = vrot.slane %v492, 4
      %v495 = vshll.u32 %v435, 16
      %v497 = vrot.slane %v495, 5
      %v498 = vsel %vm442, %v493, %v497
      %v500 = vshrl.u32 %v412, 16
      %v502 = vrot.slane %v500, 4
      %v503 = vshll.u32 %v412, 16
      %v505 = vrot.slane %v503, 5
      %v506 = vor.u32 %v502, %v505
      %v507 = vrot.slane %v506, 4
      %v509 = vshll.u32 %v436, 16
      %v511 = vrot.slane %v509, 5
      %v512 = vsel %vm442, %v507, %v511
      %v514 = vshrl.u32 %v413, 16
      %v516 = vrot.slane %v514, 4
      %v517 = vshll.u32 %v413, 16
      %v519 = vrot.slane %v517, 5
      %v520 = vor.u32 %v516, %v519
      %v521 = vrot.slane %v520, 4
      %v523 = vshll.u32 %v437, 16
      %v525 = vrot.slane %v523, 5
      %v526 = vsel %vm442, %v521, %v525
      %v528 = vshrl.u32 %v414, 16
      %v530 = vrot.slane %v528, 4
      %v531 = vshll.u32 %v414, 16
      %v533 = vrot.slane %v531, 5
      %v534 = vor.u32 %v530, %v533
      %v535 = vrot.slane %v534, 4
      %v537 = vshll.u32 %v438, 16
      %v539 = vrot.slane %v537, 5
      %v540 = vsel %vm442, %v535, %v539
      %v542 = vshrl.u32 %v415, 16
      %v544 = vrot.slane %v542, 4
      %v545 = vshll.u32 %v415, 16
      %v547 = vrot.slane %v545, 5
      %v548 = vor.u32 %v544, %v547
      %v549 = vrot.slane %v548, 4
      %v551 = vshll.u32 %v439, 16
      %v553 = vrot.slane %v551, 5
      %v554 = vsel %vm442, %v549, %v553
      %s555 = scalar_lea.vmem %s1, 64
      %v556 = vld [vmem:[%s555] sm:$0xf]
      %v557 = vld [vmem:[%s555 + $0x4] sm:$0xf]
      %v558 = vld [vmem:[%s555 + $0x8] sm:$0xf]
      %v559 = vld [vmem:[%s555 + $0xc] sm:$0xf]
      %v560 = vld [vmem:[%s555 + $0x10] sm:$0xf]
      %v561 = vld [vmem:[%s555 + $0x14] sm:$0xf]
      %v562 = vld [vmem:[%s555 + $0x18] sm:$0xf]
      %v563 = vld [vmem:[%s555 + $0x1c] sm:$0xf]
      %v564 = vld [vmem:[%s555 + $0x20] sm:$0xf]
      %v565 = vld [vmem:[%s555 + $0x24] sm:$0xf]
      %v566 = vld [vmem:[%s555 + $0x28] sm:$0xf]
      %v567 = vld [vmem:[%s555 + $0x2c] sm:$0xf]
      %v568 = vld [vmem:[%s555 + $0x30] sm:$0xf]
      %v569 = vld [vmem:[%s555 + $0x34] sm:$0xf]
      %v570 = vld [vmem:[%s555 + $0x38] sm:$0xf]
      %v571 = vld [vmem:[%s555 + $0x3c] sm:$0xf]
      %v572 = vunpack.c.l.b16 %v456
      %v573 = vunpack.c.l.b16 %v470
      %v574 = vunpack.c.l.b16 %v484
      %v575 = vunpack.c.l.b16 %v498
      %v576 = vunpack.c.l.b16 %v512
      %v577 = vunpack.c.l.b16 %v526
      %v578 = vunpack.c.l.b16 %v540
      %v579 = vunpack.c.l.b16 %v554
      %v580 = vpack.c.b16 %v573, %v572
      %v581 = vpack.c.b16 %v575, %v574
      %v582 = vpack.c.b16 %v577, %v576
      %v583 = vpack.c.b16 %v579, %v578
      %v604 = vunpack.c.l.b16 %v556
      %v605 = vunpack.c.l.b16 %v557
      %v606 = vunpack.c.l.b16 %v558
      %v607 = vunpack.c.l.b16 %v559
      %v608 = vunpack.c.l.b16 %v560
      %v609 = vunpack.c.l.b16 %v561
      %v610 = vunpack.c.l.b16 %v562
      %v611 = vunpack.c.l.b16 %v563
      %v612 = vunpack.c.l.b16 %v564
      %v613 = vunpack.c.l.b16 %v565
      %v614 = vunpack.c.l.b16 %v566
      %v615 = vunpack.c.l.b16 %v567
      %v616 = vunpack.c.l.b16 %v568
      %v617 = vunpack.c.l.b16 %v569
      %v618 = vunpack.c.l.b16 %v570
      %v619 = vunpack.c.l.b16 %v571
      %v620 = vpack.c.b16 %v605, %v604
      %v621 = vpack.c.b16 %v607, %v606
      %v622 = vpack.c.b16 %v609, %v608
      %v623 = vpack.c.b16 %v611, %v610
      %v624 = vpack.c.b16 %v613, %v612
      %v625 = vpack.c.b16 %v615, %v614
      %v626 = vpack.c.b16 %v617, %v616
      %v627 = vpack.c.b16 %v619, %v618
      %636 = vmatprep.subr.bf16.mxu0 0
      %637 = vmatpush1.bf16.msra.mxu0 %v620
      %638 = vmatprep.subr.bf16.mxu0 0
      %639 = vmatpush1.bf16.msra.mxu0 %v621
      %640 = vmatprep.subr.bf16.mxu0 0
      %641 = vmatpush1.bf16.msra.mxu0 %v622
      %642 = vmatprep.subr.bf16.mxu0 0
      %643 = vmatpush1.bf16.msra.mxu0 %v623
      %644 = vmatprep.subr.bf16.mxu0 0
      %645 = vmatpush1.bf16.msra.mxu0 %v624
      %646 = vmatprep.subr.bf16.mxu0 0
      %647 = vmatpush1.bf16.msra.mxu0 %v625
      %648 = vmatprep.subr.bf16.mxu0 0
      %649 = vmatpush1.bf16.msra.mxu0 %v626
      %650 = vmatprep.subr.bf16.mxu0 0
      %651 = vmatpush1.bf16.msra.mxu0 %v627
      %652 = vmatprep.subr.bf16.mxu0 0
      %653 = vmatpush1.bf16.msra.mxu0 0
      %654 = vmatprep.subr.bf16.mxu0 0
      %655 = vmatpush1.bf16.msra.mxu0 0
      %656 = vmatprep.subr.bf16.mxu0 0
      %657 = vmatpush1.bf16.msra.mxu0 0
      %658 = vmatprep.subr.bf16.mxu0 0
      %659 = vmatpush1.bf16.msra.mxu0 0
      %660 = vmatprep.subr.bf16.mxu0 0
      %661 = vmatpush1.bf16.msra.mxu0 0
      %662 = vmatprep.subr.bf16.mxu0 0
      %663 = vmatpush1.bf16.msra.mxu0 0
      %664 = vmatprep.subr.bf16.mxu0 0
      %665 = vmatpush1.bf16.msra.mxu0 0
      %666 = vmatprep.subr.bf16.mxu0 0
      %667 = vmatpush1.bf16.msra.mxu0 0
      %668 = vmatprep.mubr.bf16.mxu0 0
      %669 = vmatmul.mubr.bf16.gmra.mrb[0].mxu0 %v580
      %v670 = vpop.f32.mrb[0].mxu0
      %v671 = vadd.f32 0.0, %v670
      %v672 = vpop.f32.mrb[0].mxu0
      %v673 = vpop.f32.mrb[0].mxu0
      %v674 = vadd.f32 0.0, %v673
      %v675 = vpop.f32.mrb[0].mxu0
      %676 = vmatprep.mubr.bf16.mxu0 0
      %677 = vmatmul.mubr.bf16.gmra.mrb[0].mxu0 %v581
      %v678 = vpop.f32.mrb[0].mxu0
      %v679 = vadd.f32 0.0, %v678
      %v680 = vpop.f32.mrb[0].mxu0
      %v681 = vpop.f32.mrb[0].mxu0
      %v682 = vadd.f32 0.0, %v681
      %v683 = vpop.f32.mrb[0].mxu0
      %684 = vmatprep.mubr.bf16.mxu0 0
      %685 = vmatmul.mubr.bf16.gmra.mrb[0].mxu0 %v582
      %v686 = vpop.f32.mrb[0].mxu0
      %v687 = vadd.f32 0.0, %v686
      %v688 = vpop.f32.mrb[0].mxu0
      %v689 = vpop.f32.mrb[0].mxu0
      %v690 = vadd.f32 0.0, %v689
      %v691 = vpop.f32.mrb[0].mxu0
      %692 = vmatprep.mubr.bf16.mxu0 0
      %693 = vmatmul.mubr.bf16.gmra.mrb[0].mxu0 %v583
      %v694 = vpop.f32.mrb[0].mxu0
      %v695 = vadd.f32 0.0, %v694
      %v696 = vpop.f32.mrb[0].mxu0
      %v697 = vpop.f32.mrb[0].mxu0
      %v698 = vadd.f32 0.0, %v697
      %v699 = vpop.f32.mrb[0].mxu0
      %700 = vdwg.mxu0
      %v709 = vunpack.c.l.b16 %v408
      %v710 = vunpack.c.l.b16 %v409
      %v711 = vunpack.c.l.b16 %v410
      %v712 = vunpack.c.l.b16 %v411
      %v713 = vunpack.c.l.b16 %v412
      %v714 = vunpack.c.l.b16 %v413
      %v715 = vunpack.c.l.b16 %v414
      %v716 = vunpack.c.l.b16 %v415
      %v717 = vpack.c.b16 %v710, %v709
      %v718 = vpack.c.b16 %v712, %v711
      %v719 = vpack.c.b16 %v714, %v713
      %v720 = vpack.c.b16 %v716, %v715
      %v741 = vunpack.c.l.b16 %v416
      %v742 = vunpack.c.l.b16 %v417
      %v743 = vunpack.c.l.b16 %v418
      %v744 = vunpack.c.l.b16 %v419
      %v745 = vunpack.c.l.b16 %v420
      %v746 = vunpack.c.l.b16 %v421
      %v747 = vunpack.c.l.b16 %v422
      %v748 = vunpack.c.l.b16 %v423
      %v749 = vunpack.c.l.b16 %v424
      %v750 = vunpack.c.l.b16 %v425
      %v751 = vunpack.c.l.b16 %v426
      %v752 = vunpack.c.l.b16 %v427
      %v753 = vunpack.c.l.b16 %v428
      %v754 = vunpack.c.l.b16 %v429
      %v755 = vunpack.c.l.b16 %v430
      %v756 = vunpack.c.l.b16 %v431
      %v757 = vpack.c.b16 %v742, %v741
      %v758 = vpack.c.b16 %v744, %v743
      %v759 = vpack.c.b16 %v746, %v745
      %v760 = vpack.c.b16 %v748, %v747
      %v761 = vpack.c.b16 %v750, %v749
      %v762 = vpack.c.b16 %v752, %v751
      %v763 = vpack.c.b16 %v754, %v753
      %v764 = vpack.c.b16 %v756, %v755
      %773 = vmatprep.subr.bf16.mxu0 0
      %774 = vmatpush1.bf16.msra.mxu0 %v757
      %775 = vmatprep.subr.bf16.mxu0 0
      %776 = vmatpush1.bf16.msra.mxu0 %v758
      %777 = vmatprep.subr.bf16.mxu0 0
      %778 = vmatpush1.bf16.msra.mxu0 %v759
      %779 = vmatprep.subr.bf16.mxu0 0
      %780 = vmatpush1.bf16.msra.mxu0 %v760
      %781 = vmatprep.subr.bf16.mxu0 0
      %782 = vmatpush1.bf16.msra.mxu0 %v761
      %783 = vmatprep.subr.bf16.mxu0 0
      %784 = vmatpush1.bf16.msra.mxu0 %v762
      %785 = vmatprep.subr.bf16.mxu0 0
      %786 = vmatpush1.bf16.msra.mxu0 %v763
      %787 = vmatprep.subr.bf16.mxu0 0
      %788 = vmatpush1.bf16.msra.mxu0 %v764
      %789 = vmatprep.subr.bf16.mxu0 0
      %790 = vmatpush1.bf16.msra.mxu0 0
      %791 = vmatprep.subr.bf16.mxu0 0
      %792 = vmatpush1.bf16.msra.mxu0 0
      %793 = vmatprep.subr.bf16.mxu0 0
      %794 = vmatpush1.bf16.msra.mxu0 0
      %795 = vmatprep.subr.bf16.mxu0 0
      %796 = vmatpush1.bf16.msra.mxu0 0
      %797 = vmatprep.subr.bf16.mxu0 0
      %798 = vmatpush1.bf16.msra.mxu0 0
      %799 = vmatprep.subr.bf16.mxu0 0
      %800 = vmatpush1.bf16.msra.mxu0 0
      %801 = vmatprep.subr.bf16.mxu0 0
      %802 = vmatpush1.bf16.msra.mxu0 0
      %803 = vmatprep.subr.bf16.mxu0 0
      %804 = vmatpush1.bf16.msra.mxu0 0
      %805 = vmatprep.mubr.bf16.mxu0 0
      %806 = vmatmul.mubr.bf16.gmra.mrb[0].mxu0 %v717
      %v807 = vpop.f32.mrb[0].mxu0
      %v808 = vadd.f32 %v671, %v807
      %v809 = vpop.f32.mrb[0].mxu0
      %v810 = vpop.f32.mrb[0].mxu0
      %v811 = vadd.f32 %v674, %v810
      %v812 = vpop.f32.mrb[0].mxu0
      %813 = vmatprep.mubr.bf16.mxu0 0
      %814 = vmatmul.mubr.bf16.gmra.mrb[0].mxu0 %v718
      %v815 = vpop.f32.mrb[0].mxu0
      %v816 = vadd.f32 %v679, %v815
      %v817 = vpop.f32.mrb[0].mxu0
      %v818 = vpop.f32.mrb[0].mxu0
      %v819 = vadd.f32 %v682, %v818
      %v820 = vpop.f32.mrb[0].mxu0
      %821 = vmatprep.mubr.bf16.mxu0 0
      %822 = vmatmul.mubr.bf16.gmra.mrb[0].mxu0 %v719
      %v823 = vpop.f32.mrb[0].mxu0
      %v824 = vadd.f32 %v687, %v823
      %v825 = vpop.f32.mrb[0].mxu0
      %v826 = vpop.f32.mrb[0].mxu0
      %v827 = vadd.f32 %v690, %v826
      %v828 = vpop.f32.mrb[0].mxu0
      %829 = vmatprep.mubr.bf16.mxu0 0
      %830 = vmatmul.mubr.bf16.gmra.mrb[0].mxu0 %v720
      %v831 = vpop.f32.mrb[0].mxu0
      %v832 = vadd.f32 %v695, %v831
      %v833 = vpop.f32.mrb[0].mxu0
      %v834 = vpop.f32.mrb[0].mxu0
      %v835 = vadd.f32 %v698, %v834
      %v836 = vpop.f32.mrb[0].mxu0
      %837 = vdwg.mxu0
      %v838 = vld [vmem:[#allocation2] sm:$0xe]
      %v839 = vld [vmem:[#allocation2 + $0x8] sm:$0xe]
      %v840 = vld [vmem:[#allocation2 + $0x10] sm:$0xe]
      %v841 = vld [vmem:[#allocation2 + $0x18] sm:$0xe]
      %v842 = vld [vmem:[#allocation2 + $0x20] sm:$0xe]
      %v843 = vld [vmem:[#allocation2 + $0x28] sm:$0xe]
      %v844 = vld [vmem:[#allocation2 + $0x30] sm:$0xe]
      %v845 = vld [vmem:[#allocation2 + $0x38] sm:$0xe]
      %vm862 = vcmask 1042432
      %vm863 = vcmask 1046532
      %vm864 = vmor %vm862, %vm863
      %v865 = vrot.slane %v838, 5
      %v866 = vrot.slane %v865, 4
      %v867 = vrot.slane %v432, 5
      %v868 = vsel %vm864, %v866, %v867
      %v869 = vrot.slane %v839, 5
      %v870 = vrot.slane %v869, 4
      %v871 = vrot.slane %v433, 5
      %v872 = vsel %vm864, %v870, %v871
      %v873 = vrot.slane %v840, 5
      %v874 = vrot.slane %v873, 4
      %v875 = vrot.slane %v434, 5
      %v876 = vsel %vm864, %v874, %v875
      %v877 = vrot.slane %v841, 5
      %v878 = vrot.slane %v877, 4
      %v879 = vrot.slane %v435, 5
      %v880 = vsel %vm864, %v878, %v879
      %v881 = vrot.slane %v842, 5
      %v882 = vrot.slane %v881, 4
      %v883 = vrot.slane %v436, 5
      %v884 = vsel %vm864, %v882, %v883
      %v885 = vrot.slane %v843, 5
      %v886 = vrot.slane %v885, 4
      %v887 = vrot.slane %v437, 5
      %v888 = vsel %vm864, %v886, %v887
      %v889 = vrot.slane %v844, 5
      %v890 = vrot.slane %v889, 4
      %v891 = vrot.slane %v438, 5
      %v892 = vsel %vm864, %v890, %v891
      %v893 = vrot.slane %v845, 5
      %v894 = vrot.slane %v893, 4
      %v895 = vrot.slane %v439, 5
      %v896 = vsel %vm864, %v894, %v895
      %s897 = scalar_lea.vmem %s1, 128
      %v898 = vld [vmem:[%s897] sm:$0xf]
      %v899 = vld [vmem:[%s897 + $0x4] sm:$0xf]
      %v900 = vld [vmem:[%s897 + $0x8] sm:$0xf]
      %v901 = vld [vmem:[%s897 + $0xc] sm:$0xf]
      %v902 = vld [vmem:[%s897 + $0x10] sm:$0xf]
      %v903 = vld [vmem:[%s897 + $0x14] sm:$0xf]
      %v904 = vld [vmem:[%s897 + $0x18] sm:$0xf]
      %v905 = vld [vmem:[%s897 + $0x1c] sm:$0xf]
      %v906 = vld [vmem:[%s897 + $0x20] sm:$0xf]
      %v907 = vld [vmem:[%s897 + $0x24] sm:$0xf]
      %v908 = vld [vmem:[%s897 + $0x28] sm:$0xf]
      %v909 = vld [vmem:[%s897 + $0x2c] sm:$0xf]
      %v910 = vld [vmem:[%s897 + $0x30] sm:$0xf]
      %v911 = vld [vmem:[%s897 + $0x34] sm:$0xf]
      %v912 = vld [vmem:[%s897 + $0x38] sm:$0xf]
      %v913 = vld [vmem:[%s897 + $0x3c] sm:$0xf]
      %v914 = vunpack.c.l.b16 %v868
      %v915 = vunpack.c.l.b16 %v872
      %v916 = vunpack.c.l.b16 %v876
      %v917 = vunpack.c.l.b16 %v880
      %v918 = vunpack.c.l.b16 %v884
      %v919 = vunpack.c.l.b16 %v888
      %v920 = vunpack.c.l.b16 %v892
      %v921 = vunpack.c.l.b16 %v896
      %v922 = vpack.c.b16 %v915, %v914
      %v923 = vpack.c.b16 %v917, %v916
      %v924 = vpack.c.b16 %v919, %v918
      %v925 = vpack.c.b16 %v921, %v920
      %v946 = vunpack.c.l.b16 %v898
      %v947 = vunpack.c.l.b16 %v899
      %v948 = vunpack.c.l.b16 %v900
      %v949 = vunpack.c.l.b16 %v901
      %v950 = vunpack.c.l.b16 %v902
      %v951 = vunpack.c.l.b16 %v903
      %v952 = vunpack.c.l.b16 %v904
      %v953 = vunpack.c.l.b16 %v905
      %v954 = vunpack.c.l.b16 %v906
      %v955 = vunpack.c.l.b16 %v907
      %v956 = vunpack.c.l.b16 %v908
      %v957 = vunpack.c.l.b16 %v909
      %v958 = vunpack.c.l.b16 %v910
      %v959 = vunpack.c.l.b16 %v911
      %v960 = vunpack.c.l.b16 %v912
      %v961 = vunpack.c.l.b16 %v913
      %v962 = vpack.c.b16 %v947, %v946
      %v963 = vpack.c.b16 %v949, %v948
      %v964 = vpack.c.b16 %v951, %v950
      %v965 = vpack.c.b16 %v953, %v952
      %v966 = vpack.c.b16 %v955, %v954
      %v967 = vpack.c.b16 %v957, %v956
      %v968 = vpack.c.b16 %v959, %v958
      %v969 = vpack.c.b16 %v961, %v960
      %978 = vmatprep.subr.bf16.mxu0 0
      %979 = vmatpush1.bf16.msra.mxu0 %v962
      %980 = vmatprep.subr.bf16.mxu0 0
      %981 = vmatpush1.bf16.msra.mxu0 %v963
      %982 = vmatprep.subr.bf16.mxu0 0
      %983 = vmatpush1.bf16.msra.mxu0 %v964
      %984 = vmatprep.subr.bf16.mxu0 0
      %985 = vmatpush1.bf16.msra.mxu0 %v965
      %986 = vmatprep.subr.bf16.mxu0 0
      %987 = vmatpush1.bf16.msra.mxu0 %v966
      %988 = vmatprep.subr.bf16.mxu0 0
      %989 = vmatpush1.bf16.msra.mxu0 %v967
      %990 = vmatprep.subr.bf16.mxu0 0
      %991 = vmatpush1.bf16.msra.mxu0 %v968
      %992 = vmatprep.subr.bf16.mxu0 0
      %993 = vmatpush1.bf16.msra.mxu0 %v969
      %994 = vmatprep.subr.bf16.mxu0 0
      %995 = vmatpush1.bf16.msra.mxu0 0
      %996 = vmatprep.subr.bf16.mxu0 0
      %997 = vmatpush1.bf16.msra.mxu0 0
      %998 = vmatprep.subr.bf16.mxu0 0
      %999 = vmatpush1.bf16.msra.mxu0 0
      %1000 = vmatprep.subr.bf16.mxu0 0
      %1001 = vmatpush1.bf16.msra.mxu0 0
      %1002 = vmatprep.subr.bf16.mxu0 0
      %1003 = vmatpush1.bf16.msra.mxu0 0
      %1004 = vmatprep.subr.bf16.mxu0 0
      %1005 = vmatpush1.bf16.msra.mxu0 0
      %1006 = vmatprep.subr.bf16.mxu0 0
      %1007 = vmatpush1.bf16.msra.mxu0 0
      %1008 = vmatprep.subr.bf16.mxu0 0
      %1009 = vmatpush1.bf16.msra.mxu0 0
      %1010 = vmatprep.mubr.bf16.mxu0 0
      %1011 = vmatmul.mubr.bf16.gmra.mrb[0].mxu0 %v922
      %v1012 = vpop.f32.mrb[0].mxu0
      %v1013 = vadd.f32 0.0, %v1012
      %v1014 = vpop.f32.mrb[0].mxu0
      %v1015 = vpop.f32.mrb[0].mxu0
      %v1016 = vadd.f32 0.0, %v1015
      %v1017 = vpop.f32.mrb[0].mxu0
      %1018 = vmatprep.mubr.bf16.mxu0 0
      %1019 = vmatmul.mubr.bf16.gmra.mrb[0].mxu0 %v923
      %v1020 = vpop.f32.mrb[0].mxu0
      %v1021 = vadd.f32 0.0, %v1020
      %v1022 = vpop.f32.mrb[0].mxu0
      %v1023 = vpop.f32.mrb[0].mxu0
      %v1024 = vadd.f32 0.0, %v1023
      %v1025 = vpop.f32.mrb[0].mxu0
      %1026 = vmatprep.mubr.bf16.mxu0 0
      %1027 = vmatmul.mubr.bf16.gmra.mrb[0].mxu0 %v924
      %v1028 = vpop.f32.mrb[0].mxu0
      %v1029 = vadd.f32 0.0, %v1028
      %v1030 = vpop.f32.mrb[0].mxu0
      %v1031 = vpop.f32.mrb[0].mxu0
      %v1032 = vadd.f32 0.0, %v1031
      %v1033 = vpop.f32.mrb[0].mxu0
      %1034 = vmatprep.mubr.bf16.mxu0 0
      %1035 = vmatmul.mubr.bf16.gmra.mrb[0].mxu0 %v925
      %v1036 = vpop.f32.mrb[0].mxu0
      %v1037 = vadd.f32 0.0, %v1036
      %v1038 = vpop.f32.mrb[0].mxu0
      %v1039 = vpop.f32.mrb[0].mxu0
      %v1040 = vadd.f32 0.0, %v1039
      %v1041 = vpop.f32.mrb[0].mxu0
      %1042 = vdwg.mxu0
      %v1043 = vadd.f32 %v808, %v1013
      %v1044 = vadd.f32 %v811, %v1016
      %v1045 = vadd.f32 %v816, %v1021
      %v1046 = vadd.f32 %v819, %v1024
      %v1047 = vadd.f32 %v824, %v1029
      %v1048 = vadd.f32 %v827, %v1032
      %v1049 = vadd.f32 %v832, %v1037
      %v1050 = vadd.f32 %v835, %v1040
      %v1051 = vld [vmem:[%s357] sm:$0xf]
      %v1052 = vld [vmem:[%s357 + $0x8] sm:$0xf]
      %v1053 = vld [vmem:[%s357 + $0x10] sm:$0xf]
      %v1054 = vld [vmem:[%s357 + $0x18] sm:$0xf]
      %v1055 = vld [vmem:[%s357 + $0x20] sm:$0xf]
      %v1056 = vld [vmem:[%s357 + $0x28] sm:$0xf]
      %v1057 = vld [vmem:[%s357 + $0x30] sm:$0xf]
      %v1058 = vld [vmem:[%s357 + $0x38] sm:$0xf]
      %s1059 = scalar_lea.vmem %s1, 192
      %v1060 = vld [vmem:[%s1059] sm:$0xf]
      %v1061 = vld [vmem:[%s1059 + $0x4] sm:$0xf]
      %v1062 = vld [vmem:[%s1059 + $0x8] sm:$0xf]
      %v1063 = vld [vmem:[%s1059 + $0xc] sm:$0xf]
      %v1064 = vld [vmem:[%s1059 + $0x10] sm:$0xf]
      %v1065 = vld [vmem:[%s1059 + $0x14] sm:$0xf]
      %v1066 = vld [vmem:[%s1059 + $0x18] sm:$0xf]
      %v1067 = vld [vmem:[%s1059 + $0x1c] sm:$0xf]
      %v1068 = vld [vmem:[%s1059 + $0x20] sm:$0xf]
      %v1069 = vld [vmem:[%s1059 + $0x24] sm:$0xf]
      %v1070 = vld [vmem:[%s1059 + $0x28] sm:$0xf]
      %v1071 = vld [vmem:[%s1059 + $0x2c] sm:$0xf]
      %v1072 = vld [vmem:[%s1059 + $0x30] sm:$0xf]
      %v1073 = vld [vmem:[%s1059 + $0x34] sm:$0xf]
      %v1074 = vld [vmem:[%s1059 + $0x38] sm:$0xf]
      %v1075 = vld [vmem:[%s1059 + $0x3c] sm:$0xf]
      %v1084 = vunpack.c.l.b16 %v1051
      %v1085 = vunpack.c.l.b16 %v1052
      %v1086 = vunpack.c.l.b16 %v1053
      %v1087 = vunpack.c.l.b16 %v1054
      %v1088 = vunpack.c.l.b16 %v1055
      %v1089 = vunpack.c.l.b16 %v1056
      %v1090 = vunpack.c.l.b16 %v1057
      %v1091 = vunpack.c.l.b16 %v1058
      %v1092 = vpack.c.b16 %v1085, %v1084
      %v1093 = vpack.c.b16 %v1087, %v1086
      %v1094 = vpack.c.b16 %v1089, %v1088
      %v1095 = vpack.c.b16 %v1091, %v1090
      %v1116 = vunpack.c.l.b16 %v1060
      %v1117 = vunpack.c.l.b16 %v1061
      %v1118 = vunpack.c.l.b16 %v1062
      %v1119 = vunpack.c.l.b16 %v1063
      %v1120 = vunpack.c.l.b16 %v1064
      %v1121 = vunpack.c.l.b16 %v1065
      %v1122 = vunpack.c.l.b16 %v1066
      %v1123 = vunpack.c.l.b16 %v1067
      %v1124 = vunpack.c.l.b16 %v1068
      %v1125 = vunpack.c.l.b16 %v1069
      %v1126 = vunpack.c.l.b16 %v1070
      %v1127 = vunpack.c.l.b16 %v1071
      %v1128 = vunpack.c.l.b16 %v1072
      %v1129 = vunpack.c.l.b16 %v1073
      %v1130 = vunpack.c.l.b16 %v1074
      %v1131 = vunpack.c.l.b16 %v1075
      %v1132 = vpack.c.b16 %v1117, %v1116
      %v1133 = vpack.c.b16 %v1119, %v1118
      %v1134 = vpack.c.b16 %v1121, %v1120
      %v1135 = vpack.c.b16 %v1123, %v1122
      %v1136 = vpack.c.b16 %v1125, %v1124
      %v1137 = vpack.c.b16 %v1127, %v1126
      %v1138 = vpack.c.b16 %v1129, %v1128
      %v1139 = vpack.c.b16 %v1131, %v1130
      %1148 = vmatprep.subr.bf16.mxu0 0
      %1149 = vmatpush1.bf16.msra.mxu0 %v1132
      %1150 = vmatprep.subr.bf16.mxu0 0
      %1151 = vmatpush1.bf16.msra.mxu0 %v1133
      %1152 = vmatprep.subr.bf16.mxu0 0
      %1153 = vmatpush1.bf16.msra.mxu0 %v1134
      %1154 = vmatprep.subr.bf16.mxu0 0
      %1155 = vmatpush1.bf16.msra.mxu0 %v1135
      %1156 = vmatprep.subr.bf16.mxu0 0
      %1157 = vmatpush1.bf16.msra.mxu0 %v1136
      %1158 = vmatprep.subr.bf16.mxu0 0
      %1159 = vmatpush1.bf16.msra.mxu0 %v1137
      %1160 = vmatprep.subr.bf16.mxu0 0
      %1161 = vmatpush1.bf16.msra.mxu0 %v1138
      %1162 = vmatprep.subr.bf16.mxu0 0
      %1163 = vmatpush1.bf16.msra.mxu0 %v1139
      %1164 = vmatprep.subr.bf16.mxu0 0
      %1165 = vmatpush1.bf16.msra.mxu0 0
      %1166 = vmatprep.subr.bf16.mxu0 0
      %1167 = vmatpush1.bf16.msra.mxu0 0
      %1168 = vmatprep.subr.bf16.mxu0 0
      %1169 = vmatpush1.bf16.msra.mxu0 0
      %1170 = vmatprep.subr.bf16.mxu0 0
      %1171 = vmatpush1.bf16.msra.mxu0 0
      %1172 = vmatprep.subr.bf16.mxu0 0
      %1173 = vmatpush1.bf16.msra.mxu0 0
      %1174 = vmatprep.subr.bf16.mxu0 0
      %1175 = vmatpush1.bf16.msra.mxu0 0
      %1176 = vmatprep.subr.bf16.mxu0 0
      %1177 = vmatpush1.bf16.msra.mxu0 0
      %1178 = vmatprep.subr.bf16.mxu0 0
      %1179 = vmatpush1.bf16.msra.mxu0 0
      %1180 = vmatprep.mubr.bf16.mxu0 0
      %1181 = vmatmul.mubr.bf16.gmra.mrb[0].mxu0 %v1092
      %v1182 = vpop.f32.mrb[0].mxu0
      %v1183 = vadd.f32 0.0, %v1182
      %v1184 = vpop.f32.mrb[0].mxu0
      %v1185 = vpop.f32.mrb[0].mxu0
      %v1186 = vadd.f32 0.0, %v1185
      %v1187 = vpop.f32.mrb[0].mxu0
      %1188 = vmatprep.mubr.bf16.mxu0 0
      %1189 = vmatmul.mubr.bf16.gmra.mrb[0].mxu0 %v1093
      %v1190 = vpop.f32.mrb[0].mxu0
      %v1191 = vadd.f32 0.0, %v1190
      %v1192 = vpop.f32.mrb[0].mxu0
      %v1193 = vpop.f32.mrb[0].mxu0
      %v1194 = vadd.f32 0.0, %v1193
      %v1195 = vpop.f32.mrb[0].mxu0
      %1196 = vmatprep.mubr.bf16.mxu0 0
      %1197 = vmatmul.mubr.bf16.gmra.mrb[0].mxu0 %v1094
      %v1198 = vpop.f32.mrb[0].mxu0
      %v1199 = vadd.f32 0.0, %v1198
      %v1200 = vpop.f32.mrb[0].mxu0
      %v1201 = vpop.f32.mrb[0].mxu0
      %v1202 = vadd.f32 0.0, %v1201
      %v1203 = vpop.f32.mrb[0].mxu0
      %1204 = vmatprep.mubr.bf16.mxu0 0
      %1205 = vmatmul.mubr.bf16.gmra.mrb[0].mxu0 %v1095
      %v1206 = vpop.f32.mrb[0].mxu0
      %v1207 = vadd.f32 0.0, %v1206
      %v1208 = vpop.f32.mrb[0].mxu0
      %v1209 = vpop.f32.mrb[0].mxu0
      %v1210 = vadd.f32 0.0, %v1209
      %v1211 = vpop.f32.mrb[0].mxu0
      %1212 = vdwg.mxu0
      %v1213 = vadd.f32 %v1043, %v1183
      %v1214 = vadd.f32 %v1044, %v1186
      %v1215 = vadd.f32 %v1045, %v1191
      %v1216 = vadd.f32 %v1046, %v1194
      %v1217 = vadd.f32 %v1047, %v1199
      %v1218 = vadd.f32 %v1048, %v1202
      %v1219 = vadd.f32 %v1049, %v1207
      %v1220 = vadd.f32 %v1050, %v1210
      %v1221 = vld [vmem:[%s357] sm:$0xf]
      %v1222 = vld [vmem:[%s357 + $0x4] sm:$0x1]
      %v1223 = vld [vmem:[%s357 + $0x8] sm:$0xf]
      %v1224 = vld [vmem:[%s357 + $0xc] sm:$0x1]
      %v1225 = vld [vmem:[%s357 + $0x10] sm:$0xf]
      %v1226 = vld [vmem:[%s357 + $0x14] sm:$0x1]
      %v1227 = vld [vmem:[%s357 + $0x18] sm:$0xf]
      %v1228 = vld [vmem:[%s357 + $0x1c] sm:$0x1]
      %v1229 = vld [vmem:[%s357 + $0x20] sm:$0xf]
      %v1230 = vld [vmem:[%s357 + $0x24] sm:$0x1]
      %v1231 = vld [vmem:[%s357 + $0x28] sm:$0xf]
      %v1232 = vld [vmem:[%s357 + $0x2c] sm:$0x1]
      %v1233 = vld [vmem:[%s357 + $0x30] sm:$0xf]
      %v1234 = vld [vmem:[%s357 + $0x34] sm:$0x1]
      %v1235 = vld [vmem:[%s357 + $0x38] sm:$0xf]
      %v1236 = vld [vmem:[%s357 + $0x3c] sm:$0x1]
      %v1238 = vshrl.u32 %v1221, 16
      %v1240 = vrot.slane %v1238, 4
      %v1241 = vshll.u32 %v1221, 16
      %v1243 = vrot.slane %v1241, 5
      %v1244 = vor.u32 %v1240, %v1243
      %v1245 = vrot.slane %v1244, 4
      %v1247 = vshll.u32 %v1222, 16
      %v1249 = vrot.slane %v1247, 5
      %v1250 = vsel %vm442, %v1245, %v1249
      %v1252 = vshrl.u32 %v1223, 16
      %v1254 = vrot.slane %v1252, 4
      %v1255 = vshll.u32 %v1223, 16
      %v1257 = vrot.slane %v1255, 5
      %v1258 = vor.u32 %v1254, %v1257
      %v1259 = vrot.slane %v1258, 4
      %v1261 = vshll.u32 %v1224, 16
      %v1263 = vrot.slane %v1261, 5
      %v1264 = vsel %vm442, %v1259, %v1263
      %v1266 = vshrl.u32 %v1225, 16
      %v1268 = vrot.slane %v1266, 4
      %v1269 = vshll.u32 %v1225, 16
      %v1271 = vrot.slane %v1269, 5
      %v1272 = vor.u32 %v1268, %v1271
      %v1273 = vrot.slane %v1272, 4
      %v1275 = vshll.u32 %v1226, 16
      %v1277 = vrot.slane %v1275, 5
      %v1278 = vsel %vm442, %v1273, %v1277
      %v1280 = vshrl.u32 %v1227, 16
      %v1282 = vrot.slane %v1280, 4
      %v1283 = vshll.u32 %v1227, 16
      %v1285 = vrot.slane %v1283, 5
      %v1286 = vor.u32 %v1282, %v1285
      %v1287 = vrot.slane %v1286, 4
      %v1289 = vshll.u32 %v1228, 16
      %v1291 = vrot.slane %v1289, 5
      %v1292 = vsel %vm442, %v1287, %v1291
      %v1294 = vshrl.u32 %v1229, 16
      %v1296 = vrot.slane %v1294, 4
      %v1297 = vshll.u32 %v1229, 16
      %v1299 = vrot.slane %v1297, 5
      %v1300 = vor.u32 %v1296, %v1299
      %v1301 = vrot.slane %v1300, 4
      %v1303 = vshll.u32 %v1230, 16
      %v1305 = vrot.slane %v1303, 5
      %v1306 = vsel %vm442, %v1301, %v1305
      %v1308 = vshrl.u32 %v1231, 16
      %v1310 = vrot.slane %v1308, 4
      %v1311 = vshll.u32 %v1231, 16
      %v1313 = vrot.slane %v1311, 5
      %v1314 = vor.u32 %v1310, %v1313
      %v1315 = vrot.slane %v1314, 4
      %v1317 = vshll.u32 %v1232, 16
      %v1319 = vrot.slane %v1317, 5
      %v1320 = vsel %vm442, %v1315, %v1319
      %v1322 = vshrl.u32 %v1233, 16
      %v1324 = vrot.slane %v1322, 4
      %v1325 = vshll.u32 %v1233, 16
      %v1327 = vrot.slane %v1325, 5
      %v1328 = vor.u32 %v1324, %v1327
      %v1329 = vrot.slane %v1328, 4
      %v1331 = vshll.u32 %v1234, 16
      %v1333 = vrot.slane %v1331, 5
      %v1334 = vsel %vm442, %v1329, %v1333
      %v1336 = vshrl.u32 %v1235, 16
      %v1338 = vrot.slane %v1336, 4
      %v1339 = vshll.u32 %v1235, 16
      %v1341 = vrot.slane %v1339, 5
      %v1342 = vor.u32 %v1338, %v1341
      %v1343 = vrot.slane %v1342, 4
      %v1345 = vshll.u32 %v1236, 16
      %v1347 = vrot.slane %v1345, 5
      %v1348 = vsel %vm442, %v1343, %v1347
      %s1349 = scalar_lea.vmem %s1, 256
      %v1350 = vld [vmem:[%s1349] sm:$0xf]
      %v1351 = vld [vmem:[%s1349 + $0x4] sm:$0xf]
      %v1352 = vld [vmem:[%s1349 + $0x8] sm:$0xf]
      %v1353 = vld [vmem:[%s1349 + $0xc] sm:$0xf]
      %v1354 = vld [vmem:[%s1349 + $0x10] sm:$0xf]
      %v1355 = vld [vmem:[%s1349 + $0x14] sm:$0xf]
      %v1356 = vld [vmem:[%s1349 + $0x18] sm:$0xf]
      %v1357 = vld [vmem:[%s1349 + $0x1c] sm:$0xf]
      %v1358 = vld [vmem:[%s1349 + $0x20] sm:$0xf]
      %v1359 = vld [vmem:[%s1349 + $0x24] sm:$0xf]
      %v1360 = vld [vmem:[%s1349 + $0x28] sm:$0xf]
      %v1361 = vld [vmem:[%s1349 + $0x2c] sm:$0xf]
      %v1362 = vld [vmem:[%s1349 + $0x30] sm:$0xf]
      %v1363 = vld [vmem:[%s1349 + $0x34] sm:$0xf]
      %v1364 = vld [vmem:[%s1349 + $0x38] sm:$0xf]
      %v1365 = vld [vmem:[%s1349 + $0x3c] sm:$0xf]
      %v1366 = vunpack.c.l.b16 %v1250
      %v1367 = vunpack.c.l.b16 %v1264
      %v1368 = vunpack.c.l.b16 %v1278
      %v1369 = vunpack.c.l.b16 %v1292
      %v1370 = vunpack.c.l.b16 %v1306
      %v1371 = vunpack.c.l.b16 %v1320
      %v1372 = vunpack.c.l.b16 %v1334
      %v1373 = vunpack.c.l.b16 %v1348
      %v1374 = vpack.c.b16 %v1367, %v1366
      %v1375 = vpack.c.b16 %v1369, %v1368
      %v1376 = vpack.c.b16 %v1371, %v1370
      %v1377 = vpack.c.b16 %v1373, %v1372
      %v1398 = vunpack.c.l.b16 %v1350
      %v1399 = vunpack.c.l.b16 %v1351
      %v1400 = vunpack.c.l.b16 %v1352
      %v1401 = vunpack.c.l.b16 %v1353
      %v1402 = vunpack.c.l.b16 %v1354
      %v1403 = vunpack.c.l.b16 %v1355
      %v1404 = vunpack.c.l.b16 %v1356
      %v1405 = vunpack.c.l.b16 %v1357
      %v1406 = vunpack.c.l.b16 %v1358
      %v1407 = vunpack.c.l.b16 %v1359
      %v1408 = vunpack.c.l.b16 %v1360
      %v1409 = vunpack.c.l.b16 %v1361
      %v1410 = vunpack.c.l.b16 %v1362
      %v1411 = vunpack.c.l.b16 %v1363
      %v1412 = vunpack.c.l.b16 %v1364
      %v1413 = vunpack.c.l.b16 %v1365
      %v1414 = vpack.c.b16 %v1399, %v1398
      %v1415 = vpack.c.b16 %v1401, %v1400
      %v1416 = vpack.c.b16 %v1403, %v1402
      %v1417 = vpack.c.b16 %v1405, %v1404
      %v1418 = vpack.c.b16 %v1407, %v1406
      %v1419 = vpack.c.b16 %v1409, %v1408
      %v1420 = vpack.c.b16 %v1411, %v1410
      %v1421 = vpack.c.b16 %v1413, %v1412
      %1430 = vmatprep.subr.bf16.mxu0 0
      %1431 = vmatpush1.bf16.msra.mxu0 %v1414
      %1432 = vmatprep.subr.bf16.mxu0 0
      %1433 = vmatpush1.bf16.msra.mxu0 %v1415
      %1434 = vmatprep.subr.bf16.mxu0 0
      %1435 = vmatpush1.bf16.msra.mxu0 %v1416
      %1436 = vmatprep.subr.bf16.mxu0 0
      %1437 = vmatpush1.bf16.msra.mxu0 %v1417
      %1438 = vmatprep.subr.bf16.mxu0 0
      %1439 = vmatpush1.bf16.msra.mxu0 %v1418
      %1440 = vmatprep.subr.bf16.mxu0 0
      %1441 = vmatpush1.bf16.msra.mxu0 %v1419
      %1442 = vmatprep.subr.bf16.mxu0 0
      %1443 = vmatpush1.bf16.msra.mxu0 %v1420
      %1444 = vmatprep.subr.bf16.mxu0 0
      %1445 = vmatpush1.bf16.msra.mxu0 %v1421
      %1446 = vmatprep.subr.bf16.mxu0 0
      %1447 = vmatpush1.bf16.msra.mxu0 0
      %1448 = vmatprep.subr.bf16.mxu0 0
      %1449 = vmatpush1.bf16.msra.mxu0 0
      %1450 = vmatprep.subr.bf16.mxu0 0
      %1451 = vmatpush1.bf16.msra.mxu0 0
      %1452 = vmatprep.subr.bf16.mxu0 0
      %1453 = vmatpush1.bf16.msra.mxu0 0
      %1454 = vmatprep.subr.bf16.mxu0 0
      %1455 = vmatpush1.bf16.msra.mxu0 0
      %1456 = vmatprep.subr.bf16.mxu0 0
      %1457 = vmatpush1.bf16.msra.mxu0 0
      %1458 = vmatprep.subr.bf16.mxu0 0
      %1459 = vmatpush1.bf16.msra.mxu0 0
      %1460 = vmatprep.subr.bf16.mxu0 0
      %1461 = vmatpush1.bf16.msra.mxu0 0
      %1462 = vmatprep.mubr.bf16.mxu0 0
      %1463 = vmatmul.mubr.bf16.gmra.mrb[0].mxu0 %v1374
      %v1464 = vpop.f32.mrb[0].mxu0
      %v1465 = vadd.f32 0.0, %v1464
      %v1466 = vpop.f32.mrb[0].mxu0
      %v1467 = vpop.f32.mrb[0].mxu0
      %v1468 = vadd.f32 0.0, %v1467
      %v1469 = vpop.f32.mrb[0].mxu0
      %1470 = vmatprep.mubr.bf16.mxu0 0
      %1471 = vmatmul.mubr.bf16.gmra.mrb[0].mxu0 %v1375
      %v1472 = vpop.f32.mrb[0].mxu0
      %v1473 = vadd.f32 0.0, %v1472
      %v1474 = vpop.f32.mrb[0].mxu0
      %v1475 = vpop.f32.mrb[0].mxu0
      %v1476 = vadd.f32 0.0, %v1475
      %v1477 = vpop.f32.mrb[0].mxu0
      %1478 = vmatprep.mubr.bf16.mxu0 0
      %1479 = vmatmul.mubr.bf16.gmra.mrb[0].mxu0 %v1376
      %v1480 = vpop.f32.mrb[0].mxu0
      %v1481 = vadd.f32 0.0, %v1480
      %v1482 = vpop.f32.mrb[0].mxu0
      %v1483 = vpop.f32.mrb[0].mxu0
      %v1484 = vadd.f32 0.0, %v1483
      %v1485 = vpop.f32.mrb[0].mxu0
      %1486 = vmatprep.mubr.bf16.mxu0 0
      %1487 = vmatmul.mubr.bf16.gmra.mrb[0].mxu0 %v1377
      %v1488 = vpop.f32.mrb[0].mxu0
      %v1489 = vadd.f32 0.0, %v1488
      %v1490 = vpop.f32.mrb[0].mxu0
      %v1491 = vpop.f32.mrb[0].mxu0
      %v1492 = vadd.f32 0.0, %v1491
      %v1493 = vpop.f32.mrb[0].mxu0
      %1494 = vdwg.mxu0
      %v1495 = vadd.f32 %v1213, %v1465
      %v1496 = vadd.f32 %v1214, %v1468
      %v1497 = vadd.f32 %v1215, %v1473
      %v1498 = vadd.f32 %v1216, %v1476
      %v1499 = vadd.f32 %v1217, %v1481
      %v1500 = vadd.f32 %v1218, %v1484
      %v1501 = vadd.f32 %v1219, %v1489
      %v1502 = vadd.f32 %v1220, %v1492
      %v1503 = vld [vmem:[%s357] sm:$0xe]
      %v1504 = vld [vmem:[%s357 + $0x8] sm:$0xe]
      %v1505 = vld [vmem:[%s357 + $0x10] sm:$0xe]
      %v1506 = vld [vmem:[%s357 + $0x18] sm:$0xe]
      %v1507 = vld [vmem:[%s357 + $0x20] sm:$0xe]
      %v1508 = vld [vmem:[%s357 + $0x28] sm:$0xe]
      %v1509 = vld [vmem:[%s357 + $0x30] sm:$0xe]
      %v1510 = vld [vmem:[%s357 + $0x38] sm:$0xe]
      %v1527 = vrot.slane %v1503, 5
      %v1528 = vrot.slane %v1527, 4
      %v1529 = vrot.slane %v1222, 5
      %v1530 = vsel %vm864, %v1528, %v1529
      %v1531 = vrot.slane %v1504, 5
      %v1532 = vrot.slane %v1531, 4
      %v1533 = vrot.slane %v1224, 5
      %v1534 = vsel %vm864, %v1532, %v1533
      %v1535 = vrot.slane %v1505, 5
      %v1536 = vrot.slane %v1535, 4
      %v1537 = vrot.slane %v1226, 5
      %v1538 = vsel %vm864, %v1536, %v1537
      %v1539 = vrot.slane %v1506, 5
      %v1540 = vrot.slane %v1539, 4
      %v1541 = vrot.slane %v1228, 5
      %v1542 = vsel %vm864, %v1540, %v1541
      %v1543 = vrot.slane %v1507, 5
      %v1544 = vrot.slane %v1543, 4
      %v1545 = vrot.slane %v1230, 5
      %v1546 = vsel %vm864, %v1544, %v1545
      %v1547 = vrot.slane %v1508, 5
      %v1548 = vrot.slane %v1547, 4
      %v1549 = vrot.slane %v1232, 5
      %v1550 = vsel %vm864, %v1548, %v1549
      %v1551 = vrot.slane %v1509, 5
      %v1552 = vrot.slane %v1551, 4
      %v1553 = vrot.slane %v1234, 5
      %v1554 = vsel %vm864, %v1552, %v1553
      %v1555 = vrot.slane %v1510, 5
      %v1556 = vrot.slane %v1555, 4
      %v1557 = vrot.slane %v1236, 5
      %v1558 = vsel %vm864, %v1556, %v1557
      %s1559 = scalar_lea.vmem %s1, 320
      %v1560 = vld [vmem:[%s1559] sm:$0xf]
      %v1561 = vld [vmem:[%s1559 + $0x4] sm:$0xf]
      %v1562 = vld [vmem:[%s1559 + $0x8] sm:$0xf]
      %v1563 = vld [vmem:[%s1559 + $0xc] sm:$0xf]
      %v1564 = vld [vmem:[%s1559 + $0x10] sm:$0xf]
      %v1565 = vld [vmem:[%s1559 + $0x14] sm:$0xf]
      %v1566 = vld [vmem:[%s1559 + $0x18] sm:$0xf]
      %v1567 = vld [vmem:[%s1559 + $0x1c] sm:$0xf]
      %v1568 = vld [vmem:[%s1559 + $0x20] sm:$0xf]
      %v1569 = vld [vmem:[%s1559 + $0x24] sm:$0xf]
      %v1570 = vld [vmem:[%s1559 + $0x28] sm:$0xf]
      %v1571 = vld [vmem:[%s1559 + $0x2c] sm:$0xf]
      %v1572 = vld [vmem:[%s1559 + $0x30] sm:$0xf]
      %v1573 = vld [vmem:[%s1559 + $0x34] sm:$0xf]
      %v1574 = vld [vmem:[%s1559 + $0x38] sm:$0xf]
      %v1575 = vld [vmem:[%s1559 + $0x3c] sm:$0xf]
      %v1576 = vunpack.c.l.b16 %v1530
      %v1577 = vunpack.c.l.b16 %v1534
      %v1578 = vunpack.c.l.b16 %v1538
      %v1579 = vunpack.c.l.b16 %v1542
      %v1580 = vunpack.c.l.b16 %v1546
      %v1581 = vunpack.c.l.b16 %v1550
      %v1582 = vunpack.c.l.b16 %v1554
      %v1583 = vunpack.c.l.b16 %v1558
      %v1584 = vpack.c.b16 %v1577, %v1576
      %v1585 = vpack.c.b16 %v1579, %v1578
      %v1586 = vpack.c.b16 %v1581, %v1580
      %v1587 = vpack.c.b16 %v1583, %v1582
      %v1608 = vunpack.c.l.b16 %v1560
      %v1609 = vunpack.c.l.b16 %v1561
      %v1610 = vunpack.c.l.b16 %v1562
      %v1611 = vunpack.c.l.b16 %v1563
      %v1612 = vunpack.c.l.b16 %v1564
      %v1613 = vunpack.c.l.b16 %v1565
      %v1614 = vunpack.c.l.b16 %v1566
      %v1615 = vunpack.c.l.b16 %v1567
      %v1616 = vunpack.c.l.b16 %v1568
      %v1617 = vunpack.c.l.b16 %v1569
      %v1618 = vunpack.c.l.b16 %v1570
      %v1619 = vunpack.c.l.b16 %v1571
      %v1620 = vunpack.c.l.b16 %v1572
      %v1621 = vunpack.c.l.b16 %v1573
      %v1622 = vunpack.c.l.b16 %v1574
      %v1623 = vunpack.c.l.b16 %v1575
      %v1624 = vpack.c.b16 %v1609, %v1608
      %v1625 = vpack.c.b16 %v1611, %v1610
      %v1626 = vpack.c.b16 %v1613, %v1612
      %v1627 = vpack.c.b16 %v1615, %v1614
      %v1628 = vpack.c.b16 %v1617, %v1616
      %v1629 = vpack.c.b16 %v1619, %v1618
      %v1630 = vpack.c.b16 %v1621, %v1620
      %v1631 = vpack.c.b16 %v1623, %v1622
      %1640 = vmatprep.subr.bf16.mxu0 0
      %1641 = vmatpush1.bf16.msra.mxu0 %v1624
      %1642 = vmatprep.subr.bf16.mxu0 0
      %1643 = vmatpush1.bf16.msra.mxu0 %v1625
      %1644 = vmatprep.subr.bf16.mxu0 0
      %1645 = vmatpush1.bf16.msra.mxu0 %v1626
      %1646 = vmatprep.subr.bf16.mxu0 0
      %1647 = vmatpush1.bf16.msra.mxu0 %v1627
      %1648 = vmatprep.subr.bf16.mxu0 0
      %1649 = vmatpush1.bf16.msra.mxu0 %v1628
      %1650 = vmatprep.subr.bf16.mxu0 0
      %1651 = vmatpush1.bf16.msra.mxu0 %v1629
      %1652 = vmatprep.subr.bf16.mxu0 0
      %1653 = vmatpush1.bf16.msra.mxu0 %v1630
      %1654 = vmatprep.subr.bf16.mxu0 0
      %1655 = vmatpush1.bf16.msra.mxu0 %v1631
      %1656 = vmatprep.subr.bf16.mxu0 0
      %1657 = vmatpush1.bf16.msra.mxu0 0
      %1658 = vmatprep.subr.bf16.mxu0 0
      %1659 = vmatpush1.bf16.msra.mxu0 0
      %1660 = vmatprep.subr.bf16.mxu0 0
      %1661 = vmatpush1.bf16.msra.mxu0 0
      %1662 = vmatprep.subr.bf16.mxu0 0
      %1663 = vmatpush1.bf16.msra.mxu0 0
      %1664 = vmatprep.subr.bf16.mxu0 0
      %1665 = vmatpush1.bf16.msra.mxu0 0
      %1666 = vmatprep.subr.bf16.mxu0 0
      %1667 = vmatpush1.bf16.msra.mxu0 0
      %1668 = vmatprep.subr.bf16.mxu0 0
      %1669 = vmatpush1.bf16.msra.mxu0 0
      %1670 = vmatprep.subr.bf16.mxu0 0
      %1671 = vmatpush1.bf16.msra.mxu0 0
      %1672 = vmatprep.mubr.bf16.mxu0 0
      %1673 = vmatmul.mubr.bf16.gmra.mrb[0].mxu0 %v1584
      %v1674 = vpop.f32.mrb[0].mxu0
      %v1675 = vadd.f32 0.0, %v1674
      %v1676 = vpop.f32.mrb[0].mxu0
      %v1677 = vpop.f32.mrb[0].mxu0
      %v1678 = vadd.f32 0.0, %v1677
      %v1679 = vpop.f32.mrb[0].mxu0
      %1680 = vmatprep.mubr.bf16.mxu0 0
      %1681 = vmatmul.mubr.bf16.gmra.mrb[0].mxu0 %v1585
      %v1682 = vpop.f32.mrb[0].mxu0
      %v1683 = vadd.f32 0.0, %v1682
      %v1684 = vpop.f32.mrb[0].mxu0
      %v1685 = vpop.f32.mrb[0].mxu0
      %v1686 = vadd.f32 0.0, %v1685
      %v1687 = vpop.f32.mrb[0].mxu0
      %1688 = vmatprep.mubr.bf16.mxu0 0
      %1689 = vmatmul.mubr.bf16.gmra.mrb[0].mxu0 %v1586
      %v1690 = vpop.f32.mrb[0].mxu0
      %v1691 = vadd.f32 0.0, %v1690
      %v1692 = vpop.f32.mrb[0].mxu0
      %v1693 = vpop.f32.mrb[0].mxu0
      %v1694 = vadd.f32 0.0, %v1693
      %v1695 = vpop.f32.mrb[0].mxu0
      %1696 = vmatprep.mubr.bf16.mxu0 0
      %1697 = vmatmul.mubr.bf16.gmra.mrb[0].mxu0 %v1587
      %v1698 = vpop.f32.mrb[0].mxu0
      %v1699 = vadd.f32 0.0, %v1698
      %v1700 = vpop.f32.mrb[0].mxu0
      %v1701 = vpop.f32.mrb[0].mxu0
      %v1702 = vadd.f32 0.0, %v1701
      %v1703 = vpop.f32.mrb[0].mxu0
      %1704 = vdwg.mxu0
      %v1705 = vadd.f32 %v1495, %v1675
      %v1706 = vadd.f32 %v1496, %v1678
      %v1707 = vadd.f32 %v1497, %v1683
      %v1708 = vadd.f32 %v1498, %v1686
      %v1709 = vadd.f32 %v1499, %v1691
      %v1710 = vadd.f32 %v1500, %v1694
      %v1711 = vadd.f32 %v1501, %v1699
      %v1712 = vadd.f32 %v1502, %v1702
      %s1713 = scalar_lea.vmem [#allocation2], 16
      %v1714 = vld [vmem:[%s1713] sm:$0xf]
      %v1715 = vld [vmem:[%s1713 + $0x8] sm:$0xf]
      %v1716 = vld [vmem:[%s1713 + $0x10] sm:$0xf]
      %v1717 = vld [vmem:[%s1713 + $0x18] sm:$0xf]
      %v1718 = vld [vmem:[%s1713 + $0x20] sm:$0xf]
      %v1719 = vld [vmem:[%s1713 + $0x28] sm:$0xf]
      %v1720 = vld [vmem:[%s1713 + $0x30] sm:$0xf]
      %v1721 = vld [vmem:[%s1713 + $0x38] sm:$0xf]
      %s1722 = scalar_lea.vmem %s1, 384
      %v1723 = vld [vmem:[%s1722] sm:$0xf]
      %v1724 = vld [vmem:[%s1722 + $0x4] sm:$0xf]
      %v1725 = vld [vmem:[%s1722 + $0x8] sm:$0xf]
      %v1726 = vld [vmem:[%s1722 + $0xc] sm:$0xf]
      %v1727 = vld [vmem:[%s1722 + $0x10] sm:$0xf]
      %v1728 = vld [vmem:[%s1722 + $0x14] sm:$0xf]
      %v1729 = vld [vmem:[%s1722 + $0x18] sm:$0xf]
      %v1730 = vld [vmem:[%s1722 + $0x1c] sm:$0xf]
      %v1731 = vld [vmem:[%s1722 + $0x20] sm:$0xf]
      %v1732 = vld [vmem:[%s1722 + $0x24] sm:$0xf]
      %v1733 = vld [vmem:[%s1722 + $0x28] sm:$0xf]
      %v1734 = vld [vmem:[%s1722 + $0x2c] sm:$0xf]
      %v1735 = vld [vmem:[%s1722 + $0x30] sm:$0xf]
      %v1736 = vld [vmem:[%s1722 + $0x34] sm:$0xf]
      %v1737 = vld [vmem:[%s1722 + $0x38] sm:$0xf]
      %v1738 = vld [vmem:[%s1722 + $0x3c] sm:$0xf]
      %v1747 = vunpack.c.l.b16 %v1714
      %v1748 = vunpack.c.l.b16 %v1715
      %v1749 = vunpack.c.l.b16 %v1716
      %v1750 = vunpack.c.l.b16 %v1717
      %v1751 = vunpack.c.l.b16 %v1718
      %v1752 = vunpack.c.l.b16 %v1719
      %v1753 = vunpack.c.l.b16 %v1720
      %v1754 = vunpack.c.l.b16 %v1721
      %v1755 = vpack.c.b16 %v1748, %v1747
      %v1756 = vpack.c.b16 %v1750, %v1749
      %v1757 = vpack.c.b16 %v1752, %v1751
      %v1758 = vpack.c.b16 %v1754, %v1753
      %v1779 = vunpack.c.l.b16 %v1723
      %v1780 = vunpack.c.l.b16 %v1724
      %v1781 = vunpack.c.l.b16 %v1725
      %v1782 = vunpack.c.l.b16 %v1726
      %v1783 = vunpack.c.l.b16 %v1727
      %v1784 = vunpack.c.l.b16 %v1728
      %v1785 = vunpack.c.l.b16 %v1729
      %v1786 = vunpack.c.l.b16 %v1730
      %v1787 = vunpack.c.l.b16 %v1731
      %v1788 = vunpack.c.l.b16 %v1732
      %v1789 = vunpack.c.l.b16 %v1733
      %v1790 = vunpack.c.l.b16 %v1734
      %v1791 = vunpack.c.l.b16 %v1735
      %v1792 = vunpack.c.l.b16 %v1736
      %v1793 = vunpack.c.l.b16 %v1737
      %v1794 = vunpack.c.l.b16 %v1738
      %v1795 = vpack.c.b16 %v1780, %v1779
      %v1796 = vpack.c.b16 %v1782, %v1781
      %v1797 = vpack.c.b16 %v1784, %v1783
      %v1798 = vpack.c.b16 %v1786, %v1785
      %v1799 = vpack.c.b16 %v1788, %v1787
      %v1800 = vpack.c.b16 %v1790, %v1789
      %v1801 = vpack.c.b16 %v1792, %v1791
      %v1802 = vpack.c.b16 %v1794, %v1793
      %1811 = vmatprep.subr.bf16.mxu0 0
      %1812 = vmatpush1.bf16.msra.mxu0 %v1795
      %1813 = vmatprep.subr.bf16.mxu0 0
      %1814 = vmatpush1.bf16.msra.mxu0 %v1796
      %1815 = vmatprep.subr.bf16.mxu0 0
      %1816 = vmatpush1.bf16.msra.mxu0 %v1797
      %1817 = vmatprep.subr.bf16.mxu0 0
      %1818 = vmatpush1.bf16.msra.mxu0 %v1798
      %1819 = vmatprep.subr.bf16.mxu0 0
      %1820 = vmatpush1.bf16.msra.mxu0 %v1799
      %1821 = vmatprep.subr.bf16.mxu0 0
      %1822 = vmatpush1.bf16.msra.mxu0 %v1800
      %1823 = vmatprep.subr.bf16.mxu0 0
      %1824 = vmatpush1.bf16.msra.mxu0 %v1801
      %1825 = vmatprep.subr.bf16.mxu0 0
      %1826 = vmatpush1.bf16.msra.mxu0 %v1802
      %1827 = vmatprep.subr.bf16.mxu0 0
      %1828 = vmatpush1.bf16.msra.mxu0 0
      %1829 = vmatprep.subr.bf16.mxu0 0
      %1830 = vmatpush1.bf16.msra.mxu0 0
      %1831 = vmatprep.subr.bf16.mxu0 0
      %1832 = vmatpush1.bf16.msra.mxu0 0
      %1833 = vmatprep.subr.bf16.mxu0 0
      %1834 = vmatpush1.bf16.msra.mxu0 0
      %1835 = vmatprep.subr.bf16.mxu0 0
      %1836 = vmatpush1.bf16.msra.mxu0 0
      %1837 = vmatprep.subr.bf16.mxu0 0
      %1838 = vmatpush1.bf16.msra.mxu0 0
      %1839 = vmatprep.subr.bf16.mxu0 0
      %1840 = vmatpush1.bf16.msra.mxu0 0
      %1841 = vmatprep.subr.bf16.mxu0 0
      %1842 = vmatpush1.bf16.msra.mxu0 0
      %1843 = vmatprep.mubr.bf16.mxu0 0
      %1844 = vmatmul.mubr.bf16.gmra.mrb[0].mxu0 %v1755
      %v1845 = vpop.f32.mrb[0].mxu0
      %v1846 = vadd.f32 0.0, %v1845
      %v1847 = vpop.f32.mrb[0].mxu0
      %v1848 = vpop.f32.mrb[0].mxu0
      %v1849 = vadd.f32 0.0, %v1848
      %v1850 = vpop.f32.mrb[0].mxu0
      %1851 = vmatprep.mubr.bf16.mxu0 0
      %1852 = vmatmul.mubr.bf16.gmra.mrb[0].mxu0 %v1756
      %v1853 = vpop.f32.mrb[0].mxu0
      %v1854 = vadd.f32 0.0, %v1853
      %v1855 = vpop.f32.mrb[0].mxu0
      %v1856 = vpop.f32.mrb[0].mxu0
      %v1857 = vadd.f32 0.0, %v1856
      %v1858 = vpop.f32.mrb[0].mxu0
      %1859 = vmatprep.mubr.bf16.mxu0 0
      %1860 = vmatmul.mubr.bf16.gmra.mrb[0].mxu0 %v1757
      %v1861 = vpop.f32.mrb[0].mxu0
      %v1862 = vadd.f32 0.0, %v1861
      %v1863 = vpop.f32.mrb[0].mxu0
      %v1864 = vpop.f32.mrb[0].mxu0
      %v1865 = vadd.f32 0.0, %v1864
      %v1866 = vpop.f32.mrb[0].mxu0
      %1867 = vmatprep.mubr.bf16.mxu0 0
      %1868 = vmatmul.mubr.bf16.gmra.mrb[0].mxu0 %v1758
      %v1869 = vpop.f32.mrb[0].mxu0
      %v1870 = vadd.f32 0.0, %v1869
      %v1871 = vpop.f32.mrb[0].mxu0
      %v1872 = vpop.f32.mrb[0].mxu0
      %v1873 = vadd.f32 0.0, %v1872
      %v1874 = vpop.f32.mrb[0].mxu0
      %1875 = vdwg.mxu0
      %v1876 = vadd.f32 %v1705, %v1846
      %v1877 = vadd.f32 %v1706, %v1849
      %v1878 = vadd.f32 %v1707, %v1854
      %v1879 = vadd.f32 %v1708, %v1857
      %v1880 = vadd.f32 %v1709, %v1862
      %v1881 = vadd.f32 %v1710, %v1865
      %v1882 = vadd.f32 %v1711, %v1870
      %v1883 = vadd.f32 %v1712, %v1873
      %v1884 = vld [vmem:[%s1713] sm:$0xf]
      %v1885 = vld [vmem:[%s1713 + $0x4] sm:$0x1]
      %v1886 = vld [vmem:[%s1713 + $0x8] sm:$0xf]
      %v1887 = vld [vmem:[%s1713 + $0xc] sm:$0x1]
      %v1888 = vld [vmem:[%s1713 + $0x10] sm:$0xf]
      %v1889 = vld [vmem:[%s1713 + $0x14] sm:$0x1]
      %v1890 = vld [vmem:[%s1713 + $0x18] sm:$0xf]
      %v1891 = vld [vmem:[%s1713 + $0x1c] sm:$0x1]
      %v1892 = vld [vmem:[%s1713 + $0x20] sm:$0xf]
      %v1893 = vld [vmem:[%s1713 + $0x24] sm:$0x1]
      %v1894 = vld [vmem:[%s1713 + $0x28] sm:$0xf]
      %v1895 = vld [vmem:[%s1713 + $0x2c] sm:$0x1]
      %v1896 = vld [vmem:[%s1713 + $0x30] sm:$0xf]
      %v1897 = vld [vmem:[%s1713 + $0x34] sm:$0x1]
      %v1898 = vld [vmem:[%s1713 + $0x38] sm:$0xf]
      %v1899 = vld [vmem:[%s1713 + $0x3c] sm:$0x1]
      %v1901 = vshrl.u32 %v1884, 16
      %v1903 = vrot.slane %v1901, 4
      %v1904 = vshll.u32 %v1884, 16
      %v1906 = vrot.slane %v1904, 5
      %v1907 = vor.u32 %v1903, %v1906
      %v1908 = vrot.slane %v1907, 4
      %v1910 = vshll.u32 %v1885, 16
      %v1912 = vrot.slane %v1910, 5
      %v1913 = vsel %vm442, %v1908, %v1912
      %v1915 = vshrl.u32 %v1886, 16
      %v1917 = vrot.slane %v1915, 4
      %v1918 = vshll.u32 %v1886, 16
      %v1920 = vrot.slane %v1918, 5
      %v1921 = vor.u32 %v1917, %v1920
      %v1922 = vrot.slane %v1921, 4
      %v1924 = vshll.u32 %v1887, 16
      %v1926 = vrot.slane %v1924, 5
      %v1927 = vsel %vm442, %v1922, %v1926
      %v1929 = vshrl.u32 %v1888, 16
      %v1931 = vrot.slane %v1929, 4
      %v1932 = vshll.u32 %v1888, 16
      %v1934 = vrot.slane %v1932, 5
      %v1935 = vor.u32 %v1931, %v1934
      %v1936 = vrot.slane %v1935, 4
      %v1938 = vshll.u32 %v1889, 16
      %v1940 = vrot.slane %v1938, 5
      %v1941 = vsel %vm442, %v1936, %v1940
      %v1943 = vshrl.u32 %v1890, 16
      %v1945 = vrot.slane %v1943, 4
      %v1946 = vshll.u32 %v1890, 16
      %v1948 = vrot.slane %v1946, 5
      %v1949 = vor.u32 %v1945, %v1948
      %v1950 = vrot.slane %v1949, 4
      %v1952 = vshll.u32 %v1891, 16
      %v1954 = vrot.slane %v1952, 5
      %v1955 = vsel %vm442, %v1950, %v1954
      %v1957 = vshrl.u32 %v1892, 16
      %v1959 = vrot.slane %v1957, 4
      %v1960 = vshll.u32 %v1892, 16
      %v1962 = vrot.slane %v1960, 5
      %v1963 = vor.u32 %v1959, %v1962
      %v1964 = vrot.slane %v1963, 4
      %v1966 = vshll.u32 %v1893, 16
      %v1968 = vrot.slane %v1966, 5
      %v1969 = vsel %vm442, %v1964, %v1968
      %v1971 = vshrl.u32 %v1894, 16
      %v1973 = vrot.slane %v1971, 4
      %v1974 = vshll.u32 %v1894, 16
      %v1976 = vrot.slane %v1974, 5
      %v1977 = vor.u32 %v1973, %v1976
      %v1978 = vrot.slane %v1977, 4
      %v1980 = vshll.u32 %v1895, 16
      %v1982 = vrot.slane %v1980, 5
      %v1983 = vsel %vm442, %v1978, %v1982
      %v1985 = vshrl.u32 %v1896, 16
      %v1987 = vrot.slane %v1985, 4
      %v1988 = vshll.u32 %v1896, 16
      %v1990 = vrot.slane %v1988, 5
      %v1991 = vor.u32 %v1987, %v1990
      %v1992 = vrot.slane %v1991, 4
      %v1994 = vshll.u32 %v1897, 16
      %v1996 = vrot.slane %v1994, 5
      %v1997 = vsel %vm442, %v1992, %v1996
      %v1999 = vshrl.u32 %v1898, 16
      %v2001 = vrot.slane %v1999, 4
      %v2002 = vshll.u32 %v1898, 16
      %v2004 = vrot.slane %v2002, 5
      %v2005 = vor.u32 %v2001, %v2004
      %v2006 = vrot.slane %v2005, 4
      %v2008 = vshll.u32 %v1899, 16
      %v2010 = vrot.slane %v2008, 5
      %v2011 = vsel %vm442, %v2006, %v2010
      %s2012 = scalar_lea.vmem %s1, 448
      %v2013 = vld [vmem:[%s2012] sm:$0xf]
      %v2014 = vld [vmem:[%s2012 + $0x4] sm:$0xf]
      %v2015 = vld [vmem:[%s2012 + $0x8] sm:$0xf]
      %v2016 = vld [vmem:[%s2012 + $0xc] sm:$0xf]
      %v2017 = vld [vmem:[%s2012 + $0x10] sm:$0xf]
      %v2018 = vld [vmem:[%s2012 + $0x14] sm:$0xf]
      %v2019 = vld [vmem:[%s2012 + $0x18] sm:$0xf]
      %v2020 = vld [vmem:[%s2012 + $0x1c] sm:$0xf]
      %v2021 = vld [vmem:[%s2012 + $0x20] sm:$0xf]
      %v2022 = vld [vmem:[%s2012 + $0x24] sm:$0xf]
      %v2023 = vld [vmem:[%s2012 + $0x28] sm:$0xf]
      %v2024 = vld [vmem:[%s2012 + $0x2c] sm:$0xf]
      %v2025 = vld [vmem:[%s2012 + $0x30] sm:$0xf]
      %v2026 = vld [vmem:[%s2012 + $0x34] sm:$0xf]
      %v2027 = vld [vmem:[%s2012 + $0x38] sm:$0xf]
      %v2028 = vld [vmem:[%s2012 + $0x3c] sm:$0xf]
      %v2029 = vunpack.c.l.b16 %v1913
      %v2030 = vunpack.c.l.b16 %v1927
      %v2031 = vunpack.c.l.b16 %v1941
      %v2032 = vunpack.c.l.b16 %v1955
      %v2033 = vunpack.c.l.b16 %v1969
      %v2034 = vunpack.c.l.b16 %v1983
      %v2035 = vunpack.c.l.b16 %v1997
      %v2036 = vunpack.c.l.b16 %v2011
      %v2037 = vpack.c.b16 %v2030, %v2029
      %v2038 = vpack.c.b16 %v2032, %v2031
      %v2039 = vpack.c.b16 %v2034, %v2033
      %v2040 = vpack.c.b16 %v2036, %v2035
      %v2061 = vunpack.c.l.b16 %v2013
      %v2062 = vunpack.c.l.b16 %v2014
      %v2063 = vunpack.c.l.b16 %v2015
      %v2064 = vunpack.c.l.b16 %v2016
      %v2065 = vunpack.c.l.b16 %v2017
      %v2066 = vunpack.c.l.b16 %v2018
      %v2067 = vunpack.c.l.b16 %v2019
      %v2068 = vunpack.c.l.b16 %v2020
      %v2069 = vunpack.c.l.b16 %v2021
      %v2070 = vunpack.c.l.b16 %v2022
      %v2071 = vunpack.c.l.b16 %v2023
      %v2072 = vunpack.c.l.b16 %v2024
      %v2073 = vunpack.c.l.b16 %v2025
      %v2074 = vunpack.c.l.b16 %v2026
      %v2075 = vunpack.c.l.b16 %v2027
      %v2076 = vunpack.c.l.b16 %v2028
      %v2077 = vpack.c.b16 %v2062, %v2061
      %v2078 = vpack.c.b16 %v2064, %v2063
      %v2079 = vpack.c.b16 %v2066, %v2065
      %v2080 = vpack.c.b16 %v2068, %v2067
      %v2081 = vpack.c.b16 %v2070, %v2069
      %v2082 = vpack.c.b16 %v2072, %v2071
      %v2083 = vpack.c.b16 %v2074, %v2073
      %v2084 = vpack.c.b16 %v2076, %v2075
      %2093 = vmatprep.subr.bf16.mxu0 0
      %2094 = vmatpush1.bf16.msra.mxu0 %v2077
      %2095 = vmatprep.subr.bf16.mxu0 0
      %2096 = vmatpush1.bf16.msra.mxu0 %v2078
      %2097 = vmatprep.subr.bf16.mxu0 0
      %2098 = vmatpush1.bf16.msra.mxu0 %v2079
      %2099 = vmatprep.subr.bf16.mxu0 0
      %2100 = vmatpush1.bf16.msra.mxu0 %v2080
      %2101 = vmatprep.subr.bf16.mxu0 0
      %2102 = vmatpush1.bf16.msra.mxu0 %v2081
      %2103 = vmatprep.subr.bf16.mxu0 0
      %2104 = vmatpush1.bf16.msra.mxu0 %v2082
      %2105 = vmatprep.subr.bf16.mxu0 0
      %2106 = vmatpush1.bf16.msra.mxu0 %v2083
      %2107 = vmatprep.subr.bf16.mxu0 0
      %2108 = vmatpush1.bf16.msra.mxu0 %v2084
      %2109 = vmatprep.subr.bf16.mxu0 0
      %2110 = vmatpush1.bf16.msra.mxu0 0
      %2111 = vmatprep.subr.bf16.mxu0 0
      %2112 = vmatpush1.bf16.msra.mxu0 0
      %2113 = vmatprep.subr.bf16.mxu0 0
      %2114 = vmatpush1.bf16.msra.mxu0 0
      %2115 = vmatprep.subr.bf16.mxu0 0
      %2116 = vmatpush1.bf16.msra.mxu0 0
      %2117 = vmatprep.subr.bf16.mxu0 0
      %2118 = vmatpush1.bf16.msra.mxu0 0
      %2119 = vmatprep.subr.bf16.mxu0 0
      %2120 = vmatpush1.bf16.msra.mxu0 0
      %2121 = vmatprep.subr.bf16.mxu0 0
      %2122 = vmatpush1.bf16.msra.mxu0 0
      %2123 = vmatprep.subr.bf16.mxu0 0
      %2124 = vmatpush1.bf16.msra.mxu0 0
      %2125 = vmatprep.mubr.bf16.mxu0 0
      %2126 = vmatmul.mubr.bf16.gmra.mrb[0].mxu0 %v2037
      %v2127 = vpop.f32.mrb[0].mxu0
      %v2128 = vadd.f32 0.0, %v2127
      %v2129 = vpop.f32.mrb[0].mxu0
      %v2130 = vpop.f32.mrb[0].mxu0
      %v2131 = vadd.f32 0.0, %v2130
      %v2132 = vpop.f32.mrb[0].mxu0
      %2133 = vmatprep.mubr.bf16.mxu0 0
      %2134 = vmatmul.mubr.bf16.gmra.mrb[0].mxu0 %v2038
      %v2135 = vpop.f32.mrb[0].mxu0
      %v2136 = vadd.f32 0.0, %v2135
      %v2137 = vpop.f32.mrb[0].mxu0
      %v2138 = vpop.f32.mrb[0].mxu0
      %v2139 = vadd.f32 0.0, %v2138
      %v2140 = vpop.f32.mrb[0].mxu0
      %2141 = vmatprep.mubr.bf16.mxu0 0
      %2142 = vmatmul.mubr.bf16.gmra.mrb[0].mxu0 %v2039
      %v2143 = vpop.f32.mrb[0].mxu0
      %v2144 = vadd.f32 0.0, %v2143
      %v2145 = vpop.f32.mrb[0].mxu0
      %v2146 = vpop.f32.mrb[0].mxu0
      %v2147 = vadd.f32 0.0, %v2146
      %v2148 = vpop.f32.mrb[0].mxu0
      %2149 = vmatprep.mubr.bf16.mxu0 0
      %2150 = vmatmul.mubr.bf16.gmra.mrb[0].mxu0 %v2040
      %v2151 = vpop.f32.mrb[0].mxu0
      %v2152 = vadd.f32 0.0, %v2151
      %v2153 = vpop.f32.mrb[0].mxu0
      %v2154 = vpop.f32.mrb[0].mxu0
      %v2155 = vadd.f32 0.0, %v2154
      %v2156 = vpop.f32.mrb[0].mxu0
      %2157 = vdwg.mxu0
      %v2158 = vadd.f32 %v1876, %v2128
      %v2159 = vadd.f32 %v1877, %v2131
      %v2160 = vadd.f32 %v1878, %v2136
      %v2161 = vadd.f32 %v1879, %v2139
      %v2162 = vadd.f32 %v1880, %v2144
      %v2163 = vadd.f32 %v1881, %v2147
      %v2164 = vadd.f32 %v1882, %v2152
      %v2165 = vadd.f32 %v1883, %v2155
      %v2166 = vld [vmem:[%s1713] sm:$0xe]
      %v2167 = vld [vmem:[%s1713 + $0x8] sm:$0xe]
      %v2168 = vld [vmem:[%s1713 + $0x10] sm:$0xe]
      %v2169 = vld [vmem:[%s1713 + $0x18] sm:$0xe]
      %v2170 = vld [vmem:[%s1713 + $0x20] sm:$0xe]
      %v2171 = vld [vmem:[%s1713 + $0x28] sm:$0xe]
      %v2172 = vld [vmem:[%s1713 + $0x30] sm:$0xe]
      %v2173 = vld [vmem:[%s1713 + $0x38] sm:$0xe]
      %v2190 = vrot.slane %v2166, 5
      %v2191 = vrot.slane %v2190, 4
      %v2192 = vrot.slane %v1885, 5
      %v2193 = vsel %vm864, %v2191, %v2192
      %v2194 = vrot.slane %v2167, 5
      %v2195 = vrot.slane %v2194, 4
      %v2196 = vrot.slane %v1887, 5
      %v2197 = vsel %vm864, %v2195, %v2196
      %v2198 = vrot.slane %v2168, 5
      %v2199 = vrot.slane %v2198, 4
      %v2200 = vrot.slane %v1889, 5
      %v2201 = vsel %vm864, %v2199, %v2200
      %v2202 = vrot.slane %v2169, 5
      %v2203 = vrot.slane %v2202, 4
      %v2204 = vrot.slane %v1891, 5
      %v2205 = vsel %vm864, %v2203, %v2204
      %v2206 = vrot.slane %v2170, 5
      %v2207 = vrot.slane %v2206, 4
      %v2208 = vrot.slane %v1893, 5
      %v2209 = vsel %vm864, %v2207, %v2208
      %v2210 = vrot.slane %v2171, 5
      %v2211 = vrot.slane %v2210, 4
      %v2212 = vrot.slane %v1895, 5
      %v2213 = vsel %vm864, %v2211, %v2212
      %v2214 = vrot.slane %v2172, 5
      %v2215 = vrot.slane %v2214, 4
      %v2216 = vrot.slane %v1897, 5
      %v2217 = vsel %vm864, %v2215, %v2216
      %v2218 = vrot.slane %v2173, 5
      %v2219 = vrot.slane %v2218, 4
      %v2220 = vrot.slane %v1899, 5
      %v2221 = vsel %vm864, %v2219, %v2220
      %s2222 = scalar_lea.vmem %s1, 512
      %v2223 = vld [vmem:[%s2222] sm:$0xf]
      %v2224 = vld [vmem:[%s2222 + $0x4] sm:$0xf]
      %v2225 = vld [vmem:[%s2222 + $0x8] sm:$0xf]
      %v2226 = vld [vmem:[%s2222 + $0xc] sm:$0xf]
      %v2227 = vld [vmem:[%s2222 + $0x10] sm:$0xf]
      %v2228 = vld [vmem:[%s2222 + $0x14] sm:$0xf]
      %v2229 = vld [vmem:[%s2222 + $0x18] sm:$0xf]
      %v2230 = vld [vmem:[%s2222 + $0x1c] sm:$0xf]
      %v2231 = vld [vmem:[%s2222 + $0x20] sm:$0xf]
      %v2232 = vld [vmem:[%s2222 + $0x24] sm:$0xf]
      %v2233 = vld [vmem:[%s2222 + $0x28] sm:$0xf]
      %v2234 = vld [vmem:[%s2222 + $0x2c] sm:$0xf]
      %v2235 = vld [vmem:[%s2222 + $0x30] sm:$0xf]
      %v2236 = vld [vmem:[%s2222 + $0x34] sm:$0xf]
      %v2237 = vld [vmem:[%s2222 + $0x38] sm:$0xf]
      %v2238 = vld [vmem:[%s2222 + $0x3c] sm:$0xf]
      %v2239 = vunpack.c.l.b16 %v2193
      %v2240 = vunpack.c.l.b16 %v2197
      %v2241 = vunpack.c.l.b16 %v2201
      %v2242 = vunpack.c.l.b16 %v2205
      %v2243 = vunpack.c.l.b16 %v2209
      %v2244 = vunpack.c.l.b16 %v2213
      %v2245 = vunpack.c.l.b16 %v2217
      %v2246 = vunpack.c.l.b16 %v2221
      %v2247 = vpack.c.b16 %v2240, %v2239
      %v2248 = vpack.c.b16 %v2242, %v2241
      %v2249 = vpack.c.b16 %v2244, %v2243
      %v2250 = vpack.c.b16 %v2246, %v2245
      %v2271 = vunpack.c.l.b16 %v2223
      %v2272 = vunpack.c.l.b16 %v2224
      %v2273 = vunpack.c.l.b16 %v2225
      %v2274 = vunpack.c.l.b16 %v2226
      %v2275 = vunpack.c.l.b16 %v2227
      %v2276 = vunpack.c.l.b16 %v2228
      %v2277 = vunpack.c.l.b16 %v2229
      %v2278 = vunpack.c.l.b16 %v2230
      %v2279 = vunpack.c.l.b16 %v2231
      %v2280 = vunpack.c.l.b16 %v2232
      %v2281 = vunpack.c.l.b16 %v2233
      %v2282 = vunpack.c.l.b16 %v2234
      %v2283 = vunpack.c.l.b16 %v2235
      %v2284 = vunpack.c.l.b16 %v2236
      %v2285 = vunpack.c.l.b16 %v2237
      %v2286 = vunpack.c.l.b16 %v2238
      %v2287 = vpack.c.b16 %v2272, %v2271
      %v2288 = vpack.c.b16 %v2274, %v2273
      %v2289 = vpack.c.b16 %v2276, %v2275
      %v2290 = vpack.c.b16 %v2278, %v2277
      %v2291 = vpack.c.b16 %v2280, %v2279
      %v2292 = vpack.c.b16 %v2282, %v2281
      %v2293 = vpack.c.b16 %v2284, %v2283
      %v2294 = vpack.c.b16 %v2286, %v2285
      %2303 = vmatprep.subr.bf16.mxu0 0
      %2304 = vmatpush1.bf16.msra.mxu0 %v2287
      %2305 = vmatprep.subr.bf16.mxu0 0
      %2306 = vmatpush1.bf16.msra.mxu0 %v2288
      %2307 = vmatprep.subr.bf16.mxu0 0
      %2308 = vmatpush1.bf16.msra.mxu0 %v2289
      %2309 = vmatprep.subr.bf16.mxu0 0
      %2310 = vmatpush1.bf16.msra.mxu0 %v2290
      %2311 = vmatprep.subr.bf16.mxu0 0
      %2312 = vmatpush1.bf16.msra.mxu0 %v2291
      %2313 = vmatprep.subr.bf16.mxu0 0
      %2314 = vmatpush1.bf16.msra.mxu0 %v2292
      %2315 = vmatprep.subr.bf16.mxu0 0
      %2316 = vmatpush1.bf16.msra.mxu0 %v2293
      %2317 = vmatprep.subr.bf16.mxu0 0
      %2318 = vmatpush1.bf16.msra.mxu0 %v2294
      %2319 = vmatprep.subr.bf16.mxu0 0
      %2320 = vmatpush1.bf16.msra.mxu0 0
      %2321 = vmatprep.subr.bf16.mxu0 0
      %2322 = vmatpush1.bf16.msra.mxu0 0
      %2323 = vmatprep.subr.bf16.mxu0 0
      %2324 = vmatpush1.bf16.msra.mxu0 0
      %2325 = vmatprep.subr.bf16.mxu0 0
      %2326 = vmatpush1.bf16.msra.mxu0 0
      %2327 = vmatprep.subr.bf16.mxu0 0
      %2328 = vmatpush1.bf16.msra.mxu0 0
      %2329 = vmatprep.subr.bf16.mxu0 0
      %2330 = vmatpush1.bf16.msra.mxu0 0
      %2331 = vmatprep.subr.bf16.mxu0 0
      %2332 = vmatpush1.bf16.msra.mxu0 0
      %2333 = vmatprep.subr.bf16.mxu0 0
      %2334 = vmatpush1.bf16.msra.mxu0 0
      %2335 = vmatprep.mubr.bf16.mxu0 0
      %2336 = vmatmul.mubr.bf16.gmra.mrb[0].mxu0 %v2247
      %v2337 = vpop.f32.mrb[0].mxu0
      %v2338 = vadd.f32 0.0, %v2337
      %v2339 = vpop.f32.mrb[0].mxu0
      %v2340 = vpop.f32.mrb[0].mxu0
      %v2341 = vadd.f32 0.0, %v2340
      %v2342 = vpop.f32.mrb[0].mxu0
      %2343 = vmatprep.mubr.bf16.mxu0 0
      %2344 = vmatmul.mubr.bf16.gmra.mrb[0].mxu0 %v2248
      %v2345 = vpop.f32.mrb[0].mxu0
      %v2346 = vadd.f32 0.0, %v2345
      %v2347 = vpop.f32.mrb[0].mxu0
      %v2348 = vpop.f32.mrb[0].mxu0
      %v2349 = vadd.f32 0.0, %v2348
      %v2350 = vpop.f32.mrb[0].mxu0
      %2351 = vmatprep.mubr.bf16.mxu0 0
      %2352 = vmatmul.mubr.bf16.gmra.mrb[0].mxu0 %v2249
      %v2353 = vpop.f32.mrb[0].mxu0
      %v2354 = vadd.f32 0.0, %v2353
      %v2355 = vpop.f32.mrb[0].mxu0
      %v2356 = vpop.f32.mrb[0].mxu0
      %v2357 = vadd.f32 0.0, %v2356
      %v2358 = vpop.f32.mrb[0].mxu0
      %2359 = vmatprep.mubr.bf16.mxu0 0
      %2360 = vmatmul.mubr.bf16.gmra.mrb[0].mxu0 %v2250
      %v2361 = vpop.f32.mrb[0].mxu0
      %v2362 = vadd.f32 0.0, %v2361
      %v2363 = vpop.f32.mrb[0].mxu0
      %v2364 = vpop.f32.mrb[0].mxu0
      %v2365 = vadd.f32 0.0, %v2364
      %v2366 = vpop.f32.mrb[0].mxu0
      %2367 = vdwg.mxu0
      %v2368 = vadd.f32 %v2158, %v2338
      %v2369 = vadd.f32 %v2159, %v2341
      %v2370 = vadd.f32 %v2160, %v2346
      %v2371 = vadd.f32 %v2161, %v2349
      %v2372 = vadd.f32 %v2162, %v2354
      %v2373 = vadd.f32 %v2163, %v2357
      %v2374 = vadd.f32 %v2164, %v2362
      %v2375 = vadd.f32 %v2165, %v2365
      %v2376 = vld [vmem:[%s2] sm:$0x1]
      %v2378 = vlaneseq
      %v2379 = vshrl.u32 %v2378, 7
      %v2380 = vsub.s32 0, %v2379
      %v2381 = vrot.slane %v2376, %v2380
      %v2383 = vmul.f32 %v2368, %v2381
      %v2384 = vmul.f32 %v2369, %v2381
      %v2385 = vmul.f32 %v2370, %v2381
      %v2386 = vmul.f32 %v2371, %v2381
      %v2387 = vmul.f32 %v2372, %v2381
      %v2388 = vmul.f32 %v2373, %v2381
      %v2389 = vmul.f32 %v2374, %v2381
      %v2390 = vmul.f32 %v2375, %v2381
      %v2391 = vld [vmem:[%s3] sm:$0x1]
      %v2393 = vlaneseq
      %v2394 = vshrl.u32 %v2393, 7
      %v2395 = vsub.s32 0, %v2394
      %v2396 = vrot.slane %v2391, %v2395
      %v2398 = vadd.f32 %v2383, %v2396
      %v2399 = vadd.f32 %v2384, %v2396
      %v2400 = vadd.f32 %v2385, %v2396
      %v2401 = vadd.f32 %v2386, %v2396
      %v2402 = vadd.f32 %v2387, %v2396
      %v2403 = vadd.f32 %v2388, %v2396
      %v2404 = vadd.f32 %v2389, %v2396
      %v2405 = vadd.f32 %v2390, %v2396
      %v2406 = vmax.f32 %v2398, 0.0
      %v2407 = vmax.f32 %v2399, 0.0
      %v2408 = vmax.f32 %v2400, 0.0
      %v2409 = vmax.f32 %v2401, 0.0
      %v2410 = vmax.f32 %v2402, 0.0
      %v2411 = vmax.f32 %v2403, 0.0
      %v2412 = vmax.f32 %v2404, 0.0
      %v2413 = vmax.f32 %v2405, 0.0
      %v2414 = vpack.c.bf16 %v2406, %v2406
      %v2415 = vpack.c.bf16 %v2407, %v2407
      %v2416 = vpack.c.bf16 %v2408, %v2408
      %v2417 = vpack.c.bf16 %v2409, %v2409
      %v2418 = vpack.c.bf16 %v2410, %v2410
      %v2419 = vpack.c.bf16 %v2411, %v2411
      %v2420 = vpack.c.bf16 %v2412, %v2412
      %v2421 = vpack.c.bf16 %v2413, %v2413
      %2422 = vst [vmem:[%s197] sm:$0xf] %v2414
      %2423 = vst [vmem:[%s197 + $0x4] sm:$0xf] %v2415
      %2424 = vst [vmem:[%s197 + $0x8] sm:$0xf] %v2416
      %2425 = vst [vmem:[%s197 + $0xc] sm:$0xf] %v2417
      %2426 = vst [vmem:[%s197 + $0x10] sm:$0xf] %v2418
      %2427 = vst [vmem:[%s197 + $0x14] sm:$0xf] %v2419
      %2428 = vst [vmem:[%s197 + $0x18] sm:$0xf] %v2420
      %2429 = vst [vmem:[%s197 + $0x1c] sm:$0xf] %v2421
      %p2430 = scmp.lt.s32.totalorder %s15, 1
      %s2431 = scalar_select %p2430, %s15, 1
      %s2432 = smul.addr %s2431, 8
      %s2433 = smul.addr %s2432, 4
      %s2434 = scalar_lea.vmem %s4, %s2433
      // Predicated region
      $region37: #{bottleneck_forward.6} parent=35 // pred_check
        %p2435 = pneg %p122
      $region38: #{bottleneck_forward.6} parent=35 // pred_check_branch
        %2437 = sbr.rel (%p2435) target = $region40
      $region39: #{bottleneck_forward.6} parent=35 // pred_region
        _
      $region40: #{bottleneck_forward.6} parent=35 // pred_fallthru
        _
    $region36: #{bottleneck_forward.6} parent=5 // pred_fallthru
      _
    %p2438 = scmp.le.s32.totalorder 2, %s10
    // Predicated region
    $region41: #{bottleneck_forward.6} parent=5 // pred_check
      %p2439 = pneg %p2438
    $region42: #{bottleneck_forward.6} parent=5 // pred_check_branch
      %2441 = sbr.rel (%p2439) target = $region44
    $region43: #{bottleneck_forward.6} parent=5 // pred_region
      %s2442 = ssub.s32 %s10, 2
      // Predicated region
      $region45: #{bottleneck_forward.6} parent=43 // pred_check
        %p2443 = pneg %p128
      $region46: #{bottleneck_forward.6} parent=43 // pred_check_branch
        %2445 = sbr.rel (%p2443) target = $region48
      $region47: #{bottleneck_forward.6} parent=43 // pred_region
        %p2446 = scmp.lt.s32.totalorder %s16, 1
        %s2447 = scalar_select %p2446, %s16, 1
        %s2448 = smul.addr %s2447, 8
        %s2449 = smul.addr %s2448, 4
        %s2450 = scalar_lea.vmem %s4, %s2449
      $region48: #{bottleneck_forward.6} parent=43 // pred_fallthru
        _
    $region44: #{bottleneck_forward.6} parent=5 // pred_fallthru
      _
  $region6: #{bottleneck_forward.6} parent=0 // loop_footer
    %s14 = sadd.s32 1, %s10
  $region7: #{bottleneck_forward.6} parent=0 // loop_footer_branch
    %9 = sbr.rel target = $region3
  $region8: #{bottleneck_forward.6} parent=0 // loop_exit
    _

</llo_original>
